<compile_context>
chip_gen: v7x
topology: tpu7x:2x2x1
jax: 0.10.0
libtpu: 0.0.40
codegen_flags: <defaults>
</compile_context>

<pallas_src>
import functools

import jax
import jax.numpy as jnp
from jax.experimental import pallas as pl
from jax.experimental.pallas import tpu as pltpu

C = 128        # channels everywhere in the tower
KH = KW = 3    # conv kernel size


# ---------------------------------------------------------------------------
# Fused tower kernel:  grid = (num_layers,), weights streamed per layer,
# activation resident in VMEM scratch for the whole tower.
# ---------------------------------------------------------------------------
def _tower_kernel(x_in_ref, mask_ref, w_ref, sb_ref, o_ref, act_ref, res_ref,
                  *, n_batch, h, w):
    hp, wp = h + 2, w + 2          # zero-padded spatial dims
    pp = hp * wp                   # padded pixels per image
    rv = n_batch * pp              # rows of the (flattened) padded activation
    g = wp + 1                     # guard rows on each side (max |flat shift|)

    l = pl.program_id(0)

    # First grid step: load the prepared input (guard rows + zero halo + the
    # single input channel embedded in channel 0) into the resident scratch.
    @pl.when(l == 0)
    def _():
        act_ref[...] = x_in_ref[...]
        res_ref[...] = jnp.zeros_like(res_ref)

    # Odd layers are the first conv of a ResidualBlock: snapshot the residual.
    @pl.when(l % 2 == 1)
    def _():
        res_ref[...] = act_ref[g:g + rv, :]

    # 3x3 "same" conv as 9 flat-shifted matmuls accumulated in f32.  For
    # interior (non-halo) output rows the flat shift reads exactly the right
    # 2-D neighbour; halo rows compute garbage and are re-zeroed below.
    acc = jnp.zeros((rv, C), jnp.float32)
    for k in range(KH * KW):
        dy, dx = k // KW, k % KW
        s = (dy - 1) * wp + (dx - 1)
        xk = act_ref[g + s:g + s + rv, :].astype(jnp.bfloat16)
        acc = acc + jnp.dot(xk, w_ref[0, k, :, :],
                            preferred_element_type=jnp.float32)

    # Folded BatchNorm (inference mode) as a per-channel affine.
    scale = sb_ref[0, 0:1, :]
    bias = sb_ref[0, 1:2, :]
    y = acc * scale + bias

    # Even layers (>0) are the second conv of a block: add the residual.
    is_second = jnp.logical_and(l > 0, (l % 2) == 0)
    y = y + jnp.where(is_second, res_ref[...], 0.0)

    # ReLU, then zero the halo rows so the next layer sees correct zero padding.
    y = jnp.maximum(y, 0.0) * mask_ref[...]

    act_ref[g:g + rv, :] = y
    o_ref[...] = y


def hexnet_tower(x_nchw, w_stack, sb_stack, *, board_size):
    n = x_nchw.shape[0]
    h = w = board_size
    hp, wp = h + 2, w + 2
    pp = hp * wp
    rv = n * pp
    g = wp + 1
    L = w_stack.shape[0]

    # One-time glue: zero-pad spatially, flatten, embed 1 input channel into
    # channel 0 of 128, add guard rows top/bottom.
    x2 = jnp.pad(x_nchw[:, 0].astype(jnp.float32), ((0, 0), (1, 1), (1, 1)))
    x_in = jnp.pad(x2.reshape(rv, 1), ((g, g), (0, C - 1)))

    # Interior mask (1 for real pixels, 0 for the zero-padding halo rows).
    ry = jnp.arange(hp)
    rx = jnp.arange(wp)
    interior = (((ry >= 1) & (ry <= h))[:, None] &
                ((rx >= 1) & (rx <= w))[None, :]).astype(jnp.float32)
    mask = jnp.broadcast_to(jnp.tile(interior.reshape(pp), (n,))[:, None], (rv, C))

    kernel = functools.partial(_tower_kernel, n_batch=n, h=h, w=w)
    flops = L * 2 * rv * (KH * KW * C) * C
    bytes_accessed = (w_stack.size * 2 + sb_stack.size * 4 +
                      (x_in.size + mask.size + rv * C) * 4)

    out = pl.pallas_call(
        kernel,
        out_shape=jax.ShapeDtypeStruct((rv, C), jnp.float32),
        grid_spec=pltpu.PrefetchScalarGridSpec(
            num_scalar_prefetch=0,
            grid=(L,),
            in_specs=[
                pl.BlockSpec((rv + 2 * g, C), lambda l: (0, 0)),       # input (loaded once)
                pl.BlockSpec((rv, C), lambda l: (0, 0)),               # halo mask (loaded once)
                pl.BlockSpec((1, KH * KW, C, C), lambda l: (l, 0, 0, 0)),  # streamed weights
                pl.BlockSpec((1, 8, C), lambda l: (l, 0, 0)),          # streamed scale/bias
            ],
            out_specs=pl.BlockSpec((rv, C), lambda l: (0, 0)),
            scratch_shapes=[
                pltpu.VMEM((rv + 2 * g, C), jnp.float32),   # resident padded activation
                pltpu.VMEM((rv, C), jnp.float32),           # residual snapshot
            ]),
        compiler_params=pltpu.CompilerParams(
            dimension_semantics=("arbitrary",)),
        cost_estimate=pl.CostEstimate(
            flops=flops, transcendentals=0, bytes_accessed=bytes_accessed),
    )(x_in, mask, w_stack, sb_stack)
    return out


# ---------------------------------------------------------------------------
# Fused dual-head kernel: one lane-dense matmul; log_softmax for the policy
# lanes, tanh for the value lane, single unmasked (N, 128) store.
# ---------------------------------------------------------------------------
def _heads_kernel(x_ref, w_ref, b_ref, pmask_ref, o_ref):
    x = x_ref[...].astype(jnp.bfloat16)
    logits = jnp.dot(x, w_ref[...], preferred_element_type=jnp.float32) + b_ref[...]
    pmask = pmask_ref[...] > 0.0                       # (1, 128): policy lanes
    neg = jnp.float32(-1e30)
    plogits = jnp.where(pmask, logits, neg)
    m = jnp.max(plogits, axis=-1, keepdims=True)
    z = plogits - m
    e = jnp.where(pmask, jnp.exp(z), 0.0)
    lse = jnp.log(jnp.sum(e, axis=-1, keepdims=True))
    o_ref[...] = jnp.where(pmask, z - lse, jnp.tanh(logits))


def hexnet_heads(feat, w_heads, b_heads, pol_mask):
    n = feat.shape[0]
    vmem = pl.BlockSpec(memory_space=pltpu.MemorySpace.VMEM)
    return pl.pallas_call(
        _heads_kernel,
        out_shape=jax.ShapeDtypeStruct((n, C), jnp.float32),
        in_specs=[vmem, vmem, vmem, vmem],
        out_specs=vmem,
    )(feat, w_heads, b_heads, pol_mask)


# ---------------------------------------------------------------------------
# Parameter construction (deterministic, synthetic) + layout folding
# ---------------------------------------------------------------------------
def _num_blocks(board_size):
    return {3: 5, 4: 6, 5: 8, 7: 10}.get(board_size, 5)


def init_params(key, board_size):
    nb = _num_blocks(board_size)
    L = 1 + 2 * nb
    A = board_size * board_size
    F = C * A
    keys = iter(jax.random.split(key, 8 * L + 16))

    def nrm(shape, scale=0.05):
        return scale * jax.random.normal(next(keys), shape, dtype=jnp.float32)

    def bn_fold(conv_bias, nch, eps=1e-5):
        gamma = 1.0 + nrm((nch,), 0.1)
        beta = nrm((nch,), 0.1)
        mean = nrm((nch,), 0.1)
        var = 1.0 + 0.1 * jnp.abs(jax.random.normal(next(keys), (nch,), jnp.float32))
        s = gamma / jnp.sqrt(var + eps)
        return s, (conv_bias - mean) * s + beta

    w_layers, sb_layers = [], []

    # Stem: Conv2d(1, 128, 3, padding=1); embed the single input channel into
    # channel 0 of a full 128-channel tap weight (other channels are zero).
    w1 = nrm((KH, KW, 1, C))
    s1, bb1 = bn_fold(nrm((C,)), C)
    w1_full = jnp.zeros((KH, KW, C, C), jnp.float32).at[:, :, 0, :].set(w1[:, :, 0, :])
    w_layers.append(w1_full.reshape(KH * KW, C, C))
    sb_layers.append(jnp.stack([s1, bb1]))

    for _ in range(nb):
        for _conv in range(2):
            wl = nrm((KH, KW, C, C))
            sl, bbl = bn_fold(nrm((C,)), C)
            w_layers.append(wl.reshape(KH * KW, C, C))
            sb_layers.append(jnp.stack([sl, bbl]))

    w_stack = jnp.stack(w_layers).astype(jnp.bfloat16)           # (L, 9, 128, 128)
    sb_stack = jnp.zeros((L, 8, C), jnp.float32).at[:, :2, :].set(jnp.stack(sb_layers))

    # Heads in torch Linear layout (out, F) with feature columns ordered [c, p]
    # (p = h*W + w), i.e. torch.nn.Flatten on NCHW.
    wp_t, bp = nrm((A, F)), nrm((A,))
    wv_t, bv = nrm((1, F)), nrm((1,))

    def permute_head(w_t):
        # (out, F=[c*A + p]) -> (F=[p*C + c], out): folds the NHWC-flatten order.
        w3 = w_t.reshape(-1, C, A)             # (out, c, p)
        return jnp.transpose(w3, (2, 1, 0)).reshape(F, -1)

    w_heads = jnp.zeros((F, C), jnp.float32)
    w_heads = w_heads.at[:, :A].set(permute_head(wp_t))
    w_heads = w_heads.at[:, A:A + 1].set(permute_head(wv_t))
    w_heads = w_heads.astype(jnp.bfloat16)

    b_heads = jnp.zeros((1, C), jnp.float32).at[0, :A].set(bp).at[0, A].set(bv[0])
    pol_mask = jnp.zeros((1, C), jnp.float32).at[0, :A].set(1.0)

    return {"w_stack": w_stack, "sb_stack": sb_stack,
            "w_heads": w_heads, "b_heads": b_heads, "pol_mask": pol_mask}


# ---------------------------------------------------------------------------
# Full forward pass
# ---------------------------------------------------------------------------
def hexnet_forward(x_nchw, params, *, board_size):
    n = x_nchw.shape[0]
    h = w = board_size
    a = h * w

    act = hexnet_tower(x_nchw, params["w_stack"], params["sb_stack"],
                       board_size=board_size)

    # Extract the interior pixels and flatten in [pixel, channel] order; the
    # permutation back to torch's NCHW-flatten order is folded into w_heads.
    feat = act.reshape(n, h + 2, w + 2, C)[:, 1:h + 1, 1:w + 1, :].reshape(n, a * C)

    out = hexnet_heads(feat, params["w_heads"], params["b_heads"], params["pol_mask"])
    policy = out[:, :a]          # log_softmax over the board cells
    value = out[:, a:a + 1]      # tanh value
    return policy, value


# ---------------------------------------------------------------------------
if __name__ == "__main__":
    board_size = 5
    batch = 2

    key = jax.random.PRNGKey(0)
    k_params, k_x = jax.random.split(key)

    params = init_params(k_params, board_size)
    x = jax.random.normal(k_x, (batch, 1, board_size, board_size), dtype=jnp.float32)

    fwd = jax.jit(functools.partial(hexnet_forward, board_size=board_size))
    policy, value = fwd(x, params)
    policy = jax.block_until_ready(policy)
    value = jax.block_until_ready(value)

    assert policy.shape == (batch, board_size * board_size)
    assert value.shape == (batch, 1)
    assert bool(jnp.all(jnp.isfinite(policy))) and bool(jnp.all(jnp.isfinite(value)))
    # log_softmax rows must (log-)sum to ~0, value in [-1, 1]
    assert bool(jnp.allclose(jnp.sum(jnp.exp(policy), axis=1), 1.0, atol=1e-4))
    assert bool(jnp.all(jnp.abs(value) <= 1.0))

    print("KERNEL_OK")
</pallas_src>

<mosaic_0001>
module attributes {stable_mosaic.version = 11 : i64} {
  func.func @_tower_kernel(%arg0: i32, %arg1: memref<114x128xf32, #tpu.memory_space<vmem>>, %arg2: memref<98x128xf32, #tpu.memory_space<vmem>>, %arg3: memref<1x9x128x128xbf16, #tpu.memory_space<vmem>>, %arg4: memref<1x8x128xf32, #tpu.memory_space<vmem>>, %arg5: memref<98x128xf32, #tpu.memory_space<vmem>>, %arg6: memref<114x128xf32, #tpu.memory_space<vmem>>, %arg7: memref<98x128xf32, #tpu.memory_space<vmem>>) attributes {dimension_semantics = [#tpu.dimension_semantics<arbitrary>], iteration_bounds = array<i64: 17>, scalar_prefetch = 0 : i64, scratch_operands = 2 : i64, tpu.core_type = #tpu.core_type<tc>, window_params = [{pipeline_mode = #tpu.pipeline_mode<synchronous>, transform_indices = @transform_0, window_bounds = array<i64: 114, 128>}, {pipeline_mode = #tpu.pipeline_mode<synchronous>, transform_indices = @transform_1, window_bounds = array<i64: 98, 128>}, {transform_indices = @transform_2, window_bounds = array<i64: 1, 9, 128, 128>}, {transform_indices = @transform_3, window_bounds = array<i64: 1, 8, 128>}, {pipeline_mode = #tpu.pipeline_mode<synchronous>, transform_indices = @transform_4, window_bounds = array<i64: 98, 128>}]} {
    %c0_i32 = arith.constant 0 : i32
    %0 = arith.cmpi eq, %arg0, %c0_i32 : i32
    %1 = arith.extui %0 : i1 to i32
    %c0_i32_0 = arith.constant 0 : i32
    %2 = arith.cmpi ne, %1, %c0_i32_0 : i32
    scf.if %2 {
      %c0_81 = arith.constant 0 : index
      %c0_82 = arith.constant 0 : index
      %102 = vector.load %arg1[%c0_81, %c0_82] : memref<114x128xf32, #tpu.memory_space<vmem>>, vector<114x128xf32>
      %c0_83 = arith.constant 0 : index
      %c0_84 = arith.constant 0 : index
      %103 = vector.load %arg6[%c0_83, %c0_84] : memref<114x128xf32, #tpu.memory_space<vmem>>, vector<114x128xf32>
      tpu.vector_store %arg6[%c0_83, %c0_84], %102 {strides = array<i32>} : memref<114x128xf32, #tpu.memory_space<vmem>>, vector<114x128xf32>,
      %cst_85 = arith.constant 0.000000e+00 : f32
      %104 = vector.broadcast %cst_85 : f32 to vector<98x128xf32>
      %c0_86 = arith.constant 0 : index
      %c0_87 = arith.constant 0 : index
      %105 = vector.load %arg7[%c0_86, %c0_87] : memref<98x128xf32, #tpu.memory_space<vmem>>, vector<98x128xf32>
      tpu.vector_store %arg7[%c0_86, %c0_87], %104 {strides = array<i32>} : memref<98x128xf32, #tpu.memory_space<vmem>>, vector<98x128xf32>,
    } else {
    }
    %c2_i32 = arith.constant 2 : i32
    %c0_i32_1 = arith.constant 0 : i32
    %3 = arith.cmpi eq, %c2_i32, %c0_i32_1 : i32
    %c1_i32 = arith.constant 1 : i32
    %4 = arith.select %3, %c1_i32, %c2_i32 : i32
    %5 = arith.remsi %arg0, %4 : i32
    %c0_i32_2 = arith.constant 0 : i32
    %6 = arith.cmpi ne, %5, %c0_i32_2 : i32
    %c0_i32_3 = arith.constant 0 : i32
    %7 = arith.cmpi slt, %5, %c0_i32_3 : i32
    %c0_i32_4 = arith.constant 0 : i32
    %8 = arith.cmpi slt, %4, %c0_i32_4 : i32
    %9 = arith.xori %7, %8 : i1
    %10 = arith.andi %9, %6 : i1
    %11 = arith.addi %5, %4 : i32
    %12 = arith.select %10, %11, %5 : i32
    %c1_i32_5 = arith.constant 1 : i32
    %13 = arith.cmpi eq, %12, %c1_i32_5 : i32
    %14 = arith.extui %13 : i1 to i32
    %c0_i32_6 = arith.constant 0 : i32
    %15 = arith.cmpi ne, %14, %c0_i32_6 : i32
    scf.if %15 {
      %c8_81 = arith.constant 8 : index
      %c0_82 = arith.constant 0 : index
      %102 = vector.load %arg6[%c8_81, %c0_82] : memref<114x128xf32, #tpu.memory_space<vmem>>, vector<98x128xf32>
      %c0_83 = arith.constant 0 : index
      %c0_84 = arith.constant 0 : index
      %103 = vector.load %arg7[%c0_83, %c0_84] : memref<98x128xf32, #tpu.memory_space<vmem>>, vector<98x128xf32>
      tpu.vector_store %arg7[%c0_83, %c0_84], %102 {strides = array<i32>} : memref<98x128xf32, #tpu.memory_space<vmem>>, vector<98x128xf32>,
    } else {
    }
    %cst = arith.constant 0.000000e+00 : f32
    %16 = vector.broadcast %cst : f32 to vector<98x128xf32>
    %c0 = arith.constant 0 : index
    %c0_7 = arith.constant 0 : index
    %17 = vector.load %arg6[%c0, %c0_7] : memref<114x128xf32, #tpu.memory_space<vmem>>, vector<98x128xf32>
    %18 = arith.truncf %17 : vector<98x128xf32> to vector<98x128xbf16>
    %c0_8 = arith.constant 0 : index
    %c0_9 = arith.constant 0 : index
    %c0_10 = arith.constant 0 : index
    %c0_11 = arith.constant 0 : index
    %19 = vector.load %arg3[%c0_8, %c0_9, %c0_10, %c0_11] : memref<1x9x128x128xbf16, #tpu.memory_space<vmem>>, vector<1x1x128x128xbf16>
    %20 = vector.shape_cast %19 : vector<1x1x128x128xbf16> to vector<128x128xbf16>
    %cst_12 = arith.constant dense<0.000000e+00> : vector<98x128xf32>
    %21 = tpu.matmul %18, %20, %cst_12 {dimension_numbers = #tpu.dot_dimension_numbers<[1], [0], [0], [1], [0, 0, 1, 1], [], []>} : vector<98x128xbf16>, vector<128x128xbf16>, vector<98x128xf32> -> vector<98x128xf32>
    %22 = arith.addf %16, %21 : vector<98x128xf32>
    %c1 = arith.constant 1 : index
    %c0_13 = arith.constant 0 : index
    %23 = vector.load %arg6[%c1, %c0_13] : memref<114x128xf32, #tpu.memory_space<vmem>>, vector<98x128xf32>
    %24 = arith.truncf %23 : vector<98x128xf32> to vector<98x128xbf16>
    %c0_14 = arith.constant 0 : index
    %c1_15 = arith.constant 1 : index
    %c0_16 = arith.constant 0 : index
    %c0_17 = arith.constant 0 : index
    %25 = vector.load %arg3[%c0_14, %c1_15, %c0_16, %c0_17] : memref<1x9x128x128xbf16, #tpu.memory_space<vmem>>, vector<1x1x128x128xbf16>
    %26 = vector.shape_cast %25 : vector<1x1x128x128xbf16> to vector<128x128xbf16>
    %cst_18 = arith.constant dense<0.000000e+00> : vector<98x128xf32>
    %27 = tpu.matmul %24, %26, %cst_18 {dimension_numbers = #tpu.dot_dimension_numbers<[1], [0], [0], [1], [0, 0, 1, 1], [], []>} : vector<98x128xbf16>, vector<128x128xbf16>, vector<98x128xf32> -> vector<98x128xf32>
    %28 = arith.addf %22, %27 : vector<98x128xf32>
    %c2 = arith.constant 2 : index
    %c0_19 = arith.constant 0 : index
    %29 = vector.load %arg6[%c2, %c0_19] : memref<114x128xf32, #tpu.memory_space<vmem>>, vector<98x128xf32>
    %30 = arith.truncf %29 : vector<98x128xf32> to vector<98x128xbf16>
    %c0_20 = arith.constant 0 : index
    %c2_21 = arith.constant 2 : index
    %c0_22 = arith.constant 0 : index
    %c0_23 = arith.constant 0 : index
    %31 = vector.load %arg3[%c0_20, %c2_21, %c0_22, %c0_23] : memref<1x9x128x128xbf16, #tpu.memory_space<vmem>>, vector<1x1x128x128xbf16>
    %32 = vector.shape_cast %31 : vector<1x1x128x128xbf16> to vector<128x128xbf16>
    %cst_24 = arith.constant dense<0.000000e+00> : vector<98x128xf32>
    %33 = tpu.matmul %30, %32, %cst_24 {dimension_numbers = #tpu.dot_dimension_numbers<[1], [0], [0], [1], [0, 0, 1, 1], [], []>} : vector<98x128xbf16>, vector<128x128xbf16>, vector<98x128xf32> -> vector<98x128xf32>
    %34 = arith.addf %28, %33 : vector<98x128xf32>
    %c7 = arith.constant 7 : index
    %c0_25 = arith.constant 0 : index
    %35 = vector.load %arg6[%c7, %c0_25] : memref<114x128xf32, #tpu.memory_space<vmem>>, vector<98x128xf32>
    %36 = arith.truncf %35 : vector<98x128xf32> to vector<98x128xbf16>
    %c0_26 = arith.constant 0 : index
    %c3 = arith.constant 3 : index
    %c0_27 = arith.constant 0 : index
    %c0_28 = arith.constant 0 : index
    %37 = vector.load %arg3[%c0_26, %c3, %c0_27, %c0_28] : memref<1x9x128x128xbf16, #tpu.memory_space<vmem>>, vector<1x1x128x128xbf16>
    %38 = vector.shape_cast %37 : vector<1x1x128x128xbf16> to vector<128x128xbf16>
    %cst_29 = arith.constant dense<0.000000e+00> : vector<98x128xf32>
    %39 = tpu.matmul %36, %38, %cst_29 {dimension_numbers = #tpu.dot_dimension_numbers<[1], [0], [0], [1], [0, 0, 1, 1], [], []>} : vector<98x128xbf16>, vector<128x128xbf16>, vector<98x128xf32> -> vector<98x128xf32>
    %40 = arith.addf %34, %39 : vector<98x128xf32>
    %c8 = arith.constant 8 : index
    %c0_30 = arith.constant 0 : index
    %41 = vector.load %arg6[%c8, %c0_30] : memref<114x128xf32, #tpu.memory_space<vmem>>, vector<98x128xf32>
    %42 = arith.truncf %41 : vector<98x128xf32> to vector<98x128xbf16>
    %c0_31 = arith.constant 0 : index
    %c4 = arith.constant 4 : index
    %c0_32 = arith.constant 0 : index
    %c0_33 = arith.constant 0 : index
    %43 = vector.load %arg3[%c0_31, %c4, %c0_32, %c0_33] : memref<1x9x128x128xbf16, #tpu.memory_space<vmem>>, vector<1x1x128x128xbf16>
    %44 = vector.shape_cast %43 : vector<1x1x128x128xbf16> to vector<128x128xbf16>
    %cst_34 = arith.constant dense<0.000000e+00> : vector<98x128xf32>
    %45 = tpu.matmul %42, %44, %cst_34 {dimension_numbers = #tpu.dot_dimension_numbers<[1], [0], [0], [1], [0, 0, 1, 1], [], []>} : vector<98x128xbf16>, vector<128x128xbf16>, vector<98x128xf32> -> vector<98x128xf32>
    %46 = arith.addf %40, %45 : vector<98x128xf32>
    %c9 = arith.constant 9 : index
    %c0_35 = arith.constant 0 : index
    %47 = vector.load %arg6[%c9, %c0_35] : memref<114x128xf32, #tpu.memory_space<vmem>>, vector<98x128xf32>
    %48 = arith.truncf %47 : vector<98x128xf32> to vector<98x128xbf16>
    %c0_36 = arith.constant 0 : index
    %c5 = arith.constant 5 : index
    %c0_37 = arith.constant 0 : index
    %c0_38 = arith.constant 0 : index
    %49 = vector.load %arg3[%c0_36, %c5, %c0_37, %c0_38] : memref<1x9x128x128xbf16, #tpu.memory_space<vmem>>, vector<1x1x128x128xbf16>
    %50 = vector.shape_cast %49 : vector<1x1x128x128xbf16> to vector<128x128xbf16>
    %cst_39 = arith.constant dense<0.000000e+00> : vector<98x128xf32>
    %51 = tpu.matmul %48, %50, %cst_39 {dimension_numbers = #tpu.dot_dimension_numbers<[1], [0], [0], [1], [0, 0, 1, 1], [], []>} : vector<98x128xbf16>, vector<128x128xbf16>, vector<98x128xf32> -> vector<98x128xf32>
    %52 = arith.addf %46, %51 : vector<98x128xf32>
    %c14 = arith.constant 14 : index
    %c0_40 = arith.constant 0 : index
    %53 = vector.load %arg6[%c14, %c0_40] : memref<114x128xf32, #tpu.memory_space<vmem>>, vector<98x128xf32>
    %54 = arith.truncf %53 : vector<98x128xf32> to vector<98x128xbf16>
    %c0_41 = arith.constant 0 : index
    %c6 = arith.constant 6 : index
    %c0_42 = arith.constant 0 : index
    %c0_43 = arith.constant 0 : index
    %55 = vector.load %arg3[%c0_41, %c6, %c0_42, %c0_43] : memref<1x9x128x128xbf16, #tpu.memory_space<vmem>>, vector<1x1x128x128xbf16>
    %56 = vector.shape_cast %55 : vector<1x1x128x128xbf16> to vector<128x128xbf16>
    %cst_44 = arith.constant dense<0.000000e+00> : vector<98x128xf32>
    %57 = tpu.matmul %54, %56, %cst_44 {dimension_numbers = #tpu.dot_dimension_numbers<[1], [0], [0], [1], [0, 0, 1, 1], [], []>} : vector<98x128xbf16>, vector<128x128xbf16>, vector<98x128xf32> -> vector<98x128xf32>
    %58 = arith.addf %52, %57 : vector<98x128xf32>
    %c15 = arith.constant 15 : index
    %c0_45 = arith.constant 0 : index
    %59 = vector.load %arg6[%c15, %c0_45] : memref<114x128xf32, #tpu.memory_space<vmem>>, vector<98x128xf32>
    %60 = arith.truncf %59 : vector<98x128xf32> to vector<98x128xbf16>
    %c0_46 = arith.constant 0 : index
    %c7_47 = arith.constant 7 : index
    %c0_48 = arith.constant 0 : index
    %c0_49 = arith.constant 0 : index
    %61 = vector.load %arg3[%c0_46, %c7_47, %c0_48, %c0_49] : memref<1x9x128x128xbf16, #tpu.memory_space<vmem>>, vector<1x1x128x128xbf16>
    %62 = vector.shape_cast %61 : vector<1x1x128x128xbf16> to vector<128x128xbf16>
    %cst_50 = arith.constant dense<0.000000e+00> : vector<98x128xf32>
    %63 = tpu.matmul %60, %62, %cst_50 {dimension_numbers = #tpu.dot_dimension_numbers<[1], [0], [0], [1], [0, 0, 1, 1], [], []>} : vector<98x128xbf16>, vector<128x128xbf16>, vector<98x128xf32> -> vector<98x128xf32>
    %64 = arith.addf %58, %63 : vector<98x128xf32>
    %c16 = arith.constant 16 : index
    %c0_51 = arith.constant 0 : index
    %65 = vector.load %arg6[%c16, %c0_51] : memref<114x128xf32, #tpu.memory_space<vmem>>, vector<98x128xf32>
    %66 = arith.truncf %65 : vector<98x128xf32> to vector<98x128xbf16>
    %c0_52 = arith.constant 0 : index
    %c8_53 = arith.constant 8 : index
    %c0_54 = arith.constant 0 : index
    %c0_55 = arith.constant 0 : index
    %67 = vector.load %arg3[%c0_52, %c8_53, %c0_54, %c0_55] : memref<1x9x128x128xbf16, #tpu.memory_space<vmem>>, vector<1x1x128x128xbf16>
    %68 = vector.shape_cast %67 : vector<1x1x128x128xbf16> to vector<128x128xbf16>
    %cst_56 = arith.constant dense<0.000000e+00> : vector<98x128xf32>
    %69 = tpu.matmul %66, %68, %cst_56 {dimension_numbers = #tpu.dot_dimension_numbers<[1], [0], [0], [1], [0, 0, 1, 1], [], []>} : vector<98x128xbf16>, vector<128x128xbf16>, vector<98x128xf32> -> vector<98x128xf32>
    %70 = arith.addf %64, %69 : vector<98x128xf32>
    %c0_57 = arith.constant 0 : index
    %c0_58 = arith.constant 0 : index
    %c0_59 = arith.constant 0 : index
    %71 = vector.load %arg4[%c0_57, %c0_58, %c0_59] : memref<1x8x128xf32, #tpu.memory_space<vmem>>, vector<1x1x128xf32>
    %72 = vector.shape_cast %71 : vector<1x1x128xf32> to vector<1x128xf32>
    %c0_60 = arith.constant 0 : index
    %c1_61 = arith.constant 1 : index
    %c0_62 = arith.constant 0 : index
    %73 = vector.load %arg4[%c0_60, %c1_61, %c0_62] : memref<1x8x128xf32, #tpu.memory_space<vmem>>, vector<1x1x128xf32>
    %74 = vector.shape_cast %73 : vector<1x1x128xf32> to vector<1x128xf32>
    %75 = vector.broadcast %72 : vector<1x128xf32> to vector<98x128xf32>
    %76 = arith.mulf %70, %75 : vector<98x128xf32>
    %77 = vector.broadcast %74 : vector<1x128xf32> to vector<98x128xf32>
    %78 = arith.addf %76, %77 : vector<98x128xf32>
    %c0_i32_63 = arith.constant 0 : i32
    %79 = arith.cmpi sgt, %arg0, %c0_i32_63 : i32
    %c2_i32_64 = arith.constant 2 : i32
    %c0_i32_65 = arith.constant 0 : i32
    %80 = arith.cmpi eq, %c2_i32_64, %c0_i32_65 : i32
    %c1_i32_66 = arith.constant 1 : i32
    %81 = arith.select %80, %c1_i32_66, %c2_i32_64 : i32
    %82 = arith.remsi %arg0, %81 : i32
    %c0_i32_67 = arith.constant 0 : i32
    %83 = arith.cmpi ne, %82, %c0_i32_67 : i32
    %c0_i32_68 = arith.constant 0 : i32
    %84 = arith.cmpi slt, %82, %c0_i32_68 : i32
    %c0_i32_69 = arith.constant 0 : i32
    %85 = arith.cmpi slt, %81, %c0_i32_69 : i32
    %86 = arith.xori %84, %85 : i1
    %87 = arith.andi %86, %83 : i1
    %88 = arith.addi %82, %81 : i32
    %89 = arith.select %87, %88, %82 : i32
    %c0_i32_70 = arith.constant 0 : i32
    %90 = arith.cmpi eq, %89, %c0_i32_70 : i32
    %91 = arith.andi %79, %90 : i1
    %c0_71 = arith.constant 0 : index
    %c0_72 = arith.constant 0 : index
    %92 = vector.load %arg7[%c0_71, %c0_72] : memref<98x128xf32, #tpu.memory_space<vmem>>, vector<98x128xf32>
    %cst_73 = arith.constant 0.000000e+00 : f32
    %93 = vector.broadcast %cst_73 : f32 to vector<98x128xf32>
    %94 = arith.select %91, %92, %93 : vector<98x128xf32>
    %95 = arith.addf %78, %94 : vector<98x128xf32>
    %cst_74 = arith.constant 0.000000e+00 : f32
    %96 = vector.broadcast %cst_74 : f32 to vector<98x128xf32>
    %97 = arith.maximumf %95, %96 : vector<98x128xf32>
    %c0_75 = arith.constant 0 : index
    %c0_76 = arith.constant 0 : index
    %98 = vector.load %arg2[%c0_75, %c0_76] : memref<98x128xf32, #tpu.memory_space<vmem>>, vector<98x128xf32>
    %99 = arith.mulf %97, %98 : vector<98x128xf32>
    %c8_77 = arith.constant 8 : index
    %c0_78 = arith.constant 0 : index
    %100 = vector.load %arg6[%c8_77, %c0_78] : memref<114x128xf32, #tpu.memory_space<vmem>>, vector<98x128xf32>
    tpu.vector_store %arg6[%c8_77, %c0_78], %99 {strides = array<i32>} : memref<114x128xf32, #tpu.memory_space<vmem>>, vector<98x128xf32>,
    %c0_79 = arith.constant 0 : index
    %c0_80 = arith.constant 0 : index
    %101 = vector.load %arg5[%c0_79, %c0_80] : memref<98x128xf32, #tpu.memory_space<vmem>>, vector<98x128xf32>
    tpu.vector_store %arg5[%c0_79, %c0_80], %99 {strides = array<i32>} : memref<98x128xf32, #tpu.memory_space<vmem>>, vector<98x128xf32>,
    return
  }
  func.func @transform_0(%arg0: i32) -> (i32, i32) {
    %c0_i32 = arith.constant 0 : i32
    %c0_i32_0 = arith.constant 0 : i32
    %c0_i32_1 = arith.constant 0 : i32
    return %c0_i32, %c0_i32_0 : i32, i32
  }
  func.func @transform_1(%arg0: i32) -> (i32, i32) {
    %c0_i32 = arith.constant 0 : i32
    %c0_i32_0 = arith.constant 0 : i32
    %c0_i32_1 = arith.constant 0 : i32
    return %c0_i32, %c0_i32_0 : i32, i32
  }
  func.func @transform_2(%arg0: i32) -> (i32, i32, i32, i32) {
    %c0_i32 = arith.constant 0 : i32
    %c0_i32_0 = arith.constant 0 : i32
    %c0_i32_1 = arith.constant 0 : i32
    %c0_i32_2 = arith.constant 0 : i32
    return %arg0, %c0_i32, %c0_i32_0, %c0_i32_1 : i32, i32, i32, i32
  }
  func.func @transform_3(%arg0: i32) -> (i32, i32, i32) {
    %c0_i32 = arith.constant 0 : i32
    %c0_i32_0 = arith.constant 0 : i32
    %c0_i32_1 = arith.constant 0 : i32
    return %arg0, %c0_i32, %c0_i32_0 : i32, i32, i32
  }
  func.func @transform_4(%arg0: i32) -> (i32, i32) {
    %c0_i32 = arith.constant 0 : i32
    %c0_i32_0 = arith.constant 0 : i32
    %c0_i32_1 = arith.constant 0 : i32
    return %c0_i32, %c0_i32_0 : i32, i32
  }
}

module attributes {stable_mosaic.version = 11 : i64} {
  func.func @_heads_kernel(%arg0: memref<2x3200xf32, #tpu.memory_space<vmem>>, %arg1: memref<3200x128xbf16, #tpu.memory_space<vmem>>, %arg2: memref<1x128xf32, #tpu.memory_space<vmem>>, %arg3: memref<1x128xf32, #tpu.memory_space<vmem>>, %arg4: memref<2x128xf32, #tpu.memory_space<vmem>>) attributes {dimension_semantics = [], scalar_prefetch = 0 : i64, scratch_operands = 0 : i64, tpu.core_type = #tpu.core_type<tc>} {
    %c0 = arith.constant 0 : index
    %c0_0 = arith.constant 0 : index
    %0 = vector.load %arg0[%c0, %c0_0] : memref<2x3200xf32, #tpu.memory_space<vmem>>, vector<2x3200xf32>
    %1 = arith.truncf %0 : vector<2x3200xf32> to vector<2x3200xbf16>
    %c0_1 = arith.constant 0 : index
    %c0_2 = arith.constant 0 : index
    %2 = vector.load %arg1[%c0_1, %c0_2] : memref<3200x128xbf16, #tpu.memory_space<vmem>>, vector<3200x128xbf16>
    %cst = arith.constant dense<0.000000e+00> : vector<2x128xf32>
    %3 = tpu.matmul %1, %2, %cst {dimension_numbers = #tpu.dot_dimension_numbers<[1], [0], [0], [1], [0, 0, 1, 1], [], []>} : vector<2x3200xbf16>, vector<3200x128xbf16>, vector<2x128xf32> -> vector<2x128xf32>
    %c0_3 = arith.constant 0 : index
    %c0_4 = arith.constant 0 : index
    %4 = vector.load %arg2[%c0_3, %c0_4] : memref<1x128xf32, #tpu.memory_space<vmem>>, vector<1x128xf32>
    %5 = vector.broadcast %4 : vector<1x128xf32> to vector<2x128xf32>
    %6 = arith.addf %3, %5 : vector<2x128xf32>
    %c0_5 = arith.constant 0 : index
    %c0_6 = arith.constant 0 : index
    %7 = vector.load %arg3[%c0_5, %c0_6] : memref<1x128xf32, #tpu.memory_space<vmem>>, vector<1x128xf32>
    %cst_7 = arith.constant 0.000000e+00 : f32
    %8 = vector.broadcast %cst_7 : f32 to vector<1x128xf32>
    %9 = arith.cmpf ogt, %7, %8 : vector<1x128xf32>
    %cst_8 = arith.constant -1.000000e+30 : f32
    %10 = vector.shape_cast %9 : vector<1x128xi1> to vector<1x128xi1>
    %11 = vector.broadcast %10 : vector<1x128xi1> to vector<2x128xi1>
    %12 = vector.broadcast %cst_8 : f32 to vector<2x128xf32>
    %13 = arith.select %11, %6, %12 : vector<2x128xi1>, vector<2x128xf32>
    %cst_9 = arith.constant dense<0xFF800000> : vector<2xf32>
    %14 = vector.multi_reduction <maximumf>, %13, %cst_9 [1] : vector<2x128xf32> to vector<2xf32>
    %15 = vector.shape_cast %14 : vector<2xf32> to vector<2x1xf32>
    %16 = vector.broadcast %15 : vector<2x1xf32> to vector<2x128xf32>
    %17 = arith.subf %13, %16 : vector<2x128xf32>
    %18 = math.exp %17 : vector<2x128xf32>
    %cst_10 = arith.constant 0.000000e+00 : f32
    %19 = vector.shape_cast %9 : vector<1x128xi1> to vector<1x128xi1>
    %20 = vector.broadcast %19 : vector<1x128xi1> to vector<2x128xi1>
    %21 = vector.broadcast %cst_10 : f32 to vector<2x128xf32>
    %22 = arith.select %20, %18, %21 : vector<2x128xi1>, vector<2x128xf32>
    %cst_11 = arith.constant dense<0.000000e+00> : vector<2xf32>
    %23 = vector.multi_reduction <add>, %22, %cst_11 [1] : vector<2x128xf32> to vector<2xf32>
    %24 = vector.shape_cast %23 : vector<2xf32> to vector<2x1xf32>
    %25 = math.log %24 : vector<2x1xf32>
    %26 = vector.broadcast %25 : vector<2x1xf32> to vector<2x128xf32>
    %27 = arith.subf %17, %26 : vector<2x128xf32>
    %28 = math.tanh %6 : vector<2x128xf32>
    %29 = vector.shape_cast %9 : vector<1x128xi1> to vector<1x128xi1>
    %30 = vector.broadcast %29 : vector<1x128xi1> to vector<2x128xi1>
    %31 = arith.select %30, %27, %28 : vector<2x128xi1>, vector<2x128xf32>
    %c0_12 = arith.constant 0 : index
    %c0_13 = arith.constant 0 : index
    %32 = vector.load %arg4[%c0_12, %c0_13] : memref<2x128xf32, #tpu.memory_space<vmem>>, vector<2x128xf32>
    tpu.vector_store %arg4[%c0_12, %c0_13], %31 {strides = array<i32>} : memref<2x128xf32, #tpu.memory_space<vmem>>, vector<2x128xf32>,
    return
  }
}

</mosaic_0001>

<llo_original>
// kernel: tile.6
$region0: #{tile.6}
  #allocation0 [shape = 's32[1]{0}', space=sflag, size = 0x4, scoped, tag = 'scoped memory for tile.6']
  %s0 = inlined_call_operand.vmem [shape: f32[49], index: 0, kind: input, shape index: {}]
  %s1 = inlined_call_operand.vmem [shape: f32[2,49], index: 1, kind: output, shape index: {}]
  // Predicated region
  $region2: #{tile.6} parent=0 // pred_check
    _
  $region3: #{tile.6} parent=0 // pred_check_branch
    %3 = sbr.rel (0) target = $region5
  $region4: #{tile.6} parent=0 // pred_region
    _
  $region5: #{tile.6} parent=0 // pred_fallthru
    _
  %v4 = vld [vmem:[%s0] ss:$0 sm:$0xff]
  %5 = vst [vmem:[%s1] sm:$0x3] %v4

// kernel: hexnet_forward.2
$region0: #{hexnet_forward.2}
  #allocation0 [shape = 'u32[]', space=smem, size = 0x4, offset = 0x4, fixed_abs, tag = 'smem constant byte address 0x4 - core index']
  #allocation1 [shape = 'u32[144,128]{1,0:T(1,128)}', space=vmem, size = 0x12000, scoped, tag = 'internal scratch']
  #allocation2 [shape = 'f32[114,128]{1,0:T(8,128)}', space=vmem, size = 0xf000, scoped, tag = 'scratch operand']
  #allocation3 [shape = 'f32[98,128]{1,0:T(8,128)}', space=vmem, size = 0xd000, scoped, tag = 'scratch operand']
  %s0 = inlined_call_operand.vmem [shape: f32[114,128], index: 0, kind: input, shape index: {}]
  %s1 = inlined_call_operand.vmem [shape: f32[98,128], index: 1, kind: input, shape index: {}]
  %s2 = inlined_call_operand.hbm [shape: bf16[17,9,128,128], index: 2, kind: input, shape index: {}]
  %s3 = inlined_call_operand.hbm [shape: f32[17,8,128], index: 3, kind: input, shape index: {}]
  %s4 = inlined_call_operand.vmem [shape: f32[98,128], index: 4, kind: output, shape index: {}]
  %s5 = sld [smem:[#allocation0]]
  $region65: #{hexnet_forward.2} parent=0
    _
  %s7 = ssub.s32 1, %s5
  %s8 = scalar_select 0, %s7, %s5
  $region1: #{hexnet_forward.2} parent=0
    #allocation4 [shape = 'u8[589824]{0}', space=vmem, size = 0x90000, scoped, tag = 'input window, operand 2']
    #allocation5 [shape = 's32[2]{0}', space=sflag, size = 0x8, scoped, tag = 'scoped memory for hexnet_forward.2']
    #allocation6 [shape = 'u8[8192]{0}', space=vmem, size = 0x2000, scoped, tag = 'input window, operand 3']
    #allocation7 [shape = 's32[2]{0}', space=sflag, size = 0x8, scoped, tag = 'scoped memory for hexnet_forward.2']
    %9 = vsyncpa [#allocation5], 0
    %s10 = scalar_lea.sflag [#allocation5], 1
    %11 = vsyncpa %s10, 0
    %12 = vsyncpa [#allocation7], 0
    %s13 = scalar_lea.sflag [#allocation7], 1
    %14 = vsyncpa %s13, 0
    loop: start=0, step=1, limit=19
    $region2: #{hexnet_forward.2} parent=1 // loop_pre_header
      _
    $region3: #{hexnet_forward.2} parent=1 // loop_header
      %s16 = sphi 0, %s20
      %p17 = scmp.ge.s32.totalorder %s16, 19
      %s24 = sphi 0, %s24
      %s26 = sphi 0, %s24
      %s27 = sphi 0, %s26
      %s41 = sphi 0, %s27
      %s45 = sphi 0, %s45
      %s47 = sphi 0, %s45
      %s48 = sphi 0, %s47
      %s62 = sphi 0, %s48
      %s68 = sphi 0, %s70
      %s71 = sphi 0, %s68
      %s72 = sphi 0, %s71
      %s88 = sphi 0, %s72
      %s94 = sphi 0, %s96
      %s97 = sphi 0, %s94
      %s98 = sphi 0, %s97
      %s114 = sphi 0, %s98
      %s118 = sphi 0, %s118
      %s120 = sphi 0, %s118
      %s121 = sphi 0, %s120
      %s135 = sphi 0, %s121
    $region4: #{hexnet_forward.2} parent=1 // loop_header_branch
      %19 = sbr.rel (%p17) target = $region8
    $region5: #{hexnet_forward.2} parent=1 // loop_body
      %s21 = ssub.s32 %s16, 1
      %s22 = ssub.s32 %s16, 2
      %s23 = sadd.s32 %s16, 1
      %s25 = sadd.s32 %s24, 1
      %p28 = scmp.eq.s32.totalorder %s16, 16
      %p29 = scmp.ne.s32.totalorder %s24, %s26
      %p30 = scmp.eq.s32.totalorder %s16, 0
      %p31 = por %p29, %p30
      %p32 = scmp.ne.s32.totalorder %s24, %s26
      %p33 = scmp.eq.s32.totalorder %s21, 16
      %p34 = por %p32, %p33
      %p35 = scmp.ne.s32.totalorder %s26, %s27
      %p36 = scmp.eq.s32.totalorder %s21, 0
      %p37 = por %p35, %p36
      %p38 = scmp.ne.s32.totalorder %s26, %s27
      %p39 = scmp.eq.s32.totalorder %s22, 16
      %p40 = por %p38, %p39
      %p42 = scmp.ne.s32.totalorder %s27, %s41
      %p43 = scmp.eq.s32.totalorder %s22, 0
      %p44 = por %p42, %p43
      %s46 = sadd.s32 %s45, 1
      %p49 = scmp.eq.s32.totalorder %s16, 16
      %p50 = scmp.ne.s32.totalorder %s45, %s47
      %p51 = scmp.eq.s32.totalorder %s16, 0
      %p52 = por %p50, %p51
      %p53 = scmp.ne.s32.totalorder %s45, %s47
      %p54 = scmp.eq.s32.totalorder %s21, 16
      %p55 = por %p53, %p54
      %p56 = scmp.ne.s32.totalorder %s47, %s48
      %p57 = scmp.eq.s32.totalorder %s21, 0
      %p58 = por %p56, %p57
      %p59 = scmp.ne.s32.totalorder %s47, %s48
      %p60 = scmp.eq.s32.totalorder %s22, 16
      %p61 = por %p59, %p60
      %p63 = scmp.ne.s32.totalorder %s48, %s62
      %p64 = scmp.eq.s32.totalorder %s22, 0
      %p65 = por %p63, %p64
      %s66 = ssub.s32 %s16, %s23
      %p67 = scmp.eq.s32.totalorder %s66, 0
      %s69 = sadd.s32 %s68, 1
      %s70 = scalar_select %p67, %s68, %s69
      %p73 = pneg %p67
      %p74 = scmp.eq.s32.totalorder %s16, 16
      %p75 = por %p73, %p74
      %p76 = scmp.ne.s32.totalorder %s68, %s71
      %p77 = scmp.eq.s32.totalorder %s16, 0
      %p78 = por %p76, %p77
      %p79 = scmp.ne.s32.totalorder %s68, %s71
      %p80 = scmp.eq.s32.totalorder %s21, 16
      %p81 = por %p79, %p80
      %p82 = scmp.ne.s32.totalorder %s71, %s72
      %p83 = scmp.eq.s32.totalorder %s21, 0
      %p84 = por %p82, %p83
      %p85 = scmp.ne.s32.totalorder %s71, %s72
      %p86 = scmp.eq.s32.totalorder %s22, 16
      %p87 = por %p85, %p86
      %p89 = scmp.ne.s32.totalorder %s72, %s88
      %p90 = scmp.eq.s32.totalorder %s22, 0
      %p91 = por %p89, %p90
      %s92 = ssub.s32 %s16, %s23
      %p93 = scmp.eq.s32.totalorder %s92, 0
      %s95 = sadd.s32 %s94, 1
      %s96 = scalar_select %p93, %s94, %s95
      %p99 = pneg %p93
      %p100 = scmp.eq.s32.totalorder %s16, 16
      %p101 = por %p99, %p100
      %p102 = scmp.ne.s32.totalorder %s94, %s97
      %p103 = scmp.eq.s32.totalorder %s16, 0
      %p104 = por %p102, %p103
      %p105 = scmp.ne.s32.totalorder %s94, %s97
      %p106 = scmp.eq.s32.totalorder %s21, 16
      %p107 = por %p105, %p106
      %p108 = scmp.ne.s32.totalorder %s97, %s98
      %p109 = scmp.eq.s32.totalorder %s21, 0
      %p110 = por %p108, %p109
      %p111 = scmp.ne.s32.totalorder %s97, %s98
      %p112 = scmp.eq.s32.totalorder %s22, 16
      %p113 = por %p111, %p112
      %p115 = scmp.ne.s32.totalorder %s98, %s114
      %p116 = scmp.eq.s32.totalorder %s22, 0
      %p117 = por %p115, %p116
      %s119 = sadd.s32 %s118, 1
      %p122 = scmp.eq.s32.totalorder %s16, 16
      %p123 = scmp.ne.s32.totalorder %s118, %s120
      %p124 = scmp.eq.s32.totalorder %s16, 0
      %p125 = por %p123, %p124
      %p126 = scmp.ne.s32.totalorder %s118, %s120
      %p127 = scmp.eq.s32.totalorder %s21, 16
      %p128 = por %p126, %p127
      %p129 = scmp.ne.s32.totalorder %s120, %s121
      %p130 = scmp.eq.s32.totalorder %s21, 0
      %p131 = por %p129, %p130
      %p132 = scmp.ne.s32.totalorder %s120, %s121
      %p133 = scmp.eq.s32.totalorder %s22, 16
      %p134 = por %p132, %p133
      %p136 = scmp.ne.s32.totalorder %s121, %s135
      %p137 = scmp.eq.s32.totalorder %s22, 0
      %p138 = por %p136, %p137
      %p139 = scmp.le.s32.totalorder 1, %s16
      %p140 = scmp.lt.s32.totalorder %s16, 18
      %p141 = pnand %p139, %p140
      %p142 = pneg %p141
      // Predicated region
      $region9: #{hexnet_forward.2} parent=5 // pred_check
        _
      $region10: #{hexnet_forward.2} parent=5 // pred_check_branch
        %144 = sbr.rel (%p141) target = $region12
      $region11: #{hexnet_forward.2} parent=5 // pred_region
        %s145 = ssub.s32 %s16, 1
        // Predicated region
        $region13: #{hexnet_forward.2} parent=11 // pred_check
          %p146 = pneg %p37
        $region14: #{hexnet_forward.2} parent=11 // pred_check_branch
          %148 = sbr.rel (%p146) target = $region16
        $region15: #{hexnet_forward.2} parent=11 // pred_region
          _
        $region16: #{hexnet_forward.2} parent=11 // pred_fallthru
          _
        // Predicated region
        $region17: #{hexnet_forward.2} parent=11 // pred_check
          %p149 = pneg %p58
        $region18: #{hexnet_forward.2} parent=11 // pred_check_branch
          %151 = sbr.rel (%p149) target = $region20
        $region19: #{hexnet_forward.2} parent=11 // pred_region
          _
        $region20: #{hexnet_forward.2} parent=11 // pred_fallthru
          _
      $region12: #{hexnet_forward.2} parent=5 // pred_fallthru
        _
      %p152 = scmp.lt.s32.totalorder %s16, 17
      // Predicated region
      $region21: #{hexnet_forward.2} parent=5 // pred_check
        %p153 = pneg %p152
      $region22: #{hexnet_forward.2} parent=5 // pred_check_branch
        %155 = sbr.rel (%p153) target = $region24
      $region23: #{hexnet_forward.2} parent=5 // pred_region
        // Predicated region
        $region25: #{hexnet_forward.2} parent=23 // pred_check
          %p156 = pneg %p78
        $region26: #{hexnet_forward.2} parent=23 // pred_check_branch
          %158 = sbr.rel (%p156) target = $region28
        $region27: #{hexnet_forward.2} parent=23 // pred_region
          %s159 = sand.u32 %s68, 1
          %s160 = scalar_lea.sflag [#allocation5], %s159
          %s161 = sand.u32 %s68, 1
          %s162 = smul.addr %s161, 576
          %s163 = scalar_lea.vmem [#allocation4], %s162
          %s165 = ssub.s32 9216, 9216
          %166 = vsyncadd %s160, %s165
          %s167 = smul.addr %s16, 144
          %s168 = smul.addr %s167, 64
          %s169 = scalar_lea.hbm %s2, %s168
          %s170 = sshll.u32 %s163, 4
          %s171 = int_to_ptr.vmem [resolvable:$true] %s170
          %176 = dma.hbm_to_vmem [thread:$0]  %s169, 9216, %s171, %s160, 64, 64, 4
        $region28: #{hexnet_forward.2} parent=23 // pred_fallthru
          _
        // Predicated region
        $region29: #{hexnet_forward.2} parent=23 // pred_check
          %p177 = pneg %p104
        $region30: #{hexnet_forward.2} parent=23 // pred_check_branch
          %179 = sbr.rel (%p177) target = $region32
        $region31: #{hexnet_forward.2} parent=23 // pred_region
          %s180 = sand.u32 %s94, 1
          %s181 = scalar_lea.sflag [#allocation7], %s180
          %s182 = sand.u32 %s94, 1
          %s183 = smul.addr %s182, 8
          %s184 = scalar_lea.vmem [#allocation6], %s183
          %s186 = ssub.s32 128, 128
          %187 = vsyncadd %s181, %s186
          %s188 = smul.addr %s16, 128
          %s189 = scalar_lea.hbm %s3, %s188
          %s191 = sshll.u32 %s184, 4
          %s192 = int_to_ptr.vmem [resolvable:$true] %s191
          %194 = dma.hbm_to_vmem [thread:$0]  %s189, 128, %s192, %s181
        $region32: #{hexnet_forward.2} parent=23 // pred_fallthru
          _
      $region24: #{hexnet_forward.2} parent=5 // pred_fallthru
        _
      %p195 = scmp.le.s32.totalorder 1, %s16
      %p196 = scmp.lt.s32.totalorder %s16, 18
      %p197 = pnand %p195, %p196
      %p198 = pneg %p197
      // Predicated region
      $region33: #{hexnet_forward.2} parent=5 // pred_check
        _
      $region34: #{hexnet_forward.2} parent=5 // pred_check_branch
        %200 = sbr.rel (%p197) target = $region36
      $region35: #{hexnet_forward.2} parent=5 // pred_region
        %s201 = ssub.s32 %s16, 1
        %s202 = sand.u32 %s71, 1
        %s203 = scalar_lea.sflag [#allocation5], %s202
        %s204 = sand.u32 %s71, 1
        %s205 = smul.addr %s204, 576
        %s206 = scalar_lea.vmem [#allocation4], %s205
        // Predicated region
        $region37: #{hexnet_forward.2} parent=35 // pred_check
          %p207 = pneg %p84
        $region38: #{hexnet_forward.2} parent=35 // pred_check_branch
          %209 = sbr.rel (%p207) target = $region40
        $region39: #{hexnet_forward.2} parent=35 // pred_region
          %210 = dma.done %s203, 9216
        $region40: #{hexnet_forward.2} parent=35 // pred_fallthru
          _
        %s211 = sand.u32 %s97, 1
        %s212 = scalar_lea.sflag [#allocation7], %s211
        %s213 = sand.u32 %s97, 1
        %s214 = smul.addr %s213, 8
        %s215 = scalar_lea.vmem [#allocation6], %s214
        // Predicated region
        $region41: #{hexnet_forward.2} parent=35 // pred_check
          %p216 = pneg %p110
        $region42: #{hexnet_forward.2} parent=35 // pred_check_branch
          %218 = sbr.rel (%p216) target = $region44
        $region43: #{hexnet_forward.2} parent=35 // pred_region
          %219 = dma.done %s212, 128
        $region44: #{hexnet_forward.2} parent=35 // pred_fallthru
          _
        %p220 = pneg %p37
        %p221 = pneg %p34
        %p222 = pneg %p58
        %p223 = pneg %p55
        %s224 = sand.u32 %s71, 1
        %s225 = scalar_lea.sflag [#allocation5], %s224
        %s226 = sand.u32 %s71, 1
        %s227 = smul.addr %s226, 576
        %s228 = scalar_lea.vmem [#allocation4], %s227
        %p229 = pneg %p84
        %p230 = pneg %p81
        %s231 = sand.u32 %s97, 1
        %s232 = scalar_lea.sflag [#allocation7], %s231
        %s233 = sand.u32 %s97, 1
        %s234 = smul.addr %s233, 8
        %s235 = scalar_lea.vmem [#allocation6], %s234
        %p236 = pneg %p110
        %p237 = pneg %p107
        %p238 = pneg %p131
        %p239 = pneg %p128
        %p241 = scmp.eq.s32.totalorder %s21, 0
        // Predicated region
        $region45: #{hexnet_forward.2} parent=35 // pred_check
          %p242 = pneg %p241
        $region46: #{hexnet_forward.2} parent=35 // pred_check_branch
          %244 = sbr.rel (%p242) target = $region48
        $region47: #{hexnet_forward.2} parent=35 // pred_region
          %v245 = vld [vmem:[%s0] sm:$0xff]
          %v246 = vld [vmem:[%s0 + $0x8] sm:$0xff]
          %v247 = vld [vmem:[%s0 + $0x10] sm:$0xff]
          %v248 = vld [vmem:[%s0 + $0x18] sm:$0xff]
          %v249 = vld [vmem:[%s0 + $0x20] sm:$0xff]
          %v250 = vld [vmem:[%s0 + $0x28] sm:$0xff]
          %v251 = vld [vmem:[%s0 + $0x30] sm:$0xff]
          %v252 = vld [vmem:[%s0 + $0x38] sm:$0xff]
          %v253 = vld [vmem:[%s0 + $0x40] sm:$0xff]
          %v254 = vld [vmem:[%s0 + $0x48] sm:$0xff]
          %v255 = vld [vmem:[%s0 + $0x50] sm:$0xff]
          %v256 = vld [vmem:[%s0 + $0x58] sm:$0xff]
          %v257 = vld [vmem:[%s0 + $0x60] sm:$0xff]
          %v258 = vld [vmem:[%s0 + $0x68] sm:$0xff]
          %v259 = vld [vmem:[%s0 + $0x70] sm:$0x3]
          %260 = vst [vmem:[#allocation2] sm:$0xff] %v245
          %261 = vst [vmem:[#allocation2 + $0x8] sm:$0xff] %v246
          %262 = vst [vmem:[#allocation2 + $0x10] sm:$0xff] %v247
          %263 = vst [vmem:[#allocation2 + $0x18] sm:$0xff] %v248
          %264 = vst [vmem:[#allocation2 + $0x20] sm:$0xff] %v249
          %265 = vst [vmem:[#allocation2 + $0x28] sm:$0xff] %v250
          %266 = vst [vmem:[#allocation2 + $0x30] sm:$0xff] %v251
          %267 = vst [vmem:[#allocation2 + $0x38] sm:$0xff] %v252
          %268 = vst [vmem:[#allocation2 + $0x40] sm:$0xff] %v253
          %269 = vst [vmem:[#allocation2 + $0x48] sm:$0xff] %v254
          %270 = vst [vmem:[#allocation2 + $0x50] sm:$0xff] %v255
          %271 = vst [vmem:[#allocation2 + $0x58] sm:$0xff] %v256
          %272 = vst [vmem:[#allocation2 + $0x60] sm:$0xff] %v257
          %273 = vst [vmem:[#allocation2 + $0x68] sm:$0xff] %v258
          %274 = vst [vmem:[#allocation2 + $0x70] sm:$0x3] %v259
          %275 = vst [vmem:[#allocation3] sm:$0xff] 0.0
          %276 = vst [vmem:[#allocation3 + $0x8] sm:$0xff] 0.0
          %277 = vst [vmem:[#allocation3 + $0x10] sm:$0xff] 0.0
          %278 = vst [vmem:[#allocation3 + $0x18] sm:$0xff] 0.0
          %279 = vst [vmem:[#allocation3 + $0x20] sm:$0xff] 0.0
          %280 = vst [vmem:[#allocation3 + $0x28] sm:$0xff] 0.0
          %281 = vst [vmem:[#allocation3 + $0x30] sm:$0xff] 0.0
          %282 = vst [vmem:[#allocation3 + $0x38] sm:$0xff] 0.0
          %283 = vst [vmem:[#allocation3 + $0x40] sm:$0xff] 0.0
          %284 = vst [vmem:[#allocation3 + $0x48] sm:$0xff] 0.0
          %285 = vst [vmem:[#allocation3 + $0x50] sm:$0xff] 0.0
          %286 = vst [vmem:[#allocation3 + $0x58] sm:$0xff] 0.0
          %287 = vst [vmem:[#allocation3 + $0x60] sm:$0x3] 0.0
        $region48: #{hexnet_forward.2} parent=35 // pred_fallthru
          _
        %p288 = scmp.lt.s32.totalorder %s21, 0
        %s289 = ssub.s32 0, %s21
        %s290 = scalar_select %p288, %s289, %s21
        %s291 = sand.u32 %s290, 1
        %s292 = ssub.s32 0, %s291
        %s293 = scalar_select %p288, %s292, %s291
        %p294 = scmp.ne.s32.totalorder %s293, 0
        %p295 = scmp.lt.s32.totalorder %s293, 0
        %p296 = pnand %p295, %p294
        %p297 = pneg %p296
        %s298 = sadd.s32 %s293, 2
        %s299 = scalar_select %p297, %s298, %s293
        %p300 = scmp.eq.s32.totalorder %s299, 1
        // Predicated region
        $region49: #{hexnet_forward.2} parent=35 // pred_check
          %p301 = pneg %p300
        $region50: #{hexnet_forward.2} parent=35 // pred_check_branch
          %303 = sbr.rel (%p301) target = $region52
        $region51: #{hexnet_forward.2} parent=35 // pred_region
          %v304 = vld [vmem:[#allocation2 + $0x8] sm:$0xff]
          %v305 = vld [vmem:[#allocation2 + $0x10] sm:$0xff]
          %v306 = vld [vmem:[#allocation2 + $0x18] sm:$0xff]
          %v307 = vld [vmem:[#allocation2 + $0x20] sm:$0xff]
          %v308 = vld [vmem:[#allocation2 + $0x28] sm:$0xff]
          %v309 = vld [vmem:[#allocation2 + $0x30] sm:$0xff]
          %v310 = vld [vmem:[#allocation2 + $0x38] sm:$0xff]
          %v311 = vld [vmem:[#allocation2 + $0x40] sm:$0xff]
          %v312 = vld [vmem:[#allocation2 + $0x48] sm:$0xff]
          %v313 = vld [vmem:[#allocation2 + $0x50] sm:$0xff]
          %v314 = vld [vmem:[#allocation2 + $0x58] sm:$0xff]
          %v315 = vld [vmem:[#allocation2 + $0x60] sm:$0xff]
          %v316 = vld [vmem:[#allocation2 + $0x68] sm:$0x3]
          %317 = vst [vmem:[#allocation3] sm:$0xff] %v304
          %318 = vst [vmem:[#allocation3 + $0x8] sm:$0xff] %v305
          %319 = vst [vmem:[#allocation3 + $0x10] sm:$0xff] %v306
          %320 = vst [vmem:[#allocation3 + $0x18] sm:$0xff] %v307
          %321 = vst [vmem:[#allocation3 + $0x20] sm:$0xff] %v308
          %322 = vst [vmem:[#allocation3 + $0x28] sm:$0xff] %v309
          %323 = vst [vmem:[#allocation3 + $0x30] sm:$0xff] %v310
          %324 = vst [vmem:[#allocation3 + $0x38] sm:$0xff] %v311
          %325 = vst [vmem:[#allocation3 + $0x40] sm:$0xff] %v312
          %326 = vst [vmem:[#allocation3 + $0x48] sm:$0xff] %v313
          %327 = vst [vmem:[#allocation3 + $0x50] sm:$0xff] %v314
          %328 = vst [vmem:[#allocation3 + $0x58] sm:$0xff] %v315
          %329 = vst [vmem:[#allocation3 + $0x60] sm:$0x3] %v316
        $region52: #{hexnet_forward.2} parent=35 // pred_fallthru
          _
        %v330 = vld [vmem:[#allocation2] sm:$0xff]
        %v331 = vld [vmem:[#allocation2 + $0x8] sm:$0xff]
        %v332 = vld [vmem:[#allocation2 + $0x10] sm:$0xff]
        %v333 = vld [vmem:[#allocation2 + $0x18] sm:$0xff]
        %v334 = vld [vmem:[#allocation2 + $0x20] sm:$0xff]
        %v335 = vld [vmem:[#allocation2 + $0x28] sm:$0xff]
        %v336 = vld [vmem:[#allocation2 + $0x30] sm:$0xff]
        %v337 = vld [vmem:[#allocation2 + $0x38] sm:$0xff]
        %v338 = vld [vmem:[#allocation2 + $0x40] sm:$0xff]
        %v339 = vld [vmem:[#allocation2 + $0x48] sm:$0xff]
        %v340 = vld [vmem:[#allocation2 + $0x50] sm:$0xff]
        %v341 = vld [vmem:[#allocation2 + $0x58] sm:$0xff]
        %v342 = vld [vmem:[#allocation2 + $0x60] sm:$0x3]
        %v343 = vpack.c.bf16 %v331, %v330
        %v344 = vpack.c.bf16 %v333, %v332
        %v345 = vpack.c.bf16 %v335, %v334
        %v346 = vpack.c.bf16 %v337, %v336
        %v347 = vpack.c.bf16 %v339, %v338
        %v348 = vpack.c.bf16 %v341, %v340
        %v349 = vpack.c.bf16 %v342, %v342
        %v350 = vld [vmem:[%s206] sm:$0xf]
        %v351 = vld [vmem:[%s206 + $0x4] sm:$0xf]
        %v352 = vld [vmem:[%s206 + $0x8] sm:$0xf]
        %v353 = vld [vmem:[%s206 + $0xc] sm:$0xf]
        %v354 = vld [vmem:[%s206 + $0x10] sm:$0xf]
        %v355 = vld [vmem:[%s206 + $0x14] sm:$0xf]
        %v356 = vld [vmem:[%s206 + $0x18] sm:$0xf]
        %v357 = vld [vmem:[%s206 + $0x1c] sm:$0xf]
        %v358 = vld [vmem:[%s206 + $0x20] sm:$0xf]
        %v359 = vld [vmem:[%s206 + $0x24] sm:$0xf]
        %v360 = vld [vmem:[%s206 + $0x28] sm:$0xf]
        %v361 = vld [vmem:[%s206 + $0x2c] sm:$0xf]
        %v362 = vld [vmem:[%s206 + $0x30] sm:$0xf]
        %v363 = vld [vmem:[%s206 + $0x34] sm:$0xf]
        %v364 = vld [vmem:[%s206 + $0x38] sm:$0xf]
        %v365 = vld [vmem:[%s206 + $0x3c] sm:$0xf]
        %v366 = vld [vmem:[#allocation2 + $0x1] sm:$0xff]
        %v367 = vld [vmem:[#allocation2 + $0x9] sm:$0xff]
        %v368 = vld [vmem:[#allocation2 + $0x11] sm:$0xff]
        %v369 = vld [vmem:[#allocation2 + $0x19] sm:$0xff]
        %v370 = vld [vmem:[#allocation2 + $0x21] sm:$0xff]
        %v371 = vld [vmem:[#allocation2 + $0x29] sm:$0xff]
        %v372 = vld [vmem:[#allocation2 + $0x31] sm:$0xff]
        %v373 = vld [vmem:[#allocation2 + $0x39] sm:$0xff]
        %v374 = vld [vmem:[#allocation2 + $0x41] sm:$0xff]
        %v375 = vld [vmem:[#allocation2 + $0x49] sm:$0xff]
        %v376 = vld [vmem:[#allocation2 + $0x51] sm:$0xff]
        %v377 = vld [vmem:[#allocation2 + $0x59] sm:$0xff]
        %v378 = vld [vmem:[#allocation2 + $0x61] sm:$0x3]
        %v379 = vpack.c.bf16 %v367, %v366
        %v380 = vpack.c.bf16 %v369, %v368
        %v381 = vpack.c.bf16 %v371, %v370
        %v382 = vpack.c.bf16 %v373, %v372
        %v383 = vpack.c.bf16 %v375, %v374
        %v384 = vpack.c.bf16 %v377, %v376
        %v385 = vpack.c.bf16 %v378, %v378
        %s386 = scalar_lea.vmem %s206, 64 [#allocation4]
        %v387 = vld [vmem:[%s386] sm:$0xf]
        %v388 = vld [vmem:[%s386 + $0x4] sm:$0xf]
        %v389 = vld [vmem:[%s386 + $0x8] sm:$0xf]
        %v390 = vld [vmem:[%s386 + $0xc] sm:$0xf]
        %v391 = vld [vmem:[%s386 + $0x10] sm:$0xf]
        %v392 = vld [vmem:[%s386 + $0x14] sm:$0xf]
        %v393 = vld [vmem:[%s386 + $0x18] sm:$0xf]
        %v394 = vld [vmem:[%s386 + $0x1c] sm:$0xf]
        %v395 = vld [vmem:[%s386 + $0x20] sm:$0xf]
        %v396 = vld [vmem:[%s386 + $0x24] sm:$0xf]
        %v397 = vld [vmem:[%s386 + $0x28] sm:$0xf]
        %v398 = vld [vmem:[%s386 + $0x2c] sm:$0xf]
        %v399 = vld [vmem:[%s386 + $0x30] sm:$0xf]
        %v400 = vld [vmem:[%s386 + $0x34] sm:$0xf]
        %v401 = vld [vmem:[%s386 + $0x38] sm:$0xf]
        %v402 = vld [vmem:[%s386 + $0x3c] sm:$0xf]
        %v419 = vunpack.c.l.b16 %v387
        %v420 = vunpack.c.l.b16 %v388
        %v421 = vunpack.c.l.b16 %v389
        %v422 = vunpack.c.l.b16 %v390
        %v423 = vunpack.c.l.b16 %v391
        %v424 = vunpack.c.l.b16 %v392
        %v425 = vunpack.c.l.b16 %v393
        %v426 = vunpack.c.l.b16 %v394
        %v427 = vunpack.c.l.b16 %v395
        %v428 = vunpack.c.l.b16 %v396
        %v429 = vunpack.c.l.b16 %v397
        %v430 = vunpack.c.l.b16 %v398
        %v431 = vunpack.c.l.b16 %v399
        %v432 = vunpack.c.l.b16 %v400
        %v433 = vunpack.c.l.b16 %v401
        %v434 = vunpack.c.l.b16 %v402
        %v435 = vpack.c.b16 %v420, %v419
        %v436 = vpack.c.b16 %v422, %v421
        %v437 = vpack.c.b16 %v424, %v423
        %v438 = vpack.c.b16 %v426, %v425
        %v439 = vpack.c.b16 %v428, %v427
        %v440 = vpack.c.b16 %v430, %v429
        %v441 = vpack.c.b16 %v432, %v431
        %v442 = vpack.c.b16 %v434, %v433
        %451 = vmatprep.subr.bf16.mxu0 0
        %452 = vmatpush1.bf16.msra.mxu0 %v435
        %453 = vmatprep.subr.bf16.mxu0 0
        %454 = vmatpush1.bf16.msra.mxu0 %v436
        %455 = vmatprep.subr.bf16.mxu0 0
        %456 = vmatpush1.bf16.msra.mxu0 %v437
        %457 = vmatprep.subr.bf16.mxu0 0
        %458 = vmatpush1.bf16.msra.mxu0 %v438
        %459 = vmatprep.subr.bf16.mxu0 0
        %460 = vmatpush1.bf16.msra.mxu0 %v439
        %461 = vmatprep.subr.bf16.mxu0 0
        %462 = vmatpush1.bf16.msra.mxu0 %v440
        %463 = vmatprep.subr.bf16.mxu0 0
        %464 = vmatpush1.bf16.msra.mxu0 %v441
        %465 = vmatprep.subr.bf16.mxu0 0
        %466 = vmatpush1.bf16.msra.mxu0 %v442
        %467 = vmatprep.subr.bf16.mxu0 0
        %468 = vmatpush1.bf16.msra.mxu0 0
        %469 = vmatprep.subr.bf16.mxu0 0
        %470 = vmatpush1.bf16.msra.mxu0 0
        %471 = vmatprep.subr.bf16.mxu0 0
        %472 = vmatpush1.bf16.msra.mxu0 0
        %473 = vmatprep.subr.bf16.mxu0 0
        %474 = vmatpush1.bf16.msra.mxu0 0
        %475 = vmatprep.subr.bf16.mxu0 0
        %476 = vmatpush1.bf16.msra.mxu0 0
        %477 = vmatprep.subr.bf16.mxu0 0
        %478 = vmatpush1.bf16.msra.mxu0 0
        %479 = vmatprep.subr.bf16.mxu0 0
        %480 = vmatpush1.bf16.msra.mxu0 0
        %481 = vmatprep.subr.bf16.mxu0 0
        %482 = vmatpush1.bf16.msra.mxu0 0
        %483 = vmatprep.mubr.bf16.mxu0 0
        %484 = vmatmul.mubr.bf16.gmra.mrb[0].mxu0 %v379
        %v485 = vpop.f32.mrb[0].mxu0
        %v486 = vadd.f32 0.0, %v485
        %v487 = vpop.f32.mrb[0].mxu0
        %v488 = vpop.f32.mrb[0].mxu0
        %v489 = vadd.f32 0.0, %v488
        %v490 = vpop.f32.mrb[0].mxu0
        %491 = vmatprep.mubr.bf16.mxu0 0
        %492 = vmatmul.mubr.bf16.gmra.mrb[0].mxu0 %v380
        %v493 = vpop.f32.mrb[0].mxu0
        %v494 = vadd.f32 0.0, %v493
        %v495 = vpop.f32.mrb[0].mxu0
        %v496 = vpop.f32.mrb[0].mxu0
        %v497 = vadd.f32 0.0, %v496
        %v498 = vpop.f32.mrb[0].mxu0
        %499 = vmatprep.mubr.bf16.mxu0 0
        %500 = vmatmul.mubr.bf16.gmra.mrb[0].mxu0 %v381
        %v501 = vpop.f32.mrb[0].mxu0
        %v502 = vadd.f32 0.0, %v501
        %v503 = vpop.f32.mrb[0].mxu0
        %v504 = vpop.f32.mrb[0].mxu0
        %v505 = vadd.f32 0.0, %v504
        %v506 = vpop.f32.mrb[0].mxu0
        %507 = vmatprep.mubr.bf16.mxu0 0
        %508 = vmatmul.mubr.bf16.gmra.mrb[0].mxu0 %v382
        %v509 = vpop.f32.mrb[0].mxu0
        %v510 = vadd.f32 0.0, %v509
        %v511 = vpop.f32.mrb[0].mxu0
        %v512 = vpop.f32.mrb[0].mxu0
        %v513 = vadd.f32 0.0, %v512
        %v514 = vpop.f32.mrb[0].mxu0
        %515 = vmatprep.mubr.bf16.mxu0 0
        %516 = vmatmul.mubr.bf16.gmra.mrb[0].mxu0 %v383
        %v517 = vpop.f32.mrb[0].mxu0
        %v518 = vadd.f32 0.0, %v517
        %v519 = vpop.f32.mrb[0].mxu0
        %v520 = vpop.f32.mrb[0].mxu0
        %v521 = vadd.f32 0.0, %v520
        %v522 = vpop.f32.mrb[0].mxu0
        %523 = vmatprep.mubr.bf16.mxu0 0
        %524 = vmatmul.mubr.bf16.gmra.mrb[0].mxu0 %v384
        %v525 = vpop.f32.mrb[0].mxu0
        %v526 = vadd.f32 0.0, %v525
        %v527 = vpop.f32.mrb[0].mxu0
        %v528 = vpop.f32.mrb[0].mxu0
        %v529 = vadd.f32 0.0, %v528
        %v530 = vpop.f32.mrb[0].mxu0
        %531 = vmatprep.mubr.bf16.mxu0 0
        %532 = vmatmul.mubr.bf16.gmra.mrb[0].mxu0 %v385
        %v533 = vpop.f32.mrb[0].mxu0
        %v534 = vadd.f32 0.0, %v533
        %v535 = vpop.f32.mrb[0].mxu0
        %v536 = vpop.f32.mrb[0].mxu0
        %v537 = vpop.f32.mrb[0].mxu0
        %538 = vdwg.mxu0
        %v555 = vunpack.c.l.b16 %v350
        %v556 = vunpack.c.l.b16 %v351
        %v557 = vunpack.c.l.b16 %v352
        %v558 = vunpack.c.l.b16 %v353
        %v559 = vunpack.c.l.b16 %v354
        %v560 = vunpack.c.l.b16 %v355
        %v561 = vunpack.c.l.b16 %v356
        %v562 = vunpack.c.l.b16 %v357
        %v563 = vunpack.c.l.b16 %v358
        %v564 = vunpack.c.l.b16 %v359
        %v565 = vunpack.c.l.b16 %v360
        %v566 = vunpack.c.l.b16 %v361
        %v567 = vunpack.c.l.b16 %v362
        %v568 = vunpack.c.l.b16 %v363
        %v569 = vunpack.c.l.b16 %v364
        %v570 = vunpack.c.l.b16 %v365
        %v571 = vpack.c.b16 %v556, %v555
        %v572 = vpack.c.b16 %v558, %v557
        %v573 = vpack.c.b16 %v560, %v559
        %v574 = vpack.c.b16 %v562, %v561
        %v575 = vpack.c.b16 %v564, %v563
        %v576 = vpack.c.b16 %v566, %v565
        %v577 = vpack.c.b16 %v568, %v567
        %v578 = vpack.c.b16 %v570, %v569
        %587 = vmatprep.subr.bf16.mxu0 0
        %588 = vmatpush1.bf16.msra.mxu0 %v571
        %589 = vmatprep.subr.bf16.mxu0 0
        %590 = vmatpush1.bf16.msra.mxu0 %v572
        %591 = vmatprep.subr.bf16.mxu0 0
        %592 = vmatpush1.bf16.msra.mxu0 %v573
        %593 = vmatprep.subr.bf16.mxu0 0
        %594 = vmatpush1.bf16.msra.mxu0 %v574
        %595 = vmatprep.subr.bf16.mxu0 0
        %596 = vmatpush1.bf16.msra.mxu0 %v575
        %597 = vmatprep.subr.bf16.mxu0 0
        %598 = vmatpush1.bf16.msra.mxu0 %v576
        %599 = vmatprep.subr.bf16.mxu0 0
        %600 = vmatpush1.bf16.msra.mxu0 %v577
        %601 = vmatprep.subr.bf16.mxu0 0
        %602 = vmatpush1.bf16.msra.mxu0 %v578
        %603 = vmatprep.subr.bf16.mxu0 0
        %604 = vmatpush1.bf16.msra.mxu0 0
        %605 = vmatprep.subr.bf16.mxu0 0
        %606 = vmatpush1.bf16.msra.mxu0 0
        %607 = vmatprep.subr.bf16.mxu0 0
        %608 = vmatpush1.bf16.msra.mxu0 0
        %609 = vmatprep.subr.bf16.mxu0 0
        %610 = vmatpush1.bf16.msra.mxu0 0
        %611 = vmatprep.subr.bf16.mxu0 0
        %612 = vmatpush1.bf16.msra.mxu0 0
        %613 = vmatprep.subr.bf16.mxu0 0
        %614 = vmatpush1.bf16.msra.mxu0 0
        %615 = vmatprep.subr.bf16.mxu0 0
        %616 = vmatpush1.bf16.msra.mxu0 0
        %617 = vmatprep.subr.bf16.mxu0 0
        %618 = vmatpush1.bf16.msra.mxu0 0
        %619 = vmatprep.mubr.bf16.mxu0 0
        %620 = vmatmul.mubr.bf16.gmra.mrb[0].mxu0 %v343
        %v621 = vpop.f32.mrb[0].mxu0
        %v622 = vadd.f32 %v486, %v621
        %v623 = vpop.f32.mrb[0].mxu0
        %v624 = vpop.f32.mrb[0].mxu0
        %v625 = vadd.f32 %v489, %v624
        %v626 = vpop.f32.mrb[0].mxu0
        %627 = vmatprep.mubr.bf16.mxu0 0
        %628 = vmatmul.mubr.bf16.gmra.mrb[0].mxu0 %v344
        %v629 = vpop.f32.mrb[0].mxu0
        %v630 = vadd.f32 %v494, %v629
        %v631 = vpop.f32.mrb[0].mxu0
        %v632 = vpop.f32.mrb[0].mxu0
        %v633 = vadd.f32 %v497, %v632
        %v634 = vpop.f32.mrb[0].mxu0
        %635 = vmatprep.mubr.bf16.mxu0 0
        %636 = vmatmul.mubr.bf16.gmra.mrb[0].mxu0 %v345
        %v637 = vpop.f32.mrb[0].mxu0
        %v638 = vadd.f32 %v502, %v637
        %v639 = vpop.f32.mrb[0].mxu0
        %v640 = vpop.f32.mrb[0].mxu0
        %v641 = vadd.f32 %v505, %v640
        %v642 = vpop.f32.mrb[0].mxu0
        %643 = vmatprep.mubr.bf16.mxu0 0
        %644 = vmatmul.mubr.bf16.gmra.mrb[0].mxu0 %v346
        %v645 = vpop.f32.mrb[0].mxu0
        %v646 = vadd.f32 %v510, %v645
        %v647 = vpop.f32.mrb[0].mxu0
        %v648 = vpop.f32.mrb[0].mxu0
        %v649 = vadd.f32 %v513, %v648
        %v650 = vpop.f32.mrb[0].mxu0
        %651 = vmatprep.mubr.bf16.mxu0 0
        %652 = vmatmul.mubr.bf16.gmra.mrb[0].mxu0 %v347
        %v653 = vpop.f32.mrb[0].mxu0
        %v654 = vadd.f32 %v518, %v653
        %v655 = vpop.f32.mrb[0].mxu0
        %v656 = vpop.f32.mrb[0].mxu0
        %v657 = vadd.f32 %v521, %v656
        %v658 = vpop.f32.mrb[0].mxu0
        %659 = vmatprep.mubr.bf16.mxu0 0
        %660 = vmatmul.mubr.bf16.gmra.mrb[0].mxu0 %v348
        %v661 = vpop.f32.mrb[0].mxu0
        %v662 = vadd.f32 %v526, %v661
        %v663 = vpop.f32.mrb[0].mxu0
        %v664 = vpop.f32.mrb[0].mxu0
        %v665 = vadd.f32 %v529, %v664
        %v666 = vpop.f32.mrb[0].mxu0
        %667 = vmatprep.mubr.bf16.mxu0 0
        %668 = vmatmul.mubr.bf16.gmra.mrb[0].mxu0 %v349
        %v669 = vpop.f32.mrb[0].mxu0
        %v670 = vadd.f32 %v534, %v669
        %v671 = vpop.f32.mrb[0].mxu0
        %v672 = vpop.f32.mrb[0].mxu0
        %v673 = vpop.f32.mrb[0].mxu0
        %674 = vdwg.mxu0
        %v675 = vld [vmem:[#allocation2 + $0x2] sm:$0xff]
        %v676 = vld [vmem:[#allocation2 + $0xa] sm:$0xff]
        %v677 = vld [vmem:[#allocation2 + $0x12] sm:$0xff]
        %v678 = vld [vmem:[#allocation2 + $0x1a] sm:$0xff]
        %v679 = vld [vmem:[#allocation2 + $0x22] sm:$0xff]
        %v680 = vld [vmem:[#allocation2 + $0x2a] sm:$0xff]
        %v681 = vld [vmem:[#allocation2 + $0x32] sm:$0xff]
        %v682 = vld [vmem:[#allocation2 + $0x3a] sm:$0xff]
        %v683 = vld [vmem:[#allocation2 + $0x42] sm:$0xff]
        %v684 = vld [vmem:[#allocation2 + $0x4a] sm:$0xff]
        %v685 = vld [vmem:[#allocation2 + $0x52] sm:$0xff]
        %v686 = vld [vmem:[#allocation2 + $0x5a] sm:$0xff]
        %v687 = vld [vmem:[#allocation2 + $0x62] sm:$0x3]
        %v688 = vpack.c.bf16 %v676, %v675
        %v689 = vpack.c.bf16 %v678, %v677
        %v690 = vpack.c.bf16 %v680, %v679
        %v691 = vpack.c.bf16 %v682, %v681
        %v692 = vpack.c.bf16 %v684, %v683
        %v693 = vpack.c.bf16 %v686, %v685
        %v694 = vpack.c.bf16 %v687, %v687
        %s695 = scalar_lea.vmem %s206, 128 [#allocation4]
        %v696 = vld [vmem:[%s695] sm:$0xf]
        %v697 = vld [vmem:[%s695 + $0x4] sm:$0xf]
        %v698 = vld [vmem:[%s695 + $0x8] sm:$0xf]
        %v699 = vld [vmem:[%s695 + $0xc] sm:$0xf]
        %v700 = vld [vmem:[%s695 + $0x10] sm:$0xf]
        %v701 = vld [vmem:[%s695 + $0x14] sm:$0xf]
        %v702 = vld [vmem:[%s695 + $0x18] sm:$0xf]
        %v703 = vld [vmem:[%s695 + $0x1c] sm:$0xf]
        %v704 = vld [vmem:[%s695 + $0x20] sm:$0xf]
        %v705 = vld [vmem:[%s695 + $0x24] sm:$0xf]
        %v706 = vld [vmem:[%s695 + $0x28] sm:$0xf]
        %v707 = vld [vmem:[%s695 + $0x2c] sm:$0xf]
        %v708 = vld [vmem:[%s695 + $0x30] sm:$0xf]
        %v709 = vld [vmem:[%s695 + $0x34] sm:$0xf]
        %v710 = vld [vmem:[%s695 + $0x38] sm:$0xf]
        %v711 = vld [vmem:[%s695 + $0x3c] sm:$0xf]
        %v728 = vunpack.c.l.b16 %v696
        %v729 = vunpack.c.l.b16 %v697
        %v730 = vunpack.c.l.b16 %v698
        %v731 = vunpack.c.l.b16 %v699
        %v732 = vunpack.c.l.b16 %v700
        %v733 = vunpack.c.l.b16 %v701
        %v734 = vunpack.c.l.b16 %v702
        %v735 = vunpack.c.l.b16 %v703
        %v736 = vunpack.c.l.b16 %v704
        %v737 = vunpack.c.l.b16 %v705
        %v738 = vunpack.c.l.b16 %v706
        %v739 = vunpack.c.l.b16 %v707
        %v740 = vunpack.c.l.b16 %v708
        %v741 = vunpack.c.l.b16 %v709
        %v742 = vunpack.c.l.b16 %v710
        %v743 = vunpack.c.l.b16 %v711
        %v744 = vpack.c.b16 %v729, %v728
        %v745 = vpack.c.b16 %v731, %v730
        %v746 = vpack.c.b16 %v733, %v732
        %v747 = vpack.c.b16 %v735, %v734
        %v748 = vpack.c.b16 %v737, %v736
        %v749 = vpack.c.b16 %v739, %v738
        %v750 = vpack.c.b16 %v741, %v740
        %v751 = vpack.c.b16 %v743, %v742
        %760 = vmatprep.subr.bf16.mxu0 0
        %761 = vmatpush1.bf16.msra.mxu0 %v744
        %762 = vmatprep.subr.bf16.mxu0 0
        %763 = vmatpush1.bf16.msra.mxu0 %v745
        %764 = vmatprep.subr.bf16.mxu0 0
        %765 = vmatpush1.bf16.msra.mxu0 %v746
        %766 = vmatprep.subr.bf16.mxu0 0
        %767 = vmatpush1.bf16.msra.mxu0 %v747
        %768 = vmatprep.subr.bf16.mxu0 0
        %769 = vmatpush1.bf16.msra.mxu0 %v748
        %770 = vmatprep.subr.bf16.mxu0 0
        %771 = vmatpush1.bf16.msra.mxu0 %v749
        %772 = vmatprep.subr.bf16.mxu0 0
        %773 = vmatpush1.bf16.msra.mxu0 %v750
        %774 = vmatprep.subr.bf16.mxu0 0
        %775 = vmatpush1.bf16.msra.mxu0 %v751
        %776 = vmatprep.subr.bf16.mxu0 0
        %777 = vmatpush1.bf16.msra.mxu0 0
        %778 = vmatprep.subr.bf16.mxu0 0
        %779 = vmatpush1.bf16.msra.mxu0 0
        %780 = vmatprep.subr.bf16.mxu0 0
        %781 = vmatpush1.bf16.msra.mxu0 0
        %782 = vmatprep.subr.bf16.mxu0 0
        %783 = vmatpush1.bf16.msra.mxu0 0
        %784 = vmatprep.subr.bf16.mxu0 0
        %785 = vmatpush1.bf16.msra.mxu0 0
        %786 = vmatprep.subr.bf16.mxu0 0
        %787 = vmatpush1.bf16.msra.mxu0 0
        %788 = vmatprep.subr.bf16.mxu0 0
        %789 = vmatpush1.bf16.msra.mxu0 0
        %790 = vmatprep.subr.bf16.mxu0 0
        %791 = vmatpush1.bf16.msra.mxu0 0
        %792 = vmatprep.mubr.bf16.mxu0 0
        %793 = vmatmul.mubr.bf16.gmra.mrb[0].mxu0 %v688
        %v794 = vpop.f32.mrb[0].mxu0
        %v795 = vadd.f32 0.0, %v794
        %v796 = vpop.f32.mrb[0].mxu0
        %v797 = vpop.f32.mrb[0].mxu0
        %v798 = vadd.f32 0.0, %v797
        %v799 = vpop.f32.mrb[0].mxu0
        %800 = vmatprep.mubr.bf16.mxu0 0
        %801 = vmatmul.mubr.bf16.gmra.mrb[0].mxu0 %v689
        %v802 = vpop.f32.mrb[0].mxu0
        %v803 = vadd.f32 0.0, %v802
        %v804 = vpop.f32.mrb[0].mxu0
        %v805 = vpop.f32.mrb[0].mxu0
        %v806 = vadd.f32 0.0, %v805
        %v807 = vpop.f32.mrb[0].mxu0
        %808 = vmatprep.mubr.bf16.mxu0 0
        %809 = vmatmul.mubr.bf16.gmra.mrb[0].mxu0 %v690
        %v810 = vpop.f32.mrb[0].mxu0
        %v811 = vadd.f32 0.0, %v810
        %v812 = vpop.f32.mrb[0].mxu0
        %v813 = vpop.f32.mrb[0].mxu0
        %v814 = vadd.f32 0.0, %v813
        %v815 = vpop.f32.mrb[0].mxu0
        %816 = vmatprep.mubr.bf16.mxu0 0
        %817 = vmatmul.mubr.bf16.gmra.mrb[0].mxu0 %v691
        %v818 = vpop.f32.mrb[0].mxu0
        %v819 = vadd.f32 0.0, %v818
        %v820 = vpop.f32.mrb[0].mxu0
        %v821 = vpop.f32.mrb[0].mxu0
        %v822 = vadd.f32 0.0, %v821
        %v823 = vpop.f32.mrb[0].mxu0
        %824 = vmatprep.mubr.bf16.mxu0 0
        %825 = vmatmul.mubr.bf16.gmra.mrb[0].mxu0 %v692
        %v826 = vpop.f32.mrb[0].mxu0
        %v827 = vadd.f32 0.0, %v826
        %v828 = vpop.f32.mrb[0].mxu0
        %v829 = vpop.f32.mrb[0].mxu0
        %v830 = vadd.f32 0.0, %v829
        %v831 = vpop.f32.mrb[0].mxu0
        %832 = vmatprep.mubr.bf16.mxu0 0
        %833 = vmatmul.mubr.bf16.gmra.mrb[0].mxu0 %v693
        %v834 = vpop.f32.mrb[0].mxu0
        %v835 = vadd.f32 0.0, %v834
        %v836 = vpop.f32.mrb[0].mxu0
        %v837 = vpop.f32.mrb[0].mxu0
        %v838 = vadd.f32 0.0, %v837
        %v839 = vpop.f32.mrb[0].mxu0
        %840 = vmatprep.mubr.bf16.mxu0 0
        %841 = vmatmul.mubr.bf16.gmra.mrb[0].mxu0 %v694
        %v842 = vpop.f32.mrb[0].mxu0
        %v843 = vadd.f32 0.0, %v842
        %v844 = vpop.f32.mrb[0].mxu0
        %v845 = vpop.f32.mrb[0].mxu0
        %v846 = vpop.f32.mrb[0].mxu0
        %847 = vdwg.mxu0
        %v848 = vadd.f32 %v622, %v795
        %v849 = vadd.f32 %v625, %v798
        %v850 = vadd.f32 %v630, %v803
        %v851 = vadd.f32 %v633, %v806
        %v852 = vadd.f32 %v638, %v811
        %v853 = vadd.f32 %v641, %v814
        %v854 = vadd.f32 %v646, %v819
        %v855 = vadd.f32 %v649, %v822
        %v856 = vadd.f32 %v654, %v827
        %v857 = vadd.f32 %v657, %v830
        %v858 = vadd.f32 %v662, %v835
        %v859 = vadd.f32 %v665, %v838
        %v860 = vadd.f32 %v670, %v843
        %v861 = vld [vmem:[#allocation2 + $0x7] sm:$0xff]
        %v862 = vld [vmem:[#allocation2 + $0xf] sm:$0xff]
        %v863 = vld [vmem:[#allocation2 + $0x17] sm:$0xff]
        %v864 = vld [vmem:[#allocation2 + $0x1f] sm:$0xff]
        %v865 = vld [vmem:[#allocation2 + $0x27] sm:$0xff]
        %v866 = vld [vmem:[#allocation2 + $0x2f] sm:$0xff]
        %v867 = vld [vmem:[#allocation2 + $0x37] sm:$0xff]
        %v868 = vld [vmem:[#allocation2 + $0x3f] sm:$0xff]
        %v869 = vld [vmem:[#allocation2 + $0x47] sm:$0xff]
        %v870 = vld [vmem:[#allocation2 + $0x4f] sm:$0xff]
        %v871 = vld [vmem:[#allocation2 + $0x57] sm:$0xff]
        %v872 = vld [vmem:[#allocation2 + $0x5f] sm:$0xff]
        %v873 = vld [vmem:[#allocation2 + $0x67] sm:$0x3]
        %v874 = vpack.c.bf16 %v862, %v861
        %v875 = vpack.c.bf16 %v864, %v863
        %v876 = vpack.c.bf16 %v866, %v865
        %v877 = vpack.c.bf16 %v868, %v867
        %v878 = vpack.c.bf16 %v870, %v869
        %v879 = vpack.c.bf16 %v872, %v871
        %v880 = vpack.c.bf16 %v873, %v873
        %s881 = scalar_lea.vmem %s206, 192 [#allocation4]
        %v882 = vld [vmem:[%s881] sm:$0xf]
        %v883 = vld [vmem:[%s881 + $0x4] sm:$0xf]
        %v884 = vld [vmem:[%s881 + $0x8] sm:$0xf]
        %v885 = vld [vmem:[%s881 + $0xc] sm:$0xf]
        %v886 = vld [vmem:[%s881 + $0x10] sm:$0xf]
        %v887 = vld [vmem:[%s881 + $0x14] sm:$0xf]
        %v888 = vld [vmem:[%s881 + $0x18] sm:$0xf]
        %v889 = vld [vmem:[%s881 + $0x1c] sm:$0xf]
        %v890 = vld [vmem:[%s881 + $0x20] sm:$0xf]
        %v891 = vld [vmem:[%s881 + $0x24] sm:$0xf]
        %v892 = vld [vmem:[%s881 + $0x28] sm:$0xf]
        %v893 = vld [vmem:[%s881 + $0x2c] sm:$0xf]
        %v894 = vld [vmem:[%s881 + $0x30] sm:$0xf]
        %v895 = vld [vmem:[%s881 + $0x34] sm:$0xf]
        %v896 = vld [vmem:[%s881 + $0x38] sm:$0xf]
        %v897 = vld [vmem:[%s881 + $0x3c] sm:$0xf]
        %v914 = vunpack.c.l.b16 %v882
        %v915 = vunpack.c.l.b16 %v883
        %v916 = vunpack.c.l.b16 %v884
        %v917 = vunpack.c.l.b16 %v885
        %v918 = vunpack.c.l.b16 %v886
        %v919 = vunpack.c.l.b16 %v887
        %v920 = vunpack.c.l.b16 %v888
        %v921 = vunpack.c.l.b16 %v889
        %v922 = vunpack.c.l.b16 %v890
        %v923 = vunpack.c.l.b16 %v891
        %v924 = vunpack.c.l.b16 %v892
        %v925 = vunpack.c.l.b16 %v893
        %v926 = vunpack.c.l.b16 %v894
        %v927 = vunpack.c.l.b16 %v895
        %v928 = vunpack.c.l.b16 %v896
        %v929 = vunpack.c.l.b16 %v897
        %v930 = vpack.c.b16 %v915, %v914
        %v931 = vpack.c.b16 %v917, %v916
        %v932 = vpack.c.b16 %v919, %v918
        %v933 = vpack.c.b16 %v921, %v920
        %v934 = vpack.c.b16 %v923, %v922
        %v935 = vpack.c.b16 %v925, %v924
        %v936 = vpack.c.b16 %v927, %v926
        %v937 = vpack.c.b16 %v929, %v928
        %946 = vmatprep.subr.bf16.mxu0 0
        %947 = vmatpush1.bf16.msra.mxu0 %v930
        %948 = vmatprep.subr.bf16.mxu0 0
        %949 = vmatpush1.bf16.msra.mxu0 %v931
        %950 = vmatprep.subr.bf16.mxu0 0
        %951 = vmatpush1.bf16.msra.mxu0 %v932
        %952 = vmatprep.subr.bf16.mxu0 0
        %953 = vmatpush1.bf16.msra.mxu0 %v933
        %954 = vmatprep.subr.bf16.mxu0 0
        %955 = vmatpush1.bf16.msra.mxu0 %v934
        %956 = vmatprep.subr.bf16.mxu0 0
        %957 = vmatpush1.bf16.msra.mxu0 %v935
        %958 = vmatprep.subr.bf16.mxu0 0
        %959 = vmatpush1.bf16.msra.mxu0 %v936
        %960 = vmatprep.subr.bf16.mxu0 0
        %961 = vmatpush1.bf16.msra.mxu0 %v937
        %962 = vmatprep.subr.bf16.mxu0 0
        %963 = vmatpush1.bf16.msra.mxu0 0
        %964 = vmatprep.subr.bf16.mxu0 0
        %965 = vmatpush1.bf16.msra.mxu0 0
        %966 = vmatprep.subr.bf16.mxu0 0
        %967 = vmatpush1.bf16.msra.mxu0 0
        %968 = vmatprep.subr.bf16.mxu0 0
        %969 = vmatpush1.bf16.msra.mxu0 0
        %970 = vmatprep.subr.bf16.mxu0 0
        %971 = vmatpush1.bf16.msra.mxu0 0
        %972 = vmatprep.subr.bf16.mxu0 0
        %973 = vmatpush1.bf16.msra.mxu0 0
        %974 = vmatprep.subr.bf16.mxu0 0
        %975 = vmatpush1.bf16.msra.mxu0 0
        %976 = vmatprep.subr.bf16.mxu0 0
        %977 = vmatpush1.bf16.msra.mxu0 0
        %978 = vmatprep.mubr.bf16.mxu0 0
        %979 = vmatmul.mubr.bf16.gmra.mrb[0].mxu0 %v874
        %v980 = vpop.f32.mrb[0].mxu0
        %v981 = vadd.f32 0.0, %v980
        %v982 = vpop.f32.mrb[0].mxu0
        %v983 = vpop.f32.mrb[0].mxu0
        %v984 = vadd.f32 0.0, %v983
        %v985 = vpop.f32.mrb[0].mxu0
        %986 = vmatprep.mubr.bf16.mxu0 0
        %987 = vmatmul.mubr.bf16.gmra.mrb[0].mxu0 %v875
        %v988 = vpop.f32.mrb[0].mxu0
        %v989 = vadd.f32 0.0, %v988
        %v990 = vpop.f32.mrb[0].mxu0
        %v991 = vpop.f32.mrb[0].mxu0
        %v992 = vadd.f32 0.0, %v991
        %v993 = vpop.f32.mrb[0].mxu0
        %994 = vmatprep.mubr.bf16.mxu0 0
        %995 = vmatmul.mubr.bf16.gmra.mrb[0].mxu0 %v876
        %v996 = vpop.f32.mrb[0].mxu0
        %v997 = vadd.f32 0.0, %v996
        %v998 = vpop.f32.mrb[0].mxu0
        %v999 = vpop.f32.mrb[0].mxu0
        %v1000 = vadd.f32 0.0, %v999
        %v1001 = vpop.f32.mrb[0].mxu0
        %1002 = vmatprep.mubr.bf16.mxu0 0
        %1003 = vmatmul.mubr.bf16.gmra.mrb[0].mxu0 %v877
        %v1004 = vpop.f32.mrb[0].mxu0
        %v1005 = vadd.f32 0.0, %v1004
        %v1006 = vpop.f32.mrb[0].mxu0
        %v1007 = vpop.f32.mrb[0].mxu0
        %v1008 = vadd.f32 0.0, %v1007
        %v1009 = vpop.f32.mrb[0].mxu0
        %1010 = vmatprep.mubr.bf16.mxu0 0
        %1011 = vmatmul.mubr.bf16.gmra.mrb[0].mxu0 %v878
        %v1012 = vpop.f32.mrb[0].mxu0
        %v1013 = vadd.f32 0.0, %v1012
        %v1014 = vpop.f32.mrb[0].mxu0
        %v1015 = vpop.f32.mrb[0].mxu0
        %v1016 = vadd.f32 0.0, %v1015
        %v1017 = vpop.f32.mrb[0].mxu0
        %1018 = vmatprep.mubr.bf16.mxu0 0
        %1019 = vmatmul.mubr.bf16.gmra.mrb[0].mxu0 %v879
        %v1020 = vpop.f32.mrb[0].mxu0
        %v1021 = vadd.f32 0.0, %v1020
        %v1022 = vpop.f32.mrb[0].mxu0
        %v1023 = vpop.f32.mrb[0].mxu0
        %v1024 = vadd.f32 0.0, %v1023
        %v1025 = vpop.f32.mrb[0].mxu0
        %1026 = vmatprep.mubr.bf16.mxu0 0
        %1027 = vmatmul.mubr.bf16.gmra.mrb[0].mxu0 %v880
        %v1028 = vpop.f32.mrb[0].mxu0
        %v1029 = vadd.f32 0.0, %v1028
        %v1030 = vpop.f32.mrb[0].mxu0
        %v1031 = vpop.f32.mrb[0].mxu0
        %v1032 = vpop.f32.mrb[0].mxu0
        %1033 = vdwg.mxu0
        %v1034 = vadd.f32 %v848, %v981
        %v1035 = vadd.f32 %v849, %v984
        %v1036 = vadd.f32 %v850, %v989
        %v1037 = vadd.f32 %v851, %v992
        %v1038 = vadd.f32 %v852, %v997
        %v1039 = vadd.f32 %v853, %v1000
        %v1040 = vadd.f32 %v854, %v1005
        %v1041 = vadd.f32 %v855, %v1008
        %v1042 = vadd.f32 %v856, %v1013
        %v1043 = vadd.f32 %v857, %v1016
        %v1044 = vadd.f32 %v858, %v1021
        %v1045 = vadd.f32 %v859, %v1024
        %v1046 = vadd.f32 %v860, %v1029
        %v1047 = vld [vmem:[#allocation2 + $0x8] sm:$0xff]
        %v1048 = vld [vmem:[#allocation2 + $0x10] sm:$0xff]
        %v1049 = vld [vmem:[#allocation2 + $0x18] sm:$0xff]
        %v1050 = vld [vmem:[#allocation2 + $0x20] sm:$0xff]
        %v1051 = vld [vmem:[#allocation2 + $0x28] sm:$0xff]
        %v1052 = vld [vmem:[#allocation2 + $0x30] sm:$0xff]
        %v1053 = vld [vmem:[#allocation2 + $0x38] sm:$0xff]
        %v1054 = vld [vmem:[#allocation2 + $0x40] sm:$0xff]
        %v1055 = vld [vmem:[#allocation2 + $0x48] sm:$0xff]
        %v1056 = vld [vmem:[#allocation2 + $0x50] sm:$0xff]
        %v1057 = vld [vmem:[#allocation2 + $0x58] sm:$0xff]
        %v1058 = vld [vmem:[#allocation2 + $0x60] sm:$0xff]
        %v1059 = vld [vmem:[#allocation2 + $0x68] sm:$0x3]
        %v1060 = vpack.c.bf16 %v1048, %v1047
        %v1061 = vpack.c.bf16 %v1050, %v1049
        %v1062 = vpack.c.bf16 %v1052, %v1051
        %v1063 = vpack.c.bf16 %v1054, %v1053
        %v1064 = vpack.c.bf16 %v1056, %v1055
        %v1065 = vpack.c.bf16 %v1058, %v1057
        %v1066 = vpack.c.bf16 %v1059, %v1059
        %s1067 = scalar_lea.vmem %s206, 256 [#allocation4]
        %v1068 = vld [vmem:[%s1067] sm:$0xf]
        %v1069 = vld [vmem:[%s1067 + $0x4] sm:$0xf]
        %v1070 = vld [vmem:[%s1067 + $0x8] sm:$0xf]
        %v1071 = vld [vmem:[%s1067 + $0xc] sm:$0xf]
        %v1072 = vld [vmem:[%s1067 + $0x10] sm:$0xf]
        %v1073 = vld [vmem:[%s1067 + $0x14] sm:$0xf]
        %v1074 = vld [vmem:[%s1067 + $0x18] sm:$0xf]
        %v1075 = vld [vmem:[%s1067 + $0x1c] sm:$0xf]
        %v1076 = vld [vmem:[%s1067 + $0x20] sm:$0xf]
        %v1077 = vld [vmem:[%s1067 + $0x24] sm:$0xf]
        %v1078 = vld [vmem:[%s1067 + $0x28] sm:$0xf]
        %v1079 = vld [vmem:[%s1067 + $0x2c] sm:$0xf]
        %v1080 = vld [vmem:[%s1067 + $0x30] sm:$0xf]
        %v1081 = vld [vmem:[%s1067 + $0x34] sm:$0xf]
        %v1082 = vld [vmem:[%s1067 + $0x38] sm:$0xf]
        %v1083 = vld [vmem:[%s1067 + $0x3c] sm:$0xf]
        %v1100 = vunpack.c.l.b16 %v1068
        %v1101 = vunpack.c.l.b16 %v1069
        %v1102 = vunpack.c.l.b16 %v1070
        %v1103 = vunpack.c.l.b16 %v1071
        %v1104 = vunpack.c.l.b16 %v1072
        %v1105 = vunpack.c.l.b16 %v1073
        %v1106 = vunpack.c.l.b16 %v1074
        %v1107 = vunpack.c.l.b16 %v1075
        %v1108 = vunpack.c.l.b16 %v1076
        %v1109 = vunpack.c.l.b16 %v1077
        %v1110 = vunpack.c.l.b16 %v1078
        %v1111 = vunpack.c.l.b16 %v1079
        %v1112 = vunpack.c.l.b16 %v1080
        %v1113 = vunpack.c.l.b16 %v1081
        %v1114 = vunpack.c.l.b16 %v1082
        %v1115 = vunpack.c.l.b16 %v1083
        %v1116 = vpack.c.b16 %v1101, %v1100
        %v1117 = vpack.c.b16 %v1103, %v1102
        %v1118 = vpack.c.b16 %v1105, %v1104
        %v1119 = vpack.c.b16 %v1107, %v1106
        %v1120 = vpack.c.b16 %v1109, %v1108
        %v1121 = vpack.c.b16 %v1111, %v1110
        %v1122 = vpack.c.b16 %v1113, %v1112
        %v1123 = vpack.c.b16 %v1115, %v1114
        %1132 = vmatprep.subr.bf16.mxu0 0
        %1133 = vmatpush1.bf16.msra.mxu0 %v1116
        %1134 = vmatprep.subr.bf16.mxu0 0
        %1135 = vmatpush1.bf16.msra.mxu0 %v1117
        %1136 = vmatprep.subr.bf16.mxu0 0
        %1137 = vmatpush1.bf16.msra.mxu0 %v1118
        %1138 = vmatprep.subr.bf16.mxu0 0
        %1139 = vmatpush1.bf16.msra.mxu0 %v1119
        %1140 = vmatprep.subr.bf16.mxu0 0
        %1141 = vmatpush1.bf16.msra.mxu0 %v1120
        %1142 = vmatprep.subr.bf16.mxu0 0
        %1143 = vmatpush1.bf16.msra.mxu0 %v1121
        %1144 = vmatprep.subr.bf16.mxu0 0
        %1145 = vmatpush1.bf16.msra.mxu0 %v1122
        %1146 = vmatprep.subr.bf16.mxu0 0
        %1147 = vmatpush1.bf16.msra.mxu0 %v1123
        %1148 = vmatprep.subr.bf16.mxu0 0
        %1149 = vmatpush1.bf16.msra.mxu0 0
        %1150 = vmatprep.subr.bf16.mxu0 0
        %1151 = vmatpush1.bf16.msra.mxu0 0
        %1152 = vmatprep.subr.bf16.mxu0 0
        %1153 = vmatpush1.bf16.msra.mxu0 0
        %1154 = vmatprep.subr.bf16.mxu0 0
        %1155 = vmatpush1.bf16.msra.mxu0 0
        %1156 = vmatprep.subr.bf16.mxu0 0
        %1157 = vmatpush1.bf16.msra.mxu0 0
        %1158 = vmatprep.subr.bf16.mxu0 0
        %1159 = vmatpush1.bf16.msra.mxu0 0
        %1160 = vmatprep.subr.bf16.mxu0 0
        %1161 = vmatpush1.bf16.msra.mxu0 0
        %1162 = vmatprep.subr.bf16.mxu0 0
        %1163 = vmatpush1.bf16.msra.mxu0 0
        %1164 = vmatprep.mubr.bf16.mxu0 0
        %1165 = vmatmul.mubr.bf16.gmra.mrb[0].mxu0 %v1060
        %v1166 = vpop.f32.mrb[0].mxu0
        %v1167 = vadd.f32 0.0, %v1166
        %v1168 = vpop.f32.mrb[0].mxu0
        %v1169 = vpop.f32.mrb[0].mxu0
        %v1170 = vadd.f32 0.0, %v1169
        %v1171 = vpop.f32.mrb[0].mxu0
        %1172 = vmatprep.mubr.bf16.mxu0 0
        %1173 = vmatmul.mubr.bf16.gmra.mrb[0].mxu0 %v1061
        %v1174 = vpop.f32.mrb[0].mxu0
        %v1175 = vadd.f32 0.0, %v1174
        %v1176 = vpop.f32.mrb[0].mxu0
        %v1177 = vpop.f32.mrb[0].mxu0
        %v1178 = vadd.f32 0.0, %v1177
        %v1179 = vpop.f32.mrb[0].mxu0
        %1180 = vmatprep.mubr.bf16.mxu0 0
        %1181 = vmatmul.mubr.bf16.gmra.mrb[0].mxu0 %v1062
        %v1182 = vpop.f32.mrb[0].mxu0
        %v1183 = vadd.f32 0.0, %v1182
        %v1184 = vpop.f32.mrb[0].mxu0
        %v1185 = vpop.f32.mrb[0].mxu0
        %v1186 = vadd.f32 0.0, %v1185
        %v1187 = vpop.f32.mrb[0].mxu0
        %1188 = vmatprep.mubr.bf16.mxu0 0
        %1189 = vmatmul.mubr.bf16.gmra.mrb[0].mxu0 %v1063
        %v1190 = vpop.f32.mrb[0].mxu0
        %v1191 = vadd.f32 0.0, %v1190
        %v1192 = vpop.f32.mrb[0].mxu0
        %v1193 = vpop.f32.mrb[0].mxu0
        %v1194 = vadd.f32 0.0, %v1193
        %v1195 = vpop.f32.mrb[0].mxu0
        %1196 = vmatprep.mubr.bf16.mxu0 0
        %1197 = vmatmul.mubr.bf16.gmra.mrb[0].mxu0 %v1064
        %v1198 = vpop.f32.mrb[0].mxu0
        %v1199 = vadd.f32 0.0, %v1198
        %v1200 = vpop.f32.mrb[0].mxu0
        %v1201 = vpop.f32.mrb[0].mxu0
        %v1202 = vadd.f32 0.0, %v1201
        %v1203 = vpop.f32.mrb[0].mxu0
        %1204 = vmatprep.mubr.bf16.mxu0 0
        %1205 = vmatmul.mubr.bf16.gmra.mrb[0].mxu0 %v1065
        %v1206 = vpop.f32.mrb[0].mxu0
        %v1207 = vadd.f32 0.0, %v1206
        %v1208 = vpop.f32.mrb[0].mxu0
        %v1209 = vpop.f32.mrb[0].mxu0
        %v1210 = vadd.f32 0.0, %v1209
        %v1211 = vpop.f32.mrb[0].mxu0
        %1212 = vmatprep.mubr.bf16.mxu0 0
        %1213 = vmatmul.mubr.bf16.gmra.mrb[0].mxu0 %v1066
        %v1214 = vpop.f32.mrb[0].mxu0
        %v1215 = vadd.f32 0.0, %v1214
        %v1216 = vpop.f32.mrb[0].mxu0
        %v1217 = vpop.f32.mrb[0].mxu0
        %v1218 = vpop.f32.mrb[0].mxu0
        %1219 = vdwg.mxu0
        %v1220 = vadd.f32 %v1034, %v1167
        %v1221 = vadd.f32 %v1035, %v1170
        %v1222 = vadd.f32 %v1036, %v1175
        %v1223 = vadd.f32 %v1037, %v1178
        %v1224 = vadd.f32 %v1038, %v1183
        %v1225 = vadd.f32 %v1039, %v1186
        %v1226 = vadd.f32 %v1040, %v1191
        %v1227 = vadd.f32 %v1041, %v1194
        %v1228 = vadd.f32 %v1042, %v1199
        %v1229 = vadd.f32 %v1043, %v1202
        %v1230 = vadd.f32 %v1044, %v1207
        %v1231 = vadd.f32 %v1045, %v1210
        %v1232 = vadd.f32 %v1046, %v1215
        %v1233 = vld [vmem:[#allocation2 + $0x9] sm:$0xff]
        %v1234 = vld [vmem:[#allocation2 + $0x11] sm:$0xff]
        %v1235 = vld [vmem:[#allocation2 + $0x19] sm:$0xff]
        %v1236 = vld [vmem:[#allocation2 + $0x21] sm:$0xff]
        %v1237 = vld [vmem:[#allocation2 + $0x29] sm:$0xff]
        %v1238 = vld [vmem:[#allocation2 + $0x31] sm:$0xff]
        %v1239 = vld [vmem:[#allocation2 + $0x39] sm:$0xff]
        %v1240 = vld [vmem:[#allocation2 + $0x41] sm:$0xff]
        %v1241 = vld [vmem:[#allocation2 + $0x49] sm:$0xff]
        %v1242 = vld [vmem:[#allocation2 + $0x51] sm:$0xff]
        %v1243 = vld [vmem:[#allocation2 + $0x59] sm:$0xff]
        %v1244 = vld [vmem:[#allocation2 + $0x61] sm:$0xff]
        %v1245 = vld [vmem:[#allocation2 + $0x69] sm:$0x3]
        %v1246 = vpack.c.bf16 %v1234, %v1233
        %v1247 = vpack.c.bf16 %v1236, %v1235
        %v1248 = vpack.c.bf16 %v1238, %v1237
        %v1249 = vpack.c.bf16 %v1240, %v1239
        %v1250 = vpack.c.bf16 %v1242, %v1241
        %v1251 = vpack.c.bf16 %v1244, %v1243
        %v1252 = vpack.c.bf16 %v1245, %v1245
        %s1253 = scalar_lea.vmem %s206, 320 [#allocation4]
        %v1254 = vld [vmem:[%s1253] sm:$0xf]
        %v1255 = vld [vmem:[%s1253 + $0x4] sm:$0xf]
        %v1256 = vld [vmem:[%s1253 + $0x8] sm:$0xf]
        %v1257 = vld [vmem:[%s1253 + $0xc] sm:$0xf]
        %v1258 = vld [vmem:[%s1253 + $0x10] sm:$0xf]
        %v1259 = vld [vmem:[%s1253 + $0x14] sm:$0xf]
        %v1260 = vld [vmem:[%s1253 + $0x18] sm:$0xf]
        %v1261 = vld [vmem:[%s1253 + $0x1c] sm:$0xf]
        %v1262 = vld [vmem:[%s1253 + $0x20] sm:$0xf]
        %v1263 = vld [vmem:[%s1253 + $0x24] sm:$0xf]
        %v1264 = vld [vmem:[%s1253 + $0x28] sm:$0xf]
        %v1265 = vld [vmem:[%s1253 + $0x2c] sm:$0xf]
        %v1266 = vld [vmem:[%s1253 + $0x30] sm:$0xf]
        %v1267 = vld [vmem:[%s1253 + $0x34] sm:$0xf]
        %v1268 = vld [vmem:[%s1253 + $0x38] sm:$0xf]
        %v1269 = vld [vmem:[%s1253 + $0x3c] sm:$0xf]
        %v1286 = vunpack.c.l.b16 %v1254
        %v1287 = vunpack.c.l.b16 %v1255
        %v1288 = vunpack.c.l.b16 %v1256
        %v1289 = vunpack.c.l.b16 %v1257
        %v1290 = vunpack.c.l.b16 %v1258
        %v1291 = vunpack.c.l.b16 %v1259
        %v1292 = vunpack.c.l.b16 %v1260
        %v1293 = vunpack.c.l.b16 %v1261
        %v1294 = vunpack.c.l.b16 %v1262
        %v1295 = vunpack.c.l.b16 %v1263
        %v1296 = vunpack.c.l.b16 %v1264
        %v1297 = vunpack.c.l.b16 %v1265
        %v1298 = vunpack.c.l.b16 %v1266
        %v1299 = vunpack.c.l.b16 %v1267
        %v1300 = vunpack.c.l.b16 %v1268
        %v1301 = vunpack.c.l.b16 %v1269
        %v1302 = vpack.c.b16 %v1287, %v1286
        %v1303 = vpack.c.b16 %v1289, %v1288
        %v1304 = vpack.c.b16 %v1291, %v1290
        %v1305 = vpack.c.b16 %v1293, %v1292
        %v1306 = vpack.c.b16 %v1295, %v1294
        %v1307 = vpack.c.b16 %v1297, %v1296
        %v1308 = vpack.c.b16 %v1299, %v1298
        %v1309 = vpack.c.b16 %v1301, %v1300
        %1318 = vmatprep.subr.bf16.mxu0 0
        %1319 = vmatpush1.bf16.msra.mxu0 %v1302
        %1320 = vmatprep.subr.bf16.mxu0 0
        %1321 = vmatpush1.bf16.msra.mxu0 %v1303
        %1322 = vmatprep.subr.bf16.mxu0 0
        %1323 = vmatpush1.bf16.msra.mxu0 %v1304
        %1324 = vmatprep.subr.bf16.mxu0 0
        %1325 = vmatpush1.bf16.msra.mxu0 %v1305
        %1326 = vmatprep.subr.bf16.mxu0 0
        %1327 = vmatpush1.bf16.msra.mxu0 %v1306
        %1328 = vmatprep.subr.bf16.mxu0 0
        %1329 = vmatpush1.bf16.msra.mxu0 %v1307
        %1330 = vmatprep.subr.bf16.mxu0 0
        %1331 = vmatpush1.bf16.msra.mxu0 %v1308
        %1332 = vmatprep.subr.bf16.mxu0 0
        %1333 = vmatpush1.bf16.msra.mxu0 %v1309
        %1334 = vmatprep.subr.bf16.mxu0 0
        %1335 = vmatpush1.bf16.msra.mxu0 0
        %1336 = vmatprep.subr.bf16.mxu0 0
        %1337 = vmatpush1.bf16.msra.mxu0 0
        %1338 = vmatprep.subr.bf16.mxu0 0
        %1339 = vmatpush1.bf16.msra.mxu0 0
        %1340 = vmatprep.subr.bf16.mxu0 0
        %1341 = vmatpush1.bf16.msra.mxu0 0
        %1342 = vmatprep.subr.bf16.mxu0 0
        %1343 = vmatpush1.bf16.msra.mxu0 0
        %1344 = vmatprep.subr.bf16.mxu0 0
        %1345 = vmatpush1.bf16.msra.mxu0 0
        %1346 = vmatprep.subr.bf16.mxu0 0
        %1347 = vmatpush1.bf16.msra.mxu0 0
        %1348 = vmatprep.subr.bf16.mxu0 0
        %1349 = vmatpush1.bf16.msra.mxu0 0
        %1350 = vmatprep.mubr.bf16.mxu0 0
        %1351 = vmatmul.mubr.bf16.gmra.mrb[0].mxu0 %v1246
        %v1352 = vpop.f32.mrb[0].mxu0
        %v1353 = vadd.f32 0.0, %v1352
        %v1354 = vpop.f32.mrb[0].mxu0
        %v1355 = vpop.f32.mrb[0].mxu0
        %v1356 = vadd.f32 0.0, %v1355
        %v1357 = vpop.f32.mrb[0].mxu0
        %1358 = vmatprep.mubr.bf16.mxu0 0
        %1359 = vmatmul.mubr.bf16.gmra.mrb[0].mxu0 %v1247
        %v1360 = vpop.f32.mrb[0].mxu0
        %v1361 = vadd.f32 0.0, %v1360
        %v1362 = vpop.f32.mrb[0].mxu0
        %v1363 = vpop.f32.mrb[0].mxu0
        %v1364 = vadd.f32 0.0, %v1363
        %v1365 = vpop.f32.mrb[0].mxu0
        %1366 = vmatprep.mubr.bf16.mxu0 0
        %1367 = vmatmul.mubr.bf16.gmra.mrb[0].mxu0 %v1248
        %v1368 = vpop.f32.mrb[0].mxu0
        %v1369 = vadd.f32 0.0, %v1368
        %v1370 = vpop.f32.mrb[0].mxu0
        %v1371 = vpop.f32.mrb[0].mxu0
        %v1372 = vadd.f32 0.0, %v1371
        %v1373 = vpop.f32.mrb[0].mxu0
        %1374 = vmatprep.mubr.bf16.mxu0 0
        %1375 = vmatmul.mubr.bf16.gmra.mrb[0].mxu0 %v1249
        %v1376 = vpop.f32.mrb[0].mxu0
        %v1377 = vadd.f32 0.0, %v1376
        %v1378 = vpop.f32.mrb[0].mxu0
        %v1379 = vpop.f32.mrb[0].mxu0
        %v1380 = vadd.f32 0.0, %v1379
        %v1381 = vpop.f32.mrb[0].mxu0
        %1382 = vmatprep.mubr.bf16.mxu0 0
        %1383 = vmatmul.mubr.bf16.gmra.mrb[0].mxu0 %v1250
        %v1384 = vpop.f32.mrb[0].mxu0
        %v1385 = vadd.f32 0.0, %v1384
        %v1386 = vpop.f32.mrb[0].mxu0
        %v1387 = vpop.f32.mrb[0].mxu0
        %v1388 = vadd.f32 0.0, %v1387
        %v1389 = vpop.f32.mrb[0].mxu0
        %1390 = vmatprep.mubr.bf16.mxu0 0
        %1391 = vmatmul.mubr.bf16.gmra.mrb[0].mxu0 %v1251
        %v1392 = vpop.f32.mrb[0].mxu0
        %v1393 = vadd.f32 0.0, %v1392
        %v1394 = vpop.f32.mrb[0].mxu0
        %v1395 = vpop.f32.mrb[0].mxu0
        %v1396 = vadd.f32 0.0, %v1395
        %v1397 = vpop.f32.mrb[0].mxu0
        %1398 = vmatprep.mubr.bf16.mxu0 0
        %1399 = vmatmul.mubr.bf16.gmra.mrb[0].mxu0 %v1252
        %v1400 = vpop.f32.mrb[0].mxu0
        %v1401 = vadd.f32 0.0, %v1400
        %v1402 = vpop.f32.mrb[0].mxu0
        %v1403 = vpop.f32.mrb[0].mxu0
        %v1404 = vpop.f32.mrb[0].mxu0
        %1405 = vdwg.mxu0
        %v1406 = vadd.f32 %v1220, %v1353
        %v1407 = vadd.f32 %v1221, %v1356
        %v1408 = vadd.f32 %v1222, %v1361
        %v1409 = vadd.f32 %v1223, %v1364
        %v1410 = vadd.f32 %v1224, %v1369
        %v1411 = vadd.f32 %v1225, %v1372
        %v1412 = vadd.f32 %v1226, %v1377
        %v1413 = vadd.f32 %v1227, %v1380
        %v1414 = vadd.f32 %v1228, %v1385
        %v1415 = vadd.f32 %v1229, %v1388
        %v1416 = vadd.f32 %v1230, %v1393
        %v1417 = vadd.f32 %v1231, %v1396
        %v1418 = vadd.f32 %v1232, %v1401
        %v1419 = vld [vmem:[#allocation2 + $0xe] sm:$0xff]
        %v1420 = vld [vmem:[#allocation2 + $0x16] sm:$0xff]
        %v1421 = vld [vmem:[#allocation2 + $0x1e] sm:$0xff]
        %v1422 = vld [vmem:[#allocation2 + $0x26] sm:$0xff]
        %v1423 = vld [vmem:[#allocation2 + $0x2e] sm:$0xff]
        %v1424 = vld [vmem:[#allocation2 + $0x36] sm:$0xff]
        %v1425 = vld [vmem:[#allocation2 + $0x3e] sm:$0xff]
        %v1426 = vld [vmem:[#allocation2 + $0x46] sm:$0xff]
        %v1427 = vld [vmem:[#allocation2 + $0x4e] sm:$0xff]
        %v1428 = vld [vmem:[#allocation2 + $0x56] sm:$0xff]
        %v1429 = vld [vmem:[#allocation2 + $0x5e] sm:$0xff]
        %v1430 = vld [vmem:[#allocation2 + $0x66] sm:$0xff]
        %v1431 = vld [vmem:[#allocation2 + $0x6e] sm:$0x3]
        %v1432 = vpack.c.bf16 %v1420, %v1419
        %v1433 = vpack.c.bf16 %v1422, %v1421
        %v1434 = vpack.c.bf16 %v1424, %v1423
        %v1435 = vpack.c.bf16 %v1426, %v1425
        %v1436 = vpack.c.bf16 %v1428, %v1427
        %v1437 = vpack.c.bf16 %v1430, %v1429
        %v1438 = vpack.c.bf16 %v1431, %v1431
        %s1439 = scalar_lea.vmem %s206, 384 [#allocation4]
        %v1440 = vld [vmem:[%s1439] sm:$0xf]
        %v1441 = vld [vmem:[%s1439 + $0x4] sm:$0xf]
        %v1442 = vld [vmem:[%s1439 + $0x8] sm:$0xf]
        %v1443 = vld [vmem:[%s1439 + $0xc] sm:$0xf]
        %v1444 = vld [vmem:[%s1439 + $0x10] sm:$0xf]
        %v1445 = vld [vmem:[%s1439 + $0x14] sm:$0xf]
        %v1446 = vld [vmem:[%s1439 + $0x18] sm:$0xf]
        %v1447 = vld [vmem:[%s1439 + $0x1c] sm:$0xf]
        %v1448 = vld [vmem:[%s1439 + $0x20] sm:$0xf]
        %v1449 = vld [vmem:[%s1439 + $0x24] sm:$0xf]
        %v1450 = vld [vmem:[%s1439 + $0x28] sm:$0xf]
        %v1451 = vld [vmem:[%s1439 + $0x2c] sm:$0xf]
        %v1452 = vld [vmem:[%s1439 + $0x30] sm:$0xf]
        %v1453 = vld [vmem:[%s1439 + $0x34] sm:$0xf]
        %v1454 = vld [vmem:[%s1439 + $0x38] sm:$0xf]
        %v1455 = vld [vmem:[%s1439 + $0x3c] sm:$0xf]
        %v1472 = vunpack.c.l.b16 %v1440
        %v1473 = vunpack.c.l.b16 %v1441
        %v1474 = vunpack.c.l.b16 %v1442
        %v1475 = vunpack.c.l.b16 %v1443
        %v1476 = vunpack.c.l.b16 %v1444
        %v1477 = vunpack.c.l.b16 %v1445
        %v1478 = vunpack.c.l.b16 %v1446
        %v1479 = vunpack.c.l.b16 %v1447
        %v1480 = vunpack.c.l.b16 %v1448
        %v1481 = vunpack.c.l.b16 %v1449
        %v1482 = vunpack.c.l.b16 %v1450
        %v1483 = vunpack.c.l.b16 %v1451
        %v1484 = vunpack.c.l.b16 %v1452
        %v1485 = vunpack.c.l.b16 %v1453
        %v1486 = vunpack.c.l.b16 %v1454
        %v1487 = vunpack.c.l.b16 %v1455
        %v1488 = vpack.c.b16 %v1473, %v1472
        %v1489 = vpack.c.b16 %v1475, %v1474
        %v1490 = vpack.c.b16 %v1477, %v1476
        %v1491 = vpack.c.b16 %v1479, %v1478
        %v1492 = vpack.c.b16 %v1481, %v1480
        %v1493 = vpack.c.b16 %v1483, %v1482
        %v1494 = vpack.c.b16 %v1485, %v1484
        %v1495 = vpack.c.b16 %v1487, %v1486
        %1504 = vmatprep.subr.bf16.mxu0 0
        %1505 = vmatpush1.bf16.msra.mxu0 %v1488
        %1506 = vmatprep.subr.bf16.mxu0 0
        %1507 = vmatpush1.bf16.msra.mxu0 %v1489
        %1508 = vmatprep.subr.bf16.mxu0 0
        %1509 = vmatpush1.bf16.msra.mxu0 %v1490
        %1510 = vmatprep.subr.bf16.mxu0 0
        %1511 = vmatpush1.bf16.msra.mxu0 %v1491
        %1512 = vmatprep.subr.bf16.mxu0 0
        %1513 = vmatpush1.bf16.msra.mxu0 %v1492
        %1514 = vmatprep.subr.bf16.mxu0 0
        %1515 = vmatpush1.bf16.msra.mxu0 %v1493
        %1516 = vmatprep.subr.bf16.mxu0 0
        %1517 = vmatpush1.bf16.msra.mxu0 %v1494
        %1518 = vmatprep.subr.bf16.mxu0 0
        %1519 = vmatpush1.bf16.msra.mxu0 %v1495
        %1520 = vmatprep.subr.bf16.mxu0 0
        %1521 = vmatpush1.bf16.msra.mxu0 0
        %1522 = vmatprep.subr.bf16.mxu0 0
        %1523 = vmatpush1.bf16.msra.mxu0 0
        %1524 = vmatprep.subr.bf16.mxu0 0
        %1525 = vmatpush1.bf16.msra.mxu0 0
        %1526 = vmatprep.subr.bf16.mxu0 0
        %1527 = vmatpush1.bf16.msra.mxu0 0
        %1528 = vmatprep.subr.bf16.mxu0 0
        %1529 = vmatpush1.bf16.msra.mxu0 0
        %1530 = vmatprep.subr.bf16.mxu0 0
        %1531 = vmatpush1.bf16.msra.mxu0 0
        %1532 = vmatprep.subr.bf16.mxu0 0
        %1533 = vmatpush1.bf16.msra.mxu0 0
        %1534 = vmatprep.subr.bf16.mxu0 0
        %1535 = vmatpush1.bf16.msra.mxu0 0
        %1536 = vmatprep.mubr.bf16.mxu0 0
        %1537 = vmatmul.mubr.bf16.gmra.mrb[0].mxu0 %v1432
        %v1538 = vpop.f32.mrb[0].mxu0
        %v1539 = vadd.f32 0.0, %v1538
        %v1540 = vpop.f32.mrb[0].mxu0
        %v1541 = vpop.f32.mrb[0].mxu0
        %v1542 = vadd.f32 0.0, %v1541
        %v1543 = vpop.f32.mrb[0].mxu0
        %1544 = vmatprep.mubr.bf16.mxu0 0
        %1545 = vmatmul.mubr.bf16.gmra.mrb[0].mxu0 %v1433
        %v1546 = vpop.f32.mrb[0].mxu0
        %v1547 = vadd.f32 0.0, %v1546
        %v1548 = vpop.f32.mrb[0].mxu0
        %v1549 = vpop.f32.mrb[0].mxu0
        %v1550 = vadd.f32 0.0, %v1549
        %v1551 = vpop.f32.mrb[0].mxu0
        %1552 = vmatprep.mubr.bf16.mxu0 0
        %1553 = vmatmul.mubr.bf16.gmra.mrb[0].mxu0 %v1434
        %v1554 = vpop.f32.mrb[0].mxu0
        %v1555 = vadd.f32 0.0, %v1554
        %v1556 = vpop.f32.mrb[0].mxu0
        %v1557 = vpop.f32.mrb[0].mxu0
        %v1558 = vadd.f32 0.0, %v1557
        %v1559 = vpop.f32.mrb[0].mxu0
        %1560 = vmatprep.mubr.bf16.mxu0 0
        %1561 = vmatmul.mubr.bf16.gmra.mrb[0].mxu0 %v1435
        %v1562 = vpop.f32.mrb[0].mxu0
        %v1563 = vadd.f32 0.0, %v1562
        %v1564 = vpop.f32.mrb[0].mxu0
        %v1565 = vpop.f32.mrb[0].mxu0
        %v1566 = vadd.f32 0.0, %v1565
        %v1567 = vpop.f32.mrb[0].mxu0
        %1568 = vmatprep.mubr.bf16.mxu0 0
        %1569 = vmatmul.mubr.bf16.gmra.mrb[0].mxu0 %v1436
        %v1570 = vpop.f32.mrb[0].mxu0
        %v1571 = vadd.f32 0.0, %v1570
        %v1572 = vpop.f32.mrb[0].mxu0
        %v1573 = vpop.f32.mrb[0].mxu0
        %v1574 = vadd.f32 0.0, %v1573
        %v1575 = vpop.f32.mrb[0].mxu0
        %1576 = vmatprep.mubr.bf16.mxu0 0
        %1577 = vmatmul.mubr.bf16.gmra.mrb[0].mxu0 %v1437
        %v1578 = vpop.f32.mrb[0].mxu0
        %v1579 = vadd.f32 0.0, %v1578
        %v1580 = vpop.f32.mrb[0].mxu0
        %v1581 = vpop.f32.mrb[0].mxu0
        %v1582 = vadd.f32 0.0, %v1581
        %v1583 = vpop.f32.mrb[0].mxu0
        %1584 = vmatprep.mubr.bf16.mxu0 0
        %1585 = vmatmul.mubr.bf16.gmra.mrb[0].mxu0 %v1438
        %v1586 = vpop.f32.mrb[0].mxu0
        %v1587 = vadd.f32 0.0, %v1586
        %v1588 = vpop.f32.mrb[0].mxu0
        %v1589 = vpop.f32.mrb[0].mxu0
        %v1590 = vpop.f32.mrb[0].mxu0
        %1591 = vdwg.mxu0
        %v1592 = vadd.f32 %v1406, %v1539
        %v1593 = vadd.f32 %v1407, %v1542
        %v1594 = vadd.f32 %v1408, %v1547
        %v1595 = vadd.f32 %v1409, %v1550
        %v1596 = vadd.f32 %v1410, %v1555
        %v1597 = vadd.f32 %v1411, %v1558
        %v1598 = vadd.f32 %v1412, %v1563
        %v1599 = vadd.f32 %v1413, %v1566
        %v1600 = vadd.f32 %v1414, %v1571
        %v1601 = vadd.f32 %v1415, %v1574
        %v1602 = vadd.f32 %v1416, %v1579
        %v1603 = vadd.f32 %v1417, %v1582
        %v1604 = vadd.f32 %v1418, %v1587
        %v1605 = vld [vmem:[#allocation2 + $0xf] sm:$0xff]
        %v1606 = vld [vmem:[#allocation2 + $0x17] sm:$0xff]
        %v1607 = vld [vmem:[#allocation2 + $0x1f] sm:$0xff]
        %v1608 = vld [vmem:[#allocation2 + $0x27] sm:$0xff]
        %v1609 = vld [vmem:[#allocation2 + $0x2f] sm:$0xff]
        %v1610 = vld [vmem:[#allocation2 + $0x37] sm:$0xff]
        %v1611 = vld [vmem:[#allocation2 + $0x3f] sm:$0xff]
        %v1612 = vld [vmem:[#allocation2 + $0x47] sm:$0xff]
        %v1613 = vld [vmem:[#allocation2 + $0x4f] sm:$0xff]
        %v1614 = vld [vmem:[#allocation2 + $0x57] sm:$0xff]
        %v1615 = vld [vmem:[#allocation2 + $0x5f] sm:$0xff]
        %v1616 = vld [vmem:[#allocation2 + $0x67] sm:$0xff]
        %v1617 = vld [vmem:[#allocation2 + $0x6f] sm:$0x3]
        %v1618 = vpack.c.bf16 %v1606, %v1605
        %v1619 = vpack.c.bf16 %v1608, %v1607
        %v1620 = vpack.c.bf16 %v1610, %v1609
        %v1621 = vpack.c.bf16 %v1612, %v1611
        %v1622 = vpack.c.bf16 %v1614, %v1613
        %v1623 = vpack.c.bf16 %v1616, %v1615
        %v1624 = vpack.c.bf16 %v1617, %v1617
        %s1625 = scalar_lea.vmem %s206, 448 [#allocation4]
        %v1626 = vld [vmem:[%s1625] sm:$0xf]
        %v1627 = vld [vmem:[%s1625 + $0x4] sm:$0xf]
        %v1628 = vld [vmem:[%s1625 + $0x8] sm:$0xf]
        %v1629 = vld [vmem:[%s1625 + $0xc] sm:$0xf]
        %v1630 = vld [vmem:[%s1625 + $0x10] sm:$0xf]
        %v1631 = vld [vmem:[%s1625 + $0x14] sm:$0xf]
        %v1632 = vld [vmem:[%s1625 + $0x18] sm:$0xf]
        %v1633 = vld [vmem:[%s1625 + $0x1c] sm:$0xf]
        %v1634 = vld [vmem:[%s1625 + $0x20] sm:$0xf]
        %v1635 = vld [vmem:[%s1625 + $0x24] sm:$0xf]
        %v1636 = vld [vmem:[%s1625 + $0x28] sm:$0xf]
        %v1637 = vld [vmem:[%s1625 + $0x2c] sm:$0xf]
        %v1638 = vld [vmem:[%s1625 + $0x30] sm:$0xf]
        %v1639 = vld [vmem:[%s1625 + $0x34] sm:$0xf]
        %v1640 = vld [vmem:[%s1625 + $0x38] sm:$0xf]
        %v1641 = vld [vmem:[%s1625 + $0x3c] sm:$0xf]
        %v1658 = vunpack.c.l.b16 %v1626
        %v1659 = vunpack.c.l.b16 %v1627
        %v1660 = vunpack.c.l.b16 %v1628
        %v1661 = vunpack.c.l.b16 %v1629
        %v1662 = vunpack.c.l.b16 %v1630
        %v1663 = vunpack.c.l.b16 %v1631
        %v1664 = vunpack.c.l.b16 %v1632
        %v1665 = vunpack.c.l.b16 %v1633
        %v1666 = vunpack.c.l.b16 %v1634
        %v1667 = vunpack.c.l.b16 %v1635
        %v1668 = vunpack.c.l.b16 %v1636
        %v1669 = vunpack.c.l.b16 %v1637
        %v1670 = vunpack.c.l.b16 %v1638
        %v1671 = vunpack.c.l.b16 %v1639
        %v1672 = vunpack.c.l.b16 %v1640
        %v1673 = vunpack.c.l.b16 %v1641
        %v1674 = vpack.c.b16 %v1659, %v1658
        %v1675 = vpack.c.b16 %v1661, %v1660
        %v1676 = vpack.c.b16 %v1663, %v1662
        %v1677 = vpack.c.b16 %v1665, %v1664
        %v1678 = vpack.c.b16 %v1667, %v1666
        %v1679 = vpack.c.b16 %v1669, %v1668
        %v1680 = vpack.c.b16 %v1671, %v1670
        %v1681 = vpack.c.b16 %v1673, %v1672
        %1690 = vmatprep.subr.bf16.mxu0 0
        %1691 = vmatpush1.bf16.msra.mxu0 %v1674
        %1692 = vmatprep.subr.bf16.mxu0 0
        %1693 = vmatpush1.bf16.msra.mxu0 %v1675
        %1694 = vmatprep.subr.bf16.mxu0 0
        %1695 = vmatpush1.bf16.msra.mxu0 %v1676
        %1696 = vmatprep.subr.bf16.mxu0 0
        %1697 = vmatpush1.bf16.msra.mxu0 %v1677
        %1698 = vmatprep.subr.bf16.mxu0 0
        %1699 = vmatpush1.bf16.msra.mxu0 %v1678
        %1700 = vmatprep.subr.bf16.mxu0 0
        %1701 = vmatpush1.bf16.msra.mxu0 %v1679
        %1702 = vmatprep.subr.bf16.mxu0 0
        %1703 = vmatpush1.bf16.msra.mxu0 %v1680
        %1704 = vmatprep.subr.bf16.mxu0 0
        %1705 = vmatpush1.bf16.msra.mxu0 %v1681
        %1706 = vmatprep.subr.bf16.mxu0 0
        %1707 = vmatpush1.bf16.msra.mxu0 0
        %1708 = vmatprep.subr.bf16.mxu0 0
        %1709 = vmatpush1.bf16.msra.mxu0 0
        %1710 = vmatprep.subr.bf16.mxu0 0
        %1711 = vmatpush1.bf16.msra.mxu0 0
        %1712 = vmatprep.subr.bf16.mxu0 0
        %1713 = vmatpush1.bf16.msra.mxu0 0
        %1714 = vmatprep.subr.bf16.mxu0 0
        %1715 = vmatpush1.bf16.msra.mxu0 0
        %1716 = vmatprep.subr.bf16.mxu0 0
        %1717 = vmatpush1.bf16.msra.mxu0 0
        %1718 = vmatprep.subr.bf16.mxu0 0
        %1719 = vmatpush1.bf16.msra.mxu0 0
        %1720 = vmatprep.subr.bf16.mxu0 0
        %1721 = vmatpush1.bf16.msra.mxu0 0
        %1722 = vmatprep.mubr.bf16.mxu0 0
        %1723 = vmatmul.mubr.bf16.gmra.mrb[0].mxu0 %v1618
        %v1724 = vpop.f32.mrb[0].mxu0
        %v1725 = vadd.f32 0.0, %v1724
        %v1726 = vpop.f32.mrb[0].mxu0
        %v1727 = vpop.f32.mrb[0].mxu0
        %v1728 = vadd.f32 0.0, %v1727
        %v1729 = vpop.f32.mrb[0].mxu0
        %1730 = vmatprep.mubr.bf16.mxu0 0
        %1731 = vmatmul.mubr.bf16.gmra.mrb[0].mxu0 %v1619
        %v1732 = vpop.f32.mrb[0].mxu0
        %v1733 = vadd.f32 0.0, %v1732
        %v1734 = vpop.f32.mrb[0].mxu0
        %v1735 = vpop.f32.mrb[0].mxu0
        %v1736 = vadd.f32 0.0, %v1735
        %v1737 = vpop.f32.mrb[0].mxu0
        %1738 = vmatprep.mubr.bf16.mxu0 0
        %1739 = vmatmul.mubr.bf16.gmra.mrb[0].mxu0 %v1620
        %v1740 = vpop.f32.mrb[0].mxu0
        %v1741 = vadd.f32 0.0, %v1740
        %v1742 = vpop.f32.mrb[0].mxu0
        %v1743 = vpop.f32.mrb[0].mxu0
        %v1744 = vadd.f32 0.0, %v1743
        %v1745 = vpop.f32.mrb[0].mxu0
        %1746 = vmatprep.mubr.bf16.mxu0 0
        %1747 = vmatmul.mubr.bf16.gmra.mrb[0].mxu0 %v1621
        %v1748 = vpop.f32.mrb[0].mxu0
        %v1749 = vadd.f32 0.0, %v1748
        %v1750 = vpop.f32.mrb[0].mxu0
        %v1751 = vpop.f32.mrb[0].mxu0
        %v1752 = vadd.f32 0.0, %v1751
        %v1753 = vpop.f32.mrb[0].mxu0
        %1754 = vmatprep.mubr.bf16.mxu0 0
        %1755 = vmatmul.mubr.bf16.gmra.mrb[0].mxu0 %v1622
        %v1756 = vpop.f32.mrb[0].mxu0
        %v1757 = vadd.f32 0.0, %v1756
        %v1758 = vpop.f32.mrb[0].mxu0
        %v1759 = vpop.f32.mrb[0].mxu0
        %v1760 = vadd.f32 0.0, %v1759
        %v1761 = vpop.f32.mrb[0].mxu0
        %1762 = vmatprep.mubr.bf16.mxu0 0
        %1763 = vmatmul.mubr.bf16.gmra.mrb[0].mxu0 %v1623
        %v1764 = vpop.f32.mrb[0].mxu0
        %v1765 = vadd.f32 0.0, %v1764
        %v1766 = vpop.f32.mrb[0].mxu0
        %v1767 = vpop.f32.mrb[0].mxu0
        %v1768 = vadd.f32 0.0, %v1767
        %v1769 = vpop.f32.mrb[0].mxu0
        %1770 = vmatprep.mubr.bf16.mxu0 0
        %1771 = vmatmul.mubr.bf16.gmra.mrb[0].mxu0 %v1624
        %v1772 = vpop.f32.mrb[0].mxu0
        %v1773 = vadd.f32 0.0, %v1772
        %v1774 = vpop.f32.mrb[0].mxu0
        %v1775 = vpop.f32.mrb[0].mxu0
        %v1776 = vpop.f32.mrb[0].mxu0
        %1777 = vdwg.mxu0
        %v1778 = vadd.f32 %v1592, %v1725
        %v1779 = vadd.f32 %v1593, %v1728
        %v1780 = vadd.f32 %v1594, %v1733
        %v1781 = vadd.f32 %v1595, %v1736
        %v1782 = vadd.f32 %v1596, %v1741
        %v1783 = vadd.f32 %v1597, %v1744
        %v1784 = vadd.f32 %v1598, %v1749
        %v1785 = vadd.f32 %v1599, %v1752
        %v1786 = vadd.f32 %v1600, %v1757
        %v1787 = vadd.f32 %v1601, %v1760
        %v1788 = vadd.f32 %v1602, %v1765
        %v1789 = vadd.f32 %v1603, %v1768
        %v1790 = vadd.f32 %v1604, %v1773
        %v1791 = vld [vmem:[#allocation2 + $0x10] sm:$0xff]
        %v1792 = vld [vmem:[#allocation2 + $0x18] sm:$0xff]
        %v1793 = vld [vmem:[#allocation2 + $0x20] sm:$0xff]
        %v1794 = vld [vmem:[#allocation2 + $0x28] sm:$0xff]
        %v1795 = vld [vmem:[#allocation2 + $0x30] sm:$0xff]
        %v1796 = vld [vmem:[#allocation2 + $0x38] sm:$0xff]
        %v1797 = vld [vmem:[#allocation2 + $0x40] sm:$0xff]
        %v1798 = vld [vmem:[#allocation2 + $0x48] sm:$0xff]
        %v1799 = vld [vmem:[#allocation2 + $0x50] sm:$0xff]
        %v1800 = vld [vmem:[#allocation2 + $0x58] sm:$0xff]
        %v1801 = vld [vmem:[#allocation2 + $0x60] sm:$0xff]
        %v1802 = vld [vmem:[#allocation2 + $0x68] sm:$0xff]
        %v1803 = vld [vmem:[#allocation2 + $0x70] sm:$0x3]
        %v1804 = vpack.c.bf16 %v1792, %v1791
        %v1805 = vpack.c.bf16 %v1794, %v1793
        %v1806 = vpack.c.bf16 %v1796, %v1795
        %v1807 = vpack.c.bf16 %v1798, %v1797
        %v1808 = vpack.c.bf16 %v1800, %v1799
        %v1809 = vpack.c.bf16 %v1802, %v1801
        %v1810 = vpack.c.bf16 %v1803, %v1803
        %s1811 = scalar_lea.vmem %s206, 512 [#allocation4]
        %v1812 = vld [vmem:[%s1811] sm:$0xf]
        %v1813 = vld [vmem:[%s1811 + $0x4] sm:$0xf]
        %v1814 = vld [vmem:[%s1811 + $0x8] sm:$0xf]
        %v1815 = vld [vmem:[%s1811 + $0xc] sm:$0xf]
        %v1816 = vld [vmem:[%s1811 + $0x10] sm:$0xf]
        %v1817 = vld [vmem:[%s1811 + $0x14] sm:$0xf]
        %v1818 = vld [vmem:[%s1811 + $0x18] sm:$0xf]
        %v1819 = vld [vmem:[%s1811 + $0x1c] sm:$0xf]
        %v1820 = vld [vmem:[%s1811 + $0x20] sm:$0xf]
        %v1821 = vld [vmem:[%s1811 + $0x24] sm:$0xf]
        %v1822 = vld [vmem:[%s1811 + $0x28] sm:$0xf]
        %v1823 = vld [vmem:[%s1811 + $0x2c] sm:$0xf]
        %v1824 = vld [vmem:[%s1811 + $0x30] sm:$0xf]
        %v1825 = vld [vmem:[%s1811 + $0x34] sm:$0xf]
        %v1826 = vld [vmem:[%s1811 + $0x38] sm:$0xf]
        %v1827 = vld [vmem:[%s1811 + $0x3c] sm:$0xf]
        %v1844 = vunpack.c.l.b16 %v1812
        %v1845 = vunpack.c.l.b16 %v1813
        %v1846 = vunpack.c.l.b16 %v1814
        %v1847 = vunpack.c.l.b16 %v1815
        %v1848 = vunpack.c.l.b16 %v1816
        %v1849 = vunpack.c.l.b16 %v1817
        %v1850 = vunpack.c.l.b16 %v1818
        %v1851 = vunpack.c.l.b16 %v1819
        %v1852 = vunpack.c.l.b16 %v1820
        %v1853 = vunpack.c.l.b16 %v1821
        %v1854 = vunpack.c.l.b16 %v1822
        %v1855 = vunpack.c.l.b16 %v1823
        %v1856 = vunpack.c.l.b16 %v1824
        %v1857 = vunpack.c.l.b16 %v1825
        %v1858 = vunpack.c.l.b16 %v1826
        %v1859 = vunpack.c.l.b16 %v1827
        %v1860 = vpack.c.b16 %v1845, %v1844
        %v1861 = vpack.c.b16 %v1847, %v1846
        %v1862 = vpack.c.b16 %v1849, %v1848
        %v1863 = vpack.c.b16 %v1851, %v1850
        %v1864 = vpack.c.b16 %v1853, %v1852
        %v1865 = vpack.c.b16 %v1855, %v1854
        %v1866 = vpack.c.b16 %v1857, %v1856
        %v1867 = vpack.c.b16 %v1859, %v1858
        %1876 = vmatprep.subr.bf16.mxu0 0
        %1877 = vmatpush1.bf16.msra.mxu0 %v1860
        %1878 = vmatprep.subr.bf16.mxu0 0
        %1879 = vmatpush1.bf16.msra.mxu0 %v1861
        %1880 = vmatprep.subr.bf16.mxu0 0
        %1881 = vmatpush1.bf16.msra.mxu0 %v1862
        %1882 = vmatprep.subr.bf16.mxu0 0
        %1883 = vmatpush1.bf16.msra.mxu0 %v1863
        %1884 = vmatprep.subr.bf16.mxu0 0
        %1885 = vmatpush1.bf16.msra.mxu0 %v1864
        %1886 = vmatprep.subr.bf16.mxu0 0
        %1887 = vmatpush1.bf16.msra.mxu0 %v1865
        %1888 = vmatprep.subr.bf16.mxu0 0
        %1889 = vmatpush1.bf16.msra.mxu0 %v1866
        %1890 = vmatprep.subr.bf16.mxu0 0
        %1891 = vmatpush1.bf16.msra.mxu0 %v1867
        %1892 = vmatprep.subr.bf16.mxu0 0
        %1893 = vmatpush1.bf16.msra.mxu0 0
        %1894 = vmatprep.subr.bf16.mxu0 0
        %1895 = vmatpush1.bf16.msra.mxu0 0
        %1896 = vmatprep.subr.bf16.mxu0 0
        %1897 = vmatpush1.bf16.msra.mxu0 0
        %1898 = vmatprep.subr.bf16.mxu0 0
        %1899 = vmatpush1.bf16.msra.mxu0 0
        %1900 = vmatprep.subr.bf16.mxu0 0
        %1901 = vmatpush1.bf16.msra.mxu0 0
        %1902 = vmatprep.subr.bf16.mxu0 0
        %1903 = vmatpush1.bf16.msra.mxu0 0
        %1904 = vmatprep.subr.bf16.mxu0 0
        %1905 = vmatpush1.bf16.msra.mxu0 0
        %1906 = vmatprep.subr.bf16.mxu0 0
        %1907 = vmatpush1.bf16.msra.mxu0 0
        %1908 = vmatprep.mubr.bf16.mxu0 0
        %1909 = vmatmul.mubr.bf16.gmra.mrb[0].mxu0 %v1804
        %v1910 = vpop.f32.mrb[0].mxu0
        %v1911 = vadd.f32 0.0, %v1910
        %v1912 = vpop.f32.mrb[0].mxu0
        %v1913 = vpop.f32.mrb[0].mxu0
        %v1914 = vadd.f32 0.0, %v1913
        %v1915 = vpop.f32.mrb[0].mxu0
        %1916 = vmatprep.mubr.bf16.mxu0 0
        %1917 = vmatmul.mubr.bf16.gmra.mrb[0].mxu0 %v1805
        %v1918 = vpop.f32.mrb[0].mxu0
        %v1919 = vadd.f32 0.0, %v1918
        %v1920 = vpop.f32.mrb[0].mxu0
        %v1921 = vpop.f32.mrb[0].mxu0
        %v1922 = vadd.f32 0.0, %v1921
        %v1923 = vpop.f32.mrb[0].mxu0
        %1924 = vmatprep.mubr.bf16.mxu0 0
        %1925 = vmatmul.mubr.bf16.gmra.mrb[0].mxu0 %v1806
        %v1926 = vpop.f32.mrb[0].mxu0
        %v1927 = vadd.f32 0.0, %v1926
        %v1928 = vpop.f32.mrb[0].mxu0
        %v1929 = vpop.f32.mrb[0].mxu0
        %v1930 = vadd.f32 0.0, %v1929
        %v1931 = vpop.f32.mrb[0].mxu0
        %1932 = vmatprep.mubr.bf16.mxu0 0
        %1933 = vmatmul.mubr.bf16.gmra.mrb[0].mxu0 %v1807
        %v1934 = vpop.f32.mrb[0].mxu0
        %v1935 = vadd.f32 0.0, %v1934
        %v1936 = vpop.f32.mrb[0].mxu0
        %v1937 = vpop.f32.mrb[0].mxu0
        %v1938 = vadd.f32 0.0, %v1937
        %v1939 = vpop.f32.mrb[0].mxu0
        %1940 = vmatprep.mubr.bf16.mxu0 0
        %1941 = vmatmul.mubr.bf16.gmra.mrb[0].mxu0 %v1808
        %v1942 = vpop.f32.mrb[0].mxu0
        %v1943 = vadd.f32 0.0, %v1942
        %v1944 = vpop.f32.mrb[0].mxu0
        %v1945 = vpop.f32.mrb[0].mxu0
        %v1946 = vadd.f32 0.0, %v1945
        %v1947 = vpop.f32.mrb[0].mxu0
        %1948 = vmatprep.mubr.bf16.mxu0 0
        %1949 = vmatmul.mubr.bf16.gmra.mrb[0].mxu0 %v1809
        %v1950 = vpop.f32.mrb[0].mxu0
        %v1951 = vadd.f32 0.0, %v1950
        %v1952 = vpop.f32.mrb[0].mxu0
        %v1953 = vpop.f32.mrb[0].mxu0
        %v1954 = vadd.f32 0.0, %v1953
        %v1955 = vpop.f32.mrb[0].mxu0
        %1956 = vmatprep.mubr.bf16.mxu0 0
        %1957 = vmatmul.mubr.bf16.gmra.mrb[0].mxu0 %v1810
        %v1958 = vpop.f32.mrb[0].mxu0
        %v1959 = vadd.f32 0.0, %v1958
        %v1960 = vpop.f32.mrb[0].mxu0
        %v1961 = vpop.f32.mrb[0].mxu0
        %v1962 = vpop.f32.mrb[0].mxu0
        %1963 = vdwg.mxu0
        %v1964 = vadd.f32 %v1778, %v1911
        %v1965 = vadd.f32 %v1779, %v1914
        %v1966 = vadd.f32 %v1780, %v1919
        %v1967 = vadd.f32 %v1781, %v1922
        %v1968 = vadd.f32 %v1782, %v1927
        %v1969 = vadd.f32 %v1783, %v1930
        %v1970 = vadd.f32 %v1784, %v1935
        %v1971 = vadd.f32 %v1785, %v1938
        %v1972 = vadd.f32 %v1786, %v1943
        %v1973 = vadd.f32 %v1787, %v1946
        %v1974 = vadd.f32 %v1788, %v1951
        %v1975 = vadd.f32 %v1789, %v1954
        %v1976 = vadd.f32 %v1790, %v1959
        %v1977 = vld [vmem:[%s215] sm:$0x1]
        %v1978 = vld [vmem:[%s215 + $0x1] sm:$0x1]
        %v1979 = vlaneseq
        %v1980 = vshrl.u32 %v1979, 7
        %v1981 = vsub.s32 0, %v1980
        %v1982 = vrot.slane %v1977, %v1981
        %v1983 = vmul.f32 %v1964, %v1982
        %v1984 = vmul.f32 %v1965, %v1982
        %v1985 = vmul.f32 %v1966, %v1982
        %v1986 = vmul.f32 %v1967, %v1982
        %v1987 = vmul.f32 %v1968, %v1982
        %v1988 = vmul.f32 %v1969, %v1982
        %v1989 = vmul.f32 %v1970, %v1982
        %v1990 = vmul.f32 %v1971, %v1982
        %v1991 = vmul.f32 %v1972, %v1982
        %v1992 = vmul.f32 %v1973, %v1982
        %v1993 = vmul.f32 %v1974, %v1982
        %v1994 = vmul.f32 %v1975, %v1982
        %v1995 = vmul.f32 %v1976, %v1982
        %v1996 = vlaneseq
        %v1997 = vshrl.u32 %v1996, 7
        %v1998 = vsub.s32 0, %v1997
        %v1999 = vrot.slane %v1978, %v1998
        %v2000 = vadd.f32 %v1983, %v1999
        %v2001 = vadd.f32 %v1984, %v1999
        %v2002 = vadd.f32 %v1985, %v1999
        %v2003 = vadd.f32 %v1986, %v1999
        %v2004 = vadd.f32 %v1987, %v1999
        %v2005 = vadd.f32 %v1988, %v1999
        %v2006 = vadd.f32 %v1989, %v1999
        %v2007 = vadd.f32 %v1990, %v1999
        %v2008 = vadd.f32 %v1991, %v1999
        %v2009 = vadd.f32 %v1992, %v1999
        %v2010 = vadd.f32 %v1993, %v1999
        %v2011 = vadd.f32 %v1994, %v1999
        %v2012 = vadd.f32 %v1995, %v1999
        %p2013 = scmp.gt.s32.totalorder %s21, 0
        %p2014 = scmp.eq.s32.totalorder %s299, 0
        %p2015 = pnand %p2013, %p2014
        %p2016 = pneg %p2015
        %v2017 = vld [vmem:[#allocation3] sm:$0xff]
        %v2018 = vld [vmem:[#allocation3 + $0x8] sm:$0xff]
        %v2019 = vld [vmem:[#allocation3 + $0x10] sm:$0xff]
        %v2020 = vld [vmem:[#allocation3 + $0x18] sm:$0xff]
        %v2021 = vld [vmem:[#allocation3 + $0x20] sm:$0xff]
        %v2022 = vld [vmem:[#allocation3 + $0x28] sm:$0xff]
        %v2023 = vld [vmem:[#allocation3 + $0x30] sm:$0xff]
        %v2024 = vld [vmem:[#allocation3 + $0x38] sm:$0xff]
        %v2025 = vld [vmem:[#allocation3 + $0x40] sm:$0xff]
        %v2026 = vld [vmem:[#allocation3 + $0x48] sm:$0xff]
        %v2027 = vld [vmem:[#allocation3 + $0x50] sm:$0xff]
        %v2028 = vld [vmem:[#allocation3 + $0x58] sm:$0xff]
        %v2029 = vld [vmem:[#allocation3 + $0x60] sm:$0x3]
        %s2030 = scalar_select %p2016, 1, 0
        %v2031 = vstv %s2030
        %vm2032 = vcmp.eq.s32.totalorder %v2031, 1
        %v2033 = vsel %vm2032, %v2017, 0.0
        %v2034 = vsel %vm2032, %v2018, 0.0
        %v2035 = vsel %vm2032, %v2019, 0.0
        %v2036 = vsel %vm2032, %v2020, 0.0
        %v2037 = vsel %vm2032, %v2021, 0.0
        %v2038 = vsel %vm2032, %v2022, 0.0
        %v2039 = vsel %vm2032, %v2023, 0.0
        %v2040 = vsel %vm2032, %v2024, 0.0
        %v2041 = vsel %vm2032, %v2025, 0.0
        %v2042 = vsel %vm2032, %v2026, 0.0
        %v2043 = vsel %vm2032, %v2027, 0.0
        %v2044 = vsel %vm2032, %v2028, 0.0
        %v2045 = vsel %vm2032, %v2029, 0.0
        %v2046 = vadd.f32 %v2000, %v2033
        %v2047 = vadd.f32 %v2001, %v2034
        %v2048 = vadd.f32 %v2002, %v2035
        %v2049 = vadd.f32 %v2003, %v2036
        %v2050 = vadd.f32 %v2004, %v2037
        %v2051 = vadd.f32 %v2005, %v2038
        %v2052 = vadd.f32 %v2006, %v2039
        %v2053 = vadd.f32 %v2007, %v2040
        %v2054 = vadd.f32 %v2008, %v2041
        %v2055 = vadd.f32 %v2009, %v2042
        %v2056 = vadd.f32 %v2010, %v2043
        %v2057 = vadd.f32 %v2011, %v2044
        %v2058 = vadd.f32 %v2012, %v2045
        %v2059 = vmax.f32 %v2046, 0.0
        %v2060 = vmax.f32 %v2047, 0.0
        %v2061 = vmax.f32 %v2048, 0.0
        %v2062 = vmax.f32 %v2049, 0.0
        %v2063 = vmax.f32 %v2050, 0.0
        %v2064 = vmax.f32 %v2051, 0.0
        %v2065 = vmax.f32 %v2052, 0.0
        %v2066 = vmax.f32 %v2053, 0.0
        %v2067 = vmax.f32 %v2054, 0.0
        %v2068 = vmax.f32 %v2055, 0.0
        %v2069 = vmax.f32 %v2056, 0.0
        %v2070 = vmax.f32 %v2057, 0.0
        %v2071 = vmax.f32 %v2058, 0.0
        %v2072 = vld [vmem:[%s1] sm:$0xff]
        %v2073 = vld [vmem:[%s1 + $0x8] sm:$0xff]
        %v2074 = vld [vmem:[%s1 + $0x10] sm:$0xff]
        %v2075 = vld [vmem:[%s1 + $0x18] sm:$0xff]
        %v2076 = vld [vmem:[%s1 + $0x20] sm:$0xff]
        %v2077 = vld [vmem:[%s1 + $0x28] sm:$0xff]
        %v2078 = vld [vmem:[%s1 + $0x30] sm:$0xff]
        %v2079 = vld [vmem:[%s1 + $0x38] sm:$0xff]
        %v2080 = vld [vmem:[%s1 + $0x40] sm:$0xff]
        %v2081 = vld [vmem:[%s1 + $0x48] sm:$0xff]
        %v2082 = vld [vmem:[%s1 + $0x50] sm:$0xff]
        %v2083 = vld [vmem:[%s1 + $0x58] sm:$0xff]
        %v2084 = vld [vmem:[%s1 + $0x60] sm:$0x3]
        %v2085 = vmul.f32 %v2059, %v2072
        %v2086 = vmul.f32 %v2060, %v2073
        %v2087 = vmul.f32 %v2061, %v2074
        %v2088 = vmul.f32 %v2062, %v2075
        %v2089 = vmul.f32 %v2063, %v2076
        %v2090 = vmul.f32 %v2064, %v2077
        %v2091 = vmul.f32 %v2065, %v2078
        %v2092 = vmul.f32 %v2066, %v2079
        %v2093 = vmul.f32 %v2067, %v2080
        %v2094 = vmul.f32 %v2068, %v2081
        %v2095 = vmul.f32 %v2069, %v2082
        %v2096 = vmul.f32 %v2070, %v2083
        %v2097 = vmul.f32 %v2071, %v2084
        %2098 = vst [vmem:[#allocation2 + $0x8] sm:$0xff] %v2085
        %2099 = vst [vmem:[#allocation2 + $0x10] sm:$0xff] %v2086
        %2100 = vst [vmem:[#allocation2 + $0x18] sm:$0xff] %v2087
        %2101 = vst [vmem:[#allocation2 + $0x20] sm:$0xff] %v2088
        %2102 = vst [vmem:[#allocation2 + $0x28] sm:$0xff] %v2089
        %2103 = vst [vmem:[#allocation2 + $0x30] sm:$0xff] %v2090
        %2104 = vst [vmem:[#allocation2 + $0x38] sm:$0xff] %v2091
        %2105 = vst [vmem:[#allocation2 + $0x40] sm:$0xff] %v2092
        %2106 = vst [vmem:[#allocation2 + $0x48] sm:$0xff] %v2093
        %2107 = vst [vmem:[#allocation2 + $0x50] sm:$0xff] %v2094
        %2108 = vst [vmem:[#allocation2 + $0x58] sm:$0xff] %v2095
        %2109 = vst [vmem:[#allocation2 + $0x60] sm:$0xff] %v2096
        %2110 = vst [vmem:[#allocation2 + $0x68] sm:$0x3] %v2097
        %2111 = vst [vmem:[%s4] sm:$0xff] %v2085
        %2112 = vst [vmem:[%s4 + $0x8] sm:$0xff] %v2086
        %2113 = vst [vmem:[%s4 + $0x10] sm:$0xff] %v2087
        %2114 = vst [vmem:[%s4 + $0x18] sm:$0xff] %v2088
        %2115 = vst [vmem:[%s4 + $0x20] sm:$0xff] %v2089
        %2116 = vst [vmem:[%s4 + $0x28] sm:$0xff] %v2090
        %2117 = vst [vmem:[%s4 + $0x30] sm:$0xff] %v2091
        %2118 = vst [vmem:[%s4 + $0x38] sm:$0xff] %v2092
        %2119 = vst [vmem:[%s4 + $0x40] sm:$0xff] %v2093
        %2120 = vst [vmem:[%s4 + $0x48] sm:$0xff] %v2094
        %2121 = vst [vmem:[%s4 + $0x50] sm:$0xff] %v2095
        %2122 = vst [vmem:[%s4 + $0x58] sm:$0xff] %v2096
        %2123 = vst [vmem:[%s4 + $0x60] sm:$0x3] %v2097
        // Predicated region
        $region53: #{hexnet_forward.2} parent=35 // pred_check
          %p2124 = pneg %p128
        $region54: #{hexnet_forward.2} parent=35 // pred_check_branch
          %2126 = sbr.rel (%p2124) target = $region56
        $region55: #{hexnet_forward.2} parent=35 // pred_region
          _
        $region56: #{hexnet_forward.2} parent=35 // pred_fallthru
          _
        // Predicated region
        $region57: #{hexnet_forward.2} parent=35 // pred_check
          %p2127 = pneg %p128
        $region58: #{hexnet_forward.2} parent=35 // pred_check_branch
          %2129 = sbr.rel (%p2127) target = $region60
        $region59: #{hexnet_forward.2} parent=35 // pred_region
          _
        $region60: #{hexnet_forward.2} parent=35 // pred_fallthru
          _
      $region36: #{hexnet_forward.2} parent=5 // pred_fallthru
        _
      %p2130 = scmp.le.s32.totalorder 2, %s16
      // Predicated region
      $region61: #{hexnet_forward.2} parent=5 // pred_check
        %p2131 = pneg %p2130
      $region62: #{hexnet_forward.2} parent=5 // pred_check_branch
        %2133 = sbr.rel (%p2131) target = $region64
      $region63: #{hexnet_forward.2} parent=5 // pred_region
        %s2134 = ssub.s32 %s16, 2
      $region64: #{hexnet_forward.2} parent=5 // pred_fallthru
        _
    $region6: #{hexnet_forward.2} parent=1 // loop_footer
      %s20 = sadd.s32 1, %s16
    $region7: #{hexnet_forward.2} parent=1 // loop_footer_branch
      %15 = sbr.rel target = $region3
    $region8: #{hexnet_forward.2} parent=1 // loop_exit
      _
    %2135 = vsyncpa [#allocation5], 1
    %s2136 = scalar_lea.sflag [#allocation5], 1
    %2137 = vsyncpa %s2136, 1
    %2138 = vsyncpa [#allocation7], 1
    %s2139 = scalar_lea.sflag [#allocation7], 1
    %2140 = vsyncpa %s2139, 1

// kernel: hexnet_forward.3
$region0: #{hexnet_forward.3}
  #allocation0 [shape = 'u32[]', space=smem, size = 0x4, offset = 0x4, fixed_abs, tag = 'smem constant byte address 0x4 - core index']
  #allocation1 [shape = 'u32[144,128]{1,0:T(1,128)}', space=vmem, size = 0x12000, scoped, tag = 'internal scratch']
  %s0 = inlined_call_operand.vmem [shape: f32[2,3200], index: 0, kind: input, shape index: {}]
  %s1 = inlined_call_operand.vmem [shape: bf16[3200,128], index: 1, kind: input, shape index: {}]
  %s2 = inlined_call_operand.vmem [shape: f32[1,128], index: 2, kind: input, shape index: {}]
  %s3 = inlined_call_operand.vmem [shape: f32[1,128], index: 3, kind: input, shape index: {}]
  %s4 = inlined_call_operand.vmem [shape: f32[2,128], index: 4, kind: output, shape index: {}]
  %s5 = sld [smem:[#allocation0]]
  $region26: #{hexnet_forward.3} parent=0
    _
  %s7 = ssub.s32 1, %s5
  %s8 = scalar_select 0, %s7, %s5
  // Predicated region
  $region2: #{hexnet_forward.3} parent=0 // pred_check
    _
  $region3: #{hexnet_forward.3} parent=0 // pred_check_branch
    %10 = sbr.rel (0) target = $region5
  $region4: #{hexnet_forward.3} parent=0 // pred_region
    _
  $region5: #{hexnet_forward.3} parent=0 // pred_fallthru
    _
  // Predicated region
  $region6: #{hexnet_forward.3} parent=0 // pred_check
    _
  $region7: #{hexnet_forward.3} parent=0 // pred_check_branch
    %12 = sbr.rel (0) target = $region9
  $region8: #{hexnet_forward.3} parent=0 // pred_region
    _
  $region9: #{hexnet_forward.3} parent=0 // pred_fallthru
    _
  // Predicated region
  $region10: #{hexnet_forward.3} parent=0 // pred_check
    _
  $region11: #{hexnet_forward.3} parent=0 // pred_check_branch
    %14 = sbr.rel (0) target = $region13
  $region12: #{hexnet_forward.3} parent=0 // pred_region
    _
  $region13: #{hexnet_forward.3} parent=0 // pred_fallthru
    _
  // Predicated region
  $region14: #{hexnet_forward.3} parent=0 // pred_check
    _
  $region15: #{hexnet_forward.3} parent=0 // pred_check_branch
    %16 = sbr.rel (0) target = $region17
  $region16: #{hexnet_forward.3} parent=0 // pred_region
    _
  $region17: #{hexnet_forward.3} parent=0 // pred_fallthru
    _
  %v18 = vld [vmem:[%s0] sm:$0xff]
  %v19 = vld [vmem:[%s0 + $0x8] sm:$0xff]
  %v20 = vld [vmem:[%s0 + $0x10] sm:$0xff]
  %v21 = vld [vmem:[%s0 + $0x18] sm:$0xff]
  %v22 = vld [vmem:[%s0 + $0x20] sm:$0xff]
  %v23 = vld [vmem:[%s0 + $0x28] sm:$0xff]
  %v24 = vld [vmem:[%s0 + $0x30] sm:$0x3]
  %v32 = vcombine.high %v18, %v18
  %v34 = vunpack.c.l.s4 1983009808
  %v35 = vunpack.c.0.s8 %v34
  %v36 = vlaneseq
  %v37 = vshrl.u32 %v36, 7
  %v38 = vsub.s32 %v35, %v37
  %v39 = vrot.slane %v18, %v38
  %v41 = vunpack.c.l.s4 1983009808
  %v42 = vunpack.c.0.s8 %v41
  %v43 = vlaneseq
  %v44 = vshrl.u32 %v43, 7
  %v45 = vsub.s32 %v42, %v44
  %v46 = vrot.slane %v32, %v45
  %v47 = vcombine.high %v39, %v39
  %v48 = vcombine.high %v46, %v46
  %v49 = vcombine.high %v19, %v19
  %v51 = vunpack.c.l.s4 1983009808
  %v52 = vunpack.c.0.s8 %v51
  %v53 = vlaneseq
  %v54 = vshrl.u32 %v53, 7
  %v55 = vsub.s32 %v52, %v54
  %v56 = vrot.slane %v19, %v55
  %v58 = vunpack.c.l.s4 1983009808
  %v59 = vunpack.c.0.s8 %v58
  %v60 = vlaneseq
  %v61 = vshrl.u32 %v60, 7
  %v62 = vsub.s32 %v59, %v61
  %v63 = vrot.slane %v49, %v62
  %v64 = vcombine.high %v56, %v56
  %v65 = vcombine.high %v63, %v63
  %v66 = vcombine.high %v20, %v20
  %v68 = vunpack.c.l.s4 1983009808
  %v69 = vunpack.c.0.s8 %v68
  %v70 = vlaneseq
  %v71 = vshrl.u32 %v70, 7
  %v72 = vsub.s32 %v69, %v71
  %v73 = vrot.slane %v20, %v72
  %v75 = vunpack.c.l.s4 1983009808
  %v76 = vunpack.c.0.s8 %v75
  %v77 = vlaneseq
  %v78 = vshrl.u32 %v77, 7
  %v79 = vsub.s32 %v76, %v78
  %v80 = vrot.slane %v66, %v79
  %v81 = vcombine.high %v73, %v73
  %v82 = vcombine.high %v80, %v80
  %v83 = vcombine.high %v21, %v21
  %v85 = vunpack.c.l.s4 1983009808
  %v86 = vunpack.c.0.s8 %v85
  %v87 = vlaneseq
  %v88 = vshrl.u32 %v87, 7
  %v89 = vsub.s32 %v86, %v88
  %v90 = vrot.slane %v21, %v89
  %v92 = vunpack.c.l.s4 1983009808
  %v93 = vunpack.c.0.s8 %v92
  %v94 = vlaneseq
  %v95 = vshrl.u32 %v94, 7
  %v96 = vsub.s32 %v93, %v95
  %v97 = vrot.slane %v83, %v96
  %v98 = vcombine.high %v90, %v90
  %v99 = vcombine.high %v97, %v97
  %v100 = vcombine.high %v22, %v22
  %v102 = vunpack.c.l.s4 1983009808
  %v103 = vunpack.c.0.s8 %v102
  %v104 = vlaneseq
  %v105 = vshrl.u32 %v104, 7
  %v106 = vsub.s32 %v103, %v105
  %v107 = vrot.slane %v22, %v106
  %v109 = vunpack.c.l.s4 1983009808
  %v110 = vunpack.c.0.s8 %v109
  %v111 = vlaneseq
  %v112 = vshrl.u32 %v111, 7
  %v113 = vsub.s32 %v110, %v112
  %v114 = vrot.slane %v100, %v113
  %v115 = vcombine.high %v107, %v107
  %v116 = vcombine.high %v114, %v114
  %v117 = vcombine.high %v23, %v23
  %v119 = vunpack.c.l.s4 1983009808
  %v120 = vunpack.c.0.s8 %v119
  %v121 = vlaneseq
  %v122 = vshrl.u32 %v121, 7
  %v123 = vsub.s32 %v120, %v122
  %v124 = vrot.slane %v23, %v123
  %v126 = vunpack.c.l.s4 1983009808
  %v127 = vunpack.c.0.s8 %v126
  %v128 = vlaneseq
  %v129 = vshrl.u32 %v128, 7
  %v130 = vsub.s32 %v127, %v129
  %v131 = vrot.slane %v117, %v130
  %v132 = vcombine.high %v124, %v124
  %v133 = vcombine.high %v131, %v131
  %v135 = vunpack.c.l.s4 1983009808
  %v136 = vunpack.c.0.s8 %v135
  %v137 = vlaneseq
  %v138 = vshrl.u32 %v137, 7
  %v139 = vsub.s32 %v136, %v138
  %v140 = vrot.slane %v24, %v139
  %v166 = vpack.c.bf16 %v39, %v39
  %v167 = vpack.c.bf16 %v47, %v47
  %v168 = vpack.c.bf16 %v46, %v46
  %v169 = vpack.c.bf16 %v48, %v48
  %v170 = vpack.c.bf16 %v56, %v56
  %v171 = vpack.c.bf16 %v64, %v64
  %v172 = vpack.c.bf16 %v63, %v63
  %v173 = vpack.c.bf16 %v65, %v65
  %v174 = vpack.c.bf16 %v73, %v73
  %v175 = vpack.c.bf16 %v81, %v81
  %v176 = vpack.c.bf16 %v80, %v80
  %v177 = vpack.c.bf16 %v82, %v82
  %v178 = vpack.c.bf16 %v90, %v90
  %v179 = vpack.c.bf16 %v98, %v98
  %v180 = vpack.c.bf16 %v97, %v97
  %v181 = vpack.c.bf16 %v99, %v99
  %v182 = vpack.c.bf16 %v107, %v107
  %v183 = vpack.c.bf16 %v115, %v115
  %v184 = vpack.c.bf16 %v114, %v114
  %v185 = vpack.c.bf16 %v116, %v116
  %v186 = vpack.c.bf16 %v124, %v124
  %v187 = vpack.c.bf16 %v132, %v132
  %v188 = vpack.c.bf16 %v131, %v131
  %v189 = vpack.c.bf16 %v133, %v133
  %v190 = vpack.c.bf16 %v140, %v140
  %v191 = vld [vmem:[%s1] sm:$0xf]
  %v192 = vld [vmem:[%s1 + $0x4] sm:$0xf]
  %v193 = vld [vmem:[%s1 + $0x8] sm:$0xf]
  %v194 = vld [vmem:[%s1 + $0xc] sm:$0xf]
  %v195 = vld [vmem:[%s1 + $0x10] sm:$0xf]
  %v196 = vld [vmem:[%s1 + $0x14] sm:$0xf]
  %v197 = vld [vmem:[%s1 + $0x18] sm:$0xf]
  %v198 = vld [vmem:[%s1 + $0x1c] sm:$0xf]
  %v199 = vld [vmem:[%s1 + $0x20] sm:$0xf]
  %v200 = vld [vmem:[%s1 + $0x24] sm:$0xf]
  %v201 = vld [vmem:[%s1 + $0x28] sm:$0xf]
  %v202 = vld [vmem:[%s1 + $0x2c] sm:$0xf]
  %v203 = vld [vmem:[%s1 + $0x30] sm:$0xf]
  %v204 = vld [vmem:[%s1 + $0x34] sm:$0xf]
  %v205 = vld [vmem:[%s1 + $0x38] sm:$0xf]
  %v206 = vld [vmem:[%s1 + $0x3c] sm:$0xf]
  %v207 = vld [vmem:[%s1 + $0x40] sm:$0xf]
  %v208 = vld [vmem:[%s1 + $0x44] sm:$0xf]
  %v209 = vld [vmem:[%s1 + $0x48] sm:$0xf]
  %v210 = vld [vmem:[%s1 + $0x4c] sm:$0xf]
  %v211 = vld [vmem:[%s1 + $0x50] sm:$0xf]
  %v212 = vld [vmem:[%s1 + $0x54] sm:$0xf]
  %v213 = vld [vmem:[%s1 + $0x58] sm:$0xf]
  %v214 = vld [vmem:[%s1 + $0x5c] sm:$0xf]
  %v215 = vld [vmem:[%s1 + $0x60] sm:$0xf]
  %v216 = vld [vmem:[%s1 + $0x64] sm:$0xf]
  %v217 = vld [vmem:[%s1 + $0x68] sm:$0xf]
  %v218 = vld [vmem:[%s1 + $0x6c] sm:$0xf]
  %v219 = vld [vmem:[%s1 + $0x70] sm:$0xf]
  %v220 = vld [vmem:[%s1 + $0x74] sm:$0xf]
  %v221 = vld [vmem:[%s1 + $0x78] sm:$0xf]
  %v222 = vld [vmem:[%s1 + $0x7c] sm:$0xf]
  %v223 = vld [vmem:[%s1 + $0x80] sm:$0xf]
  %v224 = vld [vmem:[%s1 + $0x84] sm:$0xf]
  %v225 = vld [vmem:[%s1 + $0x88] sm:$0xf]
  %v226 = vld [vmem:[%s1 + $0x8c] sm:$0xf]
  %v227 = vld [vmem:[%s1 + $0x90] sm:$0xf]
  %v228 = vld [vmem:[%s1 + $0x94] sm:$0xf]
  %v229 = vld [vmem:[%s1 + $0x98] sm:$0xf]
  %v230 = vld [vmem:[%s1 + $0x9c] sm:$0xf]
  %v231 = vld [vmem:[%s1 + $0xa0] sm:$0xf]
  %v232 = vld [vmem:[%s1 + $0xa4] sm:$0xf]
  %v233 = vld [vmem:[%s1 + $0xa8] sm:$0xf]
  %v234 = vld [vmem:[%s1 + $0xac] sm:$0xf]
  %v235 = vld [vmem:[%s1 + $0xb0] sm:$0xf]
  %v236 = vld [vmem:[%s1 + $0xb4] sm:$0xf]
  %v237 = vld [vmem:[%s1 + $0xb8] sm:$0xf]
  %v238 = vld [vmem:[%s1 + $0xbc] sm:$0xf]
  %v239 = vld [vmem:[%s1 + $0xc0] sm:$0xf]
  %v240 = vld [vmem:[%s1 + $0xc4] sm:$0xf]
  %v241 = vld [vmem:[%s1 + $0xc8] sm:$0xf]
  %v242 = vld [vmem:[%s1 + $0xcc] sm:$0xf]
  %v243 = vld [vmem:[%s1 + $0xd0] sm:$0xf]
  %v244 = vld [vmem:[%s1 + $0xd4] sm:$0xf]
  %v245 = vld [vmem:[%s1 + $0xd8] sm:$0xf]
  %v246 = vld [vmem:[%s1 + $0xdc] sm:$0xf]
  %v247 = vld [vmem:[%s1 + $0xe0] sm:$0xf]
  %v248 = vld [vmem:[%s1 + $0xe4] sm:$0xf]
  %v249 = vld [vmem:[%s1 + $0xe8] sm:$0xf]
  %v250 = vld [vmem:[%s1 + $0xec] sm:$0xf]
  %v251 = vld [vmem:[%s1 + $0xf0] sm:$0xf]
  %v252 = vld [vmem:[%s1 + $0xf4] sm:$0xf]
  %v253 = vld [vmem:[%s1 + $0xf8] sm:$0xf]
  %v254 = vld [vmem:[%s1 + $0xfc] sm:$0xf]
  %v255 = vld [vmem:[%s1 + $0x100] sm:$0xf]
  %v256 = vld [vmem:[%s1 + $0x104] sm:$0xf]
  %v257 = vld [vmem:[%s1 + $0x108] sm:$0xf]
  %v258 = vld [vmem:[%s1 + $0x10c] sm:$0xf]
  %v259 = vld [vmem:[%s1 + $0x110] sm:$0xf]
  %v260 = vld [vmem:[%s1 + $0x114] sm:$0xf]
  %v261 = vld [vmem:[%s1 + $0x118] sm:$0xf]
  %v262 = vld [vmem:[%s1 + $0x11c] sm:$0xf]
  %v263 = vld [vmem:[%s1 + $0x120] sm:$0xf]
  %v264 = vld [vmem:[%s1 + $0x124] sm:$0xf]
  %v265 = vld [vmem:[%s1 + $0x128] sm:$0xf]
  %v266 = vld [vmem:[%s1 + $0x12c] sm:$0xf]
  %v267 = vld [vmem:[%s1 + $0x130] sm:$0xf]
  %v268 = vld [vmem:[%s1 + $0x134] sm:$0xf]
  %v269 = vld [vmem:[%s1 + $0x138] sm:$0xf]
  %v270 = vld [vmem:[%s1 + $0x13c] sm:$0xf]
  %v271 = vld [vmem:[%s1 + $0x140] sm:$0xf]
  %v272 = vld [vmem:[%s1 + $0x144] sm:$0xf]
  %v273 = vld [vmem:[%s1 + $0x148] sm:$0xf]
  %v274 = vld [vmem:[%s1 + $0x14c] sm:$0xf]
  %v275 = vld [vmem:[%s1 + $0x150] sm:$0xf]
  %v276 = vld [vmem:[%s1 + $0x154] sm:$0xf]
  %v277 = vld [vmem:[%s1 + $0x158] sm:$0xf]
  %v278 = vld [vmem:[%s1 + $0x15c] sm:$0xf]
  %v279 = vld [vmem:[%s1 + $0x160] sm:$0xf]
  %v280 = vld [vmem:[%s1 + $0x164] sm:$0xf]
  %v281 = vld [vmem:[%s1 + $0x168] sm:$0xf]
  %v282 = vld [vmem:[%s1 + $0x16c] sm:$0xf]
  %v283 = vld [vmem:[%s1 + $0x170] sm:$0xf]
  %v284 = vld [vmem:[%s1 + $0x174] sm:$0xf]
  %v285 = vld [vmem:[%s1 + $0x178] sm:$0xf]
  %v286 = vld [vmem:[%s1 + $0x17c] sm:$0xf]
  %v287 = vld [vmem:[%s1 + $0x180] sm:$0xf]
  %v288 = vld [vmem:[%s1 + $0x184] sm:$0xf]
  %v289 = vld [vmem:[%s1 + $0x188] sm:$0xf]
  %v290 = vld [vmem:[%s1 + $0x18c] sm:$0xf]
  %v291 = vld [vmem:[%s1 + $0x190] sm:$0xf]
  %v292 = vld [vmem:[%s1 + $0x194] sm:$0xf]
  %v293 = vld [vmem:[%s1 + $0x198] sm:$0xf]
  %v294 = vld [vmem:[%s1 + $0x19c] sm:$0xf]
  %v295 = vld [vmem:[%s1 + $0x1a0] sm:$0xf]
  %v296 = vld [vmem:[%s1 + $0x1a4] sm:$0xf]
  %v297 = vld [vmem:[%s1 + $0x1a8] sm:$0xf]
  %v298 = vld [vmem:[%s1 + $0x1ac] sm:$0xf]
  %v299 = vld [vmem:[%s1 + $0x1b0] sm:$0xf]
  %v300 = vld [vmem:[%s1 + $0x1b4] sm:$0xf]
  %v301 = vld [vmem:[%s1 + $0x1b8] sm:$0xf]
  %v302 = vld [vmem:[%s1 + $0x1bc] sm:$0xf]
  %v303 = vld [vmem:[%s1 + $0x1c0] sm:$0xf]
  %v304 = vld [vmem:[%s1 + $0x1c4] sm:$0xf]
  %v305 = vld [vmem:[%s1 + $0x1c8] sm:$0xf]
  %v306 = vld [vmem:[%s1 + $0x1cc] sm:$0xf]
  %v307 = vld [vmem:[%s1 + $0x1d0] sm:$0xf]
  %v308 = vld [vmem:[%s1 + $0x1d4] sm:$0xf]
  %v309 = vld [vmem:[%s1 + $0x1d8] sm:$0xf]
  %v310 = vld [vmem:[%s1 + $0x1dc] sm:$0xf]
  %v311 = vld [vmem:[%s1 + $0x1e0] sm:$0xf]
  %v312 = vld [vmem:[%s1 + $0x1e4] sm:$0xf]
  %v313 = vld [vmem:[%s1 + $0x1e8] sm:$0xf]
  %v314 = vld [vmem:[%s1 + $0x1ec] sm:$0xf]
  %v315 = vld [vmem:[%s1 + $0x1f0] sm:$0xf]
  %v316 = vld [vmem:[%s1 + $0x1f4] sm:$0xf]
  %v317 = vld [vmem:[%s1 + $0x1f8] sm:$0xf]
  %v318 = vld [vmem:[%s1 + $0x1fc] sm:$0xf]
  %v319 = vld [vmem:[%s1 + $0x200] sm:$0xf]
  %v320 = vld [vmem:[%s1 + $0x204] sm:$0xf]
  %v321 = vld [vmem:[%s1 + $0x208] sm:$0xf]
  %v322 = vld [vmem:[%s1 + $0x20c] sm:$0xf]
  %v323 = vld [vmem:[%s1 + $0x210] sm:$0xf]
  %v324 = vld [vmem:[%s1 + $0x214] sm:$0xf]
  %v325 = vld [vmem:[%s1 + $0x218] sm:$0xf]
  %v326 = vld [vmem:[%s1 + $0x21c] sm:$0xf]
  %v327 = vld [vmem:[%s1 + $0x220] sm:$0xf]
  %v328 = vld [vmem:[%s1 + $0x224] sm:$0xf]
  %v329 = vld [vmem:[%s1 + $0x228] sm:$0xf]
  %v330 = vld [vmem:[%s1 + $0x22c] sm:$0xf]
  %v331 = vld [vmem:[%s1 + $0x230] sm:$0xf]
  %v332 = vld [vmem:[%s1 + $0x234] sm:$0xf]
  %v333 = vld [vmem:[%s1 + $0x238] sm:$0xf]
  %v334 = vld [vmem:[%s1 + $0x23c] sm:$0xf]
  %v335 = vld [vmem:[%s1 + $0x240] sm:$0xf]
  %v336 = vld [vmem:[%s1 + $0x244] sm:$0xf]
  %v337 = vld [vmem:[%s1 + $0x248] sm:$0xf]
  %v338 = vld [vmem:[%s1 + $0x24c] sm:$0xf]
  %v339 = vld [vmem:[%s1 + $0x250] sm:$0xf]
  %v340 = vld [vmem:[%s1 + $0x254] sm:$0xf]
  %v341 = vld [vmem:[%s1 + $0x258] sm:$0xf]
  %v342 = vld [vmem:[%s1 + $0x25c] sm:$0xf]
  %v343 = vld [vmem:[%s1 + $0x260] sm:$0xf]
  %v344 = vld [vmem:[%s1 + $0x264] sm:$0xf]
  %v345 = vld [vmem:[%s1 + $0x268] sm:$0xf]
  %v346 = vld [vmem:[%s1 + $0x26c] sm:$0xf]
  %v347 = vld [vmem:[%s1 + $0x270] sm:$0xf]
  %v348 = vld [vmem:[%s1 + $0x274] sm:$0xf]
  %v349 = vld [vmem:[%s1 + $0x278] sm:$0xf]
  %v350 = vld [vmem:[%s1 + $0x27c] sm:$0xf]
  %v351 = vld [vmem:[%s1 + $0x280] sm:$0xf]
  %v352 = vld [vmem:[%s1 + $0x284] sm:$0xf]
  %v353 = vld [vmem:[%s1 + $0x288] sm:$0xf]
  %v354 = vld [vmem:[%s1 + $0x28c] sm:$0xf]
  %v355 = vld [vmem:[%s1 + $0x290] sm:$0xf]
  %v356 = vld [vmem:[%s1 + $0x294] sm:$0xf]
  %v357 = vld [vmem:[%s1 + $0x298] sm:$0xf]
  %v358 = vld [vmem:[%s1 + $0x29c] sm:$0xf]
  %v359 = vld [vmem:[%s1 + $0x2a0] sm:$0xf]
  %v360 = vld [vmem:[%s1 + $0x2a4] sm:$0xf]
  %v361 = vld [vmem:[%s1 + $0x2a8] sm:$0xf]
  %v362 = vld [vmem:[%s1 + $0x2ac] sm:$0xf]
  %v363 = vld [vmem:[%s1 + $0x2b0] sm:$0xf]
  %v364 = vld [vmem:[%s1 + $0x2b4] sm:$0xf]
  %v365 = vld [vmem:[%s1 + $0x2b8] sm:$0xf]
  %v366 = vld [vmem:[%s1 + $0x2bc] sm:$0xf]
  %v367 = vld [vmem:[%s1 + $0x2c0] sm:$0xf]
  %v368 = vld [vmem:[%s1 + $0x2c4] sm:$0xf]
  %v369 = vld [vmem:[%s1 + $0x2c8] sm:$0xf]
  %v370 = vld [vmem:[%s1 + $0x2cc] sm:$0xf]
  %v371 = vld [vmem:[%s1 + $0x2d0] sm:$0xf]
  %v372 = vld [vmem:[%s1 + $0x2d4] sm:$0xf]
  %v373 = vld [vmem:[%s1 + $0x2d8] sm:$0xf]
  %v374 = vld [vmem:[%s1 + $0x2dc] sm:$0xf]
  %v375 = vld [vmem:[%s1 + $0x2e0] sm:$0xf]
  %v376 = vld [vmem:[%s1 + $0x2e4] sm:$0xf]
  %v377 = vld [vmem:[%s1 + $0x2e8] sm:$0xf]
  %v378 = vld [vmem:[%s1 + $0x2ec] sm:$0xf]
  %v379 = vld [vmem:[%s1 + $0x2f0] sm:$0xf]
  %v380 = vld [vmem:[%s1 + $0x2f4] sm:$0xf]
  %v381 = vld [vmem:[%s1 + $0x2f8] sm:$0xf]
  %v382 = vld [vmem:[%s1 + $0x2fc] sm:$0xf]
  %v383 = vld [vmem:[%s1 + $0x300] sm:$0xf]
  %v384 = vld [vmem:[%s1 + $0x304] sm:$0xf]
  %v385 = vld [vmem:[%s1 + $0x308] sm:$0xf]
  %v386 = vld [vmem:[%s1 + $0x30c] sm:$0xf]
  %v387 = vld [vmem:[%s1 + $0x310] sm:$0xf]
  %v388 = vld [vmem:[%s1 + $0x314] sm:$0xf]
  %v389 = vld [vmem:[%s1 + $0x318] sm:$0xf]
  %v390 = vld [vmem:[%s1 + $0x31c] sm:$0xf]
  %v391 = vld [vmem:[%s1 + $0x320] sm:$0xf]
  %v392 = vld [vmem:[%s1 + $0x324] sm:$0xf]
  %v393 = vld [vmem:[%s1 + $0x328] sm:$0xf]
  %v394 = vld [vmem:[%s1 + $0x32c] sm:$0xf]
  %v395 = vld [vmem:[%s1 + $0x330] sm:$0xf]
  %v396 = vld [vmem:[%s1 + $0x334] sm:$0xf]
  %v397 = vld [vmem:[%s1 + $0x338] sm:$0xf]
  %v398 = vld [vmem:[%s1 + $0x33c] sm:$0xf]
  %v399 = vld [vmem:[%s1 + $0x340] sm:$0xf]
  %v400 = vld [vmem:[%s1 + $0x344] sm:$0xf]
  %v401 = vld [vmem:[%s1 + $0x348] sm:$0xf]
  %v402 = vld [vmem:[%s1 + $0x34c] sm:$0xf]
  %v403 = vld [vmem:[%s1 + $0x350] sm:$0xf]
  %v404 = vld [vmem:[%s1 + $0x354] sm:$0xf]
  %v405 = vld [vmem:[%s1 + $0x358] sm:$0xf]
  %v406 = vld [vmem:[%s1 + $0x35c] sm:$0xf]
  %v407 = vld [vmem:[%s1 + $0x360] sm:$0xf]
  %v408 = vld [vmem:[%s1 + $0x364] sm:$0xf]
  %v409 = vld [vmem:[%s1 + $0x368] sm:$0xf]
  %v410 = vld [vmem:[%s1 + $0x36c] sm:$0xf]
  %v411 = vld [vmem:[%s1 + $0x370] sm:$0xf]
  %v412 = vld [vmem:[%s1 + $0x374] sm:$0xf]
  %v413 = vld [vmem:[%s1 + $0x378] sm:$0xf]
  %v414 = vld [vmem:[%s1 + $0x37c] sm:$0xf]
  %v415 = vld [vmem:[%s1 + $0x380] sm:$0xf]
  %v416 = vld [vmem:[%s1 + $0x384] sm:$0xf]
  %v417 = vld [vmem:[%s1 + $0x388] sm:$0xf]
  %v418 = vld [vmem:[%s1 + $0x38c] sm:$0xf]
  %v419 = vld [vmem:[%s1 + $0x390] sm:$0xf]
  %v420 = vld [vmem:[%s1 + $0x394] sm:$0xf]
  %v421 = vld [vmem:[%s1 + $0x398] sm:$0xf]
  %v422 = vld [vmem:[%s1 + $0x39c] sm:$0xf]
  %v423 = vld [vmem:[%s1 + $0x3a0] sm:$0xf]
  %v424 = vld [vmem:[%s1 + $0x3a4] sm:$0xf]
  %v425 = vld [vmem:[%s1 + $0x3a8] sm:$0xf]
  %v426 = vld [vmem:[%s1 + $0x3ac] sm:$0xf]
  %v427 = vld [vmem:[%s1 + $0x3b0] sm:$0xf]
  %v428 = vld [vmem:[%s1 + $0x3b4] sm:$0xf]
  %v429 = vld [vmem:[%s1 + $0x3b8] sm:$0xf]
  %v430 = vld [vmem:[%s1 + $0x3bc] sm:$0xf]
  %v431 = vld [vmem:[%s1 + $0x3c0] sm:$0xf]
  %v432 = vld [vmem:[%s1 + $0x3c4] sm:$0xf]
  %v433 = vld [vmem:[%s1 + $0x3c8] sm:$0xf]
  %v434 = vld [vmem:[%s1 + $0x3cc] sm:$0xf]
  %v435 = vld [vmem:[%s1 + $0x3d0] sm:$0xf]
  %v436 = vld [vmem:[%s1 + $0x3d4] sm:$0xf]
  %v437 = vld [vmem:[%s1 + $0x3d8] sm:$0xf]
  %v438 = vld [vmem:[%s1 + $0x3dc] sm:$0xf]
  %v439 = vld [vmem:[%s1 + $0x3e0] sm:$0xf]
  %v440 = vld [vmem:[%s1 + $0x3e4] sm:$0xf]
  %v441 = vld [vmem:[%s1 + $0x3e8] sm:$0xf]
  %v442 = vld [vmem:[%s1 + $0x3ec] sm:$0xf]
  %v443 = vld [vmem:[%s1 + $0x3f0] sm:$0xf]
  %v444 = vld [vmem:[%s1 + $0x3f4] sm:$0xf]
  %v445 = vld [vmem:[%s1 + $0x3f8] sm:$0xf]
  %v446 = vld [vmem:[%s1 + $0x3fc] sm:$0xf]
  %v447 = vld [vmem:[%s1 + $0x400] sm:$0xf]
  %v448 = vld [vmem:[%s1 + $0x404] sm:$0xf]
  %v449 = vld [vmem:[%s1 + $0x408] sm:$0xf]
  %v450 = vld [vmem:[%s1 + $0x40c] sm:$0xf]
  %v451 = vld [vmem:[%s1 + $0x410] sm:$0xf]
  %v452 = vld [vmem:[%s1 + $0x414] sm:$0xf]
  %v453 = vld [vmem:[%s1 + $0x418] sm:$0xf]
  %v454 = vld [vmem:[%s1 + $0x41c] sm:$0xf]
  %v455 = vld [vmem:[%s1 + $0x420] sm:$0xf]
  %v456 = vld [vmem:[%s1 + $0x424] sm:$0xf]
  %v457 = vld [vmem:[%s1 + $0x428] sm:$0xf]
  %v458 = vld [vmem:[%s1 + $0x42c] sm:$0xf]
  %v459 = vld [vmem:[%s1 + $0x430] sm:$0xf]
  %v460 = vld [vmem:[%s1 + $0x434] sm:$0xf]
  %v461 = vld [vmem:[%s1 + $0x438] sm:$0xf]
  %v462 = vld [vmem:[%s1 + $0x43c] sm:$0xf]
  %v463 = vld [vmem:[%s1 + $0x440] sm:$0xf]
  %v464 = vld [vmem:[%s1 + $0x444] sm:$0xf]
  %v465 = vld [vmem:[%s1 + $0x448] sm:$0xf]
  %v466 = vld [vmem:[%s1 + $0x44c] sm:$0xf]
  %v467 = vld [vmem:[%s1 + $0x450] sm:$0xf]
  %v468 = vld [vmem:[%s1 + $0x454] sm:$0xf]
  %v469 = vld [vmem:[%s1 + $0x458] sm:$0xf]
  %v470 = vld [vmem:[%s1 + $0x45c] sm:$0xf]
  %v471 = vld [vmem:[%s1 + $0x460] sm:$0xf]
  %v472 = vld [vmem:[%s1 + $0x464] sm:$0xf]
  %v473 = vld [vmem:[%s1 + $0x468] sm:$0xf]
  %v474 = vld [vmem:[%s1 + $0x46c] sm:$0xf]
  %v475 = vld [vmem:[%s1 + $0x470] sm:$0xf]
  %v476 = vld [vmem:[%s1 + $0x474] sm:$0xf]
  %v477 = vld [vmem:[%s1 + $0x478] sm:$0xf]
  %v478 = vld [vmem:[%s1 + $0x47c] sm:$0xf]
  %v479 = vld [vmem:[%s1 + $0x480] sm:$0xf]
  %v480 = vld [vmem:[%s1 + $0x484] sm:$0xf]
  %v481 = vld [vmem:[%s1 + $0x488] sm:$0xf]
  %v482 = vld [vmem:[%s1 + $0x48c] sm:$0xf]
  %v483 = vld [vmem:[%s1 + $0x490] sm:$0xf]
  %v484 = vld [vmem:[%s1 + $0x494] sm:$0xf]
  %v485 = vld [vmem:[%s1 + $0x498] sm:$0xf]
  %v486 = vld [vmem:[%s1 + $0x49c] sm:$0xf]
  %v487 = vld [vmem:[%s1 + $0x4a0] sm:$0xf]
  %v488 = vld [vmem:[%s1 + $0x4a4] sm:$0xf]
  %v489 = vld [vmem:[%s1 + $0x4a8] sm:$0xf]
  %v490 = vld [vmem:[%s1 + $0x4ac] sm:$0xf]
  %v491 = vld [vmem:[%s1 + $0x4b0] sm:$0xf]
  %v492 = vld [vmem:[%s1 + $0x4b4] sm:$0xf]
  %v493 = vld [vmem:[%s1 + $0x4b8] sm:$0xf]
  %v494 = vld [vmem:[%s1 + $0x4bc] sm:$0xf]
  %v495 = vld [vmem:[%s1 + $0x4c0] sm:$0xf]
  %v496 = vld [vmem:[%s1 + $0x4c4] sm:$0xf]
  %v497 = vld [vmem:[%s1 + $0x4c8] sm:$0xf]
  %v498 = vld [vmem:[%s1 + $0x4cc] sm:$0xf]
  %v499 = vld [vmem:[%s1 + $0x4d0] sm:$0xf]
  %v500 = vld [vmem:[%s1 + $0x4d4] sm:$0xf]
  %v501 = vld [vmem:[%s1 + $0x4d8] sm:$0xf]
  %v502 = vld [vmem:[%s1 + $0x4dc] sm:$0xf]
  %v503 = vld [vmem:[%s1 + $0x4e0] sm:$0xf]
  %v504 = vld [vmem:[%s1 + $0x4e4] sm:$0xf]
  %v505 = vld [vmem:[%s1 + $0x4e8] sm:$0xf]
  %v506 = vld [vmem:[%s1 + $0x4ec] sm:$0xf]
  %v507 = vld [vmem:[%s1 + $0x4f0] sm:$0xf]
  %v508 = vld [vmem:[%s1 + $0x4f4] sm:$0xf]
  %v509 = vld [vmem:[%s1 + $0x4f8] sm:$0xf]
  %v510 = vld [vmem:[%s1 + $0x4fc] sm:$0xf]
  %v511 = vld [vmem:[%s1 + $0x500] sm:$0xf]
  %v512 = vld [vmem:[%s1 + $0x504] sm:$0xf]
  %v513 = vld [vmem:[%s1 + $0x508] sm:$0xf]
  %v514 = vld [vmem:[%s1 + $0x50c] sm:$0xf]
  %v515 = vld [vmem:[%s1 + $0x510] sm:$0xf]
  %v516 = vld [vmem:[%s1 + $0x514] sm:$0xf]
  %v517 = vld [vmem:[%s1 + $0x518] sm:$0xf]
  %v518 = vld [vmem:[%s1 + $0x51c] sm:$0xf]
  %v519 = vld [vmem:[%s1 + $0x520] sm:$0xf]
  %v520 = vld [vmem:[%s1 + $0x524] sm:$0xf]
  %v521 = vld [vmem:[%s1 + $0x528] sm:$0xf]
  %v522 = vld [vmem:[%s1 + $0x52c] sm:$0xf]
  %v523 = vld [vmem:[%s1 + $0x530] sm:$0xf]
  %v524 = vld [vmem:[%s1 + $0x534] sm:$0xf]
  %v525 = vld [vmem:[%s1 + $0x538] sm:$0xf]
  %v526 = vld [vmem:[%s1 + $0x53c] sm:$0xf]
  %v527 = vld [vmem:[%s1 + $0x540] sm:$0xf]
  %v528 = vld [vmem:[%s1 + $0x544] sm:$0xf]
  %v529 = vld [vmem:[%s1 + $0x548] sm:$0xf]
  %v530 = vld [vmem:[%s1 + $0x54c] sm:$0xf]
  %v531 = vld [vmem:[%s1 + $0x550] sm:$0xf]
  %v532 = vld [vmem:[%s1 + $0x554] sm:$0xf]
  %v533 = vld [vmem:[%s1 + $0x558] sm:$0xf]
  %v534 = vld [vmem:[%s1 + $0x55c] sm:$0xf]
  %v535 = vld [vmem:[%s1 + $0x560] sm:$0xf]
  %v536 = vld [vmem:[%s1 + $0x564] sm:$0xf]
  %v537 = vld [vmem:[%s1 + $0x568] sm:$0xf]
  %v538 = vld [vmem:[%s1 + $0x56c] sm:$0xf]
  %v539 = vld [vmem:[%s1 + $0x570] sm:$0xf]
  %v540 = vld [vmem:[%s1 + $0x574] sm:$0xf]
  %v541 = vld [vmem:[%s1 + $0x578] sm:$0xf]
  %v542 = vld [vmem:[%s1 + $0x57c] sm:$0xf]
  %v543 = vld [vmem:[%s1 + $0x580] sm:$0xf]
  %v544 = vld [vmem:[%s1 + $0x584] sm:$0xf]
  %v545 = vld [vmem:[%s1 + $0x588] sm:$0xf]
  %v546 = vld [vmem:[%s1 + $0x58c] sm:$0xf]
  %v547 = vld [vmem:[%s1 + $0x590] sm:$0xf]
  %v548 = vld [vmem:[%s1 + $0x594] sm:$0xf]
  %v549 = vld [vmem:[%s1 + $0x598] sm:$0xf]
  %v550 = vld [vmem:[%s1 + $0x59c] sm:$0xf]
  %v551 = vld [vmem:[%s1 + $0x5a0] sm:$0xf]
  %v552 = vld [vmem:[%s1 + $0x5a4] sm:$0xf]
  %v553 = vld [vmem:[%s1 + $0x5a8] sm:$0xf]
  %v554 = vld [vmem:[%s1 + $0x5ac] sm:$0xf]
  %v555 = vld [vmem:[%s1 + $0x5b0] sm:$0xf]
  %v556 = vld [vmem:[%s1 + $0x5b4] sm:$0xf]
  %v557 = vld [vmem:[%s1 + $0x5b8] sm:$0xf]
  %v558 = vld [vmem:[%s1 + $0x5bc] sm:$0xf]
  %v559 = vld [vmem:[%s1 + $0x5c0] sm:$0xf]
  %v560 = vld [vmem:[%s1 + $0x5c4] sm:$0xf]
  %v561 = vld [vmem:[%s1 + $0x5c8] sm:$0xf]
  %v562 = vld [vmem:[%s1 + $0x5cc] sm:$0xf]
  %v563 = vld [vmem:[%s1 + $0x5d0] sm:$0xf]
  %v564 = vld [vmem:[%s1 + $0x5d4] sm:$0xf]
  %v565 = vld [vmem:[%s1 + $0x5d8] sm:$0xf]
  %v566 = vld [vmem:[%s1 + $0x5dc] sm:$0xf]
  %v567 = vld [vmem:[%s1 + $0x5e0] sm:$0xf]
  %v568 = vld [vmem:[%s1 + $0x5e4] sm:$0xf]
  %v569 = vld [vmem:[%s1 + $0x5e8] sm:$0xf]
  %v570 = vld [vmem:[%s1 + $0x5ec] sm:$0xf]
  %v571 = vld [vmem:[%s1 + $0x5f0] sm:$0xf]
  %v572 = vld [vmem:[%s1 + $0x5f4] sm:$0xf]
  %v573 = vld [vmem:[%s1 + $0x5f8] sm:$0xf]
  %v574 = vld [vmem:[%s1 + $0x5fc] sm:$0xf]
  %v575 = vld [vmem:[%s1 + $0x600] sm:$0xf]
  %v576 = vld [vmem:[%s1 + $0x604] sm:$0xf]
  %v577 = vld [vmem:[%s1 + $0x608] sm:$0xf]
  %v578 = vld [vmem:[%s1 + $0x60c] sm:$0xf]
  %v579 = vld [vmem:[%s1 + $0x610] sm:$0xf]
  %v580 = vld [vmem:[%s1 + $0x614] sm:$0xf]
  %v581 = vld [vmem:[%s1 + $0x618] sm:$0xf]
  %v582 = vld [vmem:[%s1 + $0x61c] sm:$0xf]
  %v583 = vld [vmem:[%s1 + $0x620] sm:$0xf]
  %v584 = vld [vmem:[%s1 + $0x624] sm:$0xf]
  %v585 = vld [vmem:[%s1 + $0x628] sm:$0xf]
  %v586 = vld [vmem:[%s1 + $0x62c] sm:$0xf]
  %v587 = vld [vmem:[%s1 + $0x630] sm:$0xf]
  %v588 = vld [vmem:[%s1 + $0x634] sm:$0xf]
  %v589 = vld [vmem:[%s1 + $0x638] sm:$0xf]
  %v590 = vld [vmem:[%s1 + $0x63c] sm:$0xf]
  %v591 = vld [vmem:[%s2] sm:$0x1]
  %v593 = vlaneseq
  %v594 = vshrl.u32 %v593, 7
  %v595 = vsub.s32 0, %v594
  %v596 = vrot.slane %v591, %v595
  %v998 = vunpack.c.l.b16 %v191
  %v999 = vunpack.c.l.b16 %v192
  %v1000 = vunpack.c.l.b16 %v193
  %v1001 = vunpack.c.l.b16 %v194
  %v1002 = vunpack.c.l.b16 %v195
  %v1003 = vunpack.c.l.b16 %v196
  %v1004 = vunpack.c.l.b16 %v197
  %v1005 = vunpack.c.l.b16 %v198
  %v1006 = vunpack.c.l.b16 %v199
  %v1007 = vunpack.c.l.b16 %v200
  %v1008 = vunpack.c.l.b16 %v201
  %v1009 = vunpack.c.l.b16 %v202
  %v1010 = vunpack.c.l.b16 %v203
  %v1011 = vunpack.c.l.b16 %v204
  %v1012 = vunpack.c.l.b16 %v205
  %v1013 = vunpack.c.l.b16 %v206
  %v1014 = vunpack.c.l.b16 %v207
  %v1015 = vunpack.c.l.b16 %v208
  %v1016 = vunpack.c.l.b16 %v209
  %v1017 = vunpack.c.l.b16 %v210
  %v1018 = vunpack.c.l.b16 %v211
  %v1019 = vunpack.c.l.b16 %v212
  %v1020 = vunpack.c.l.b16 %v213
  %v1021 = vunpack.c.l.b16 %v214
  %v1022 = vunpack.c.l.b16 %v215
  %v1023 = vunpack.c.l.b16 %v216
  %v1024 = vunpack.c.l.b16 %v217
  %v1025 = vunpack.c.l.b16 %v218
  %v1026 = vunpack.c.l.b16 %v219
  %v1027 = vunpack.c.l.b16 %v220
  %v1028 = vunpack.c.l.b16 %v221
  %v1029 = vunpack.c.l.b16 %v222
  %v1030 = vunpack.c.l.b16 %v223
  %v1031 = vunpack.c.l.b16 %v224
  %v1032 = vunpack.c.l.b16 %v225
  %v1033 = vunpack.c.l.b16 %v226
  %v1034 = vunpack.c.l.b16 %v227
  %v1035 = vunpack.c.l.b16 %v228
  %v1036 = vunpack.c.l.b16 %v229
  %v1037 = vunpack.c.l.b16 %v230
  %v1038 = vunpack.c.l.b16 %v231
  %v1039 = vunpack.c.l.b16 %v232
  %v1040 = vunpack.c.l.b16 %v233
  %v1041 = vunpack.c.l.b16 %v234
  %v1042 = vunpack.c.l.b16 %v235
  %v1043 = vunpack.c.l.b16 %v236
  %v1044 = vunpack.c.l.b16 %v237
  %v1045 = vunpack.c.l.b16 %v238
  %v1046 = vunpack.c.l.b16 %v239
  %v1047 = vunpack.c.l.b16 %v240
  %v1048 = vunpack.c.l.b16 %v241
  %v1049 = vunpack.c.l.b16 %v242
  %v1050 = vunpack.c.l.b16 %v243
  %v1051 = vunpack.c.l.b16 %v244
  %v1052 = vunpack.c.l.b16 %v245
  %v1053 = vunpack.c.l.b16 %v246
  %v1054 = vunpack.c.l.b16 %v247
  %v1055 = vunpack.c.l.b16 %v248
  %v1056 = vunpack.c.l.b16 %v249
  %v1057 = vunpack.c.l.b16 %v250
  %v1058 = vunpack.c.l.b16 %v251
  %v1059 = vunpack.c.l.b16 %v252
  %v1060 = vunpack.c.l.b16 %v253
  %v1061 = vunpack.c.l.b16 %v254
  %v1062 = vunpack.c.l.b16 %v255
  %v1063 = vunpack.c.l.b16 %v256
  %v1064 = vunpack.c.l.b16 %v257
  %v1065 = vunpack.c.l.b16 %v258
  %v1066 = vunpack.c.l.b16 %v259
  %v1067 = vunpack.c.l.b16 %v260
  %v1068 = vunpack.c.l.b16 %v261
  %v1069 = vunpack.c.l.b16 %v262
  %v1070 = vunpack.c.l.b16 %v263
  %v1071 = vunpack.c.l.b16 %v264
  %v1072 = vunpack.c.l.b16 %v265
  %v1073 = vunpack.c.l.b16 %v266
  %v1074 = vunpack.c.l.b16 %v267
  %v1075 = vunpack.c.l.b16 %v268
  %v1076 = vunpack.c.l.b16 %v269
  %v1077 = vunpack.c.l.b16 %v270
  %v1078 = vunpack.c.l.b16 %v271
  %v1079 = vunpack.c.l.b16 %v272
  %v1080 = vunpack.c.l.b16 %v273
  %v1081 = vunpack.c.l.b16 %v274
  %v1082 = vunpack.c.l.b16 %v275
  %v1083 = vunpack.c.l.b16 %v276
  %v1084 = vunpack.c.l.b16 %v277
  %v1085 = vunpack.c.l.b16 %v278
  %v1086 = vunpack.c.l.b16 %v279
  %v1087 = vunpack.c.l.b16 %v280
  %v1088 = vunpack.c.l.b16 %v281
  %v1089 = vunpack.c.l.b16 %v282
  %v1090 = vunpack.c.l.b16 %v283
  %v1091 = vunpack.c.l.b16 %v284
  %v1092 = vunpack.c.l.b16 %v285
  %v1093 = vunpack.c.l.b16 %v286
  %v1094 = vunpack.c.l.b16 %v287
  %v1095 = vunpack.c.l.b16 %v288
  %v1096 = vunpack.c.l.b16 %v289
  %v1097 = vunpack.c.l.b16 %v290
  %v1098 = vunpack.c.l.b16 %v291
  %v1099 = vunpack.c.l.b16 %v292
  %v1100 = vunpack.c.l.b16 %v293
  %v1101 = vunpack.c.l.b16 %v294
  %v1102 = vunpack.c.l.b16 %v295
  %v1103 = vunpack.c.l.b16 %v296
  %v1104 = vunpack.c.l.b16 %v297
  %v1105 = vunpack.c.l.b16 %v298
  %v1106 = vunpack.c.l.b16 %v299
  %v1107 = vunpack.c.l.b16 %v300
  %v1108 = vunpack.c.l.b16 %v301
  %v1109 = vunpack.c.l.b16 %v302
  %v1110 = vunpack.c.l.b16 %v303
  %v1111 = vunpack.c.l.b16 %v304
  %v1112 = vunpack.c.l.b16 %v305
  %v1113 = vunpack.c.l.b16 %v306
  %v1114 = vunpack.c.l.b16 %v307
  %v1115 = vunpack.c.l.b16 %v308
  %v1116 = vunpack.c.l.b16 %v309
  %v1117 = vunpack.c.l.b16 %v310
  %v1118 = vunpack.c.l.b16 %v311
  %v1119 = vunpack.c.l.b16 %v312
  %v1120 = vunpack.c.l.b16 %v313
  %v1121 = vunpack.c.l.b16 %v314
  %v1122 = vunpack.c.l.b16 %v315
  %v1123 = vunpack.c.l.b16 %v316
  %v1124 = vunpack.c.l.b16 %v317
  %v1125 = vunpack.c.l.b16 %v318
  %v1126 = vunpack.c.l.b16 %v319
  %v1127 = vunpack.c.l.b16 %v320
  %v1128 = vunpack.c.l.b16 %v321
  %v1129 = vunpack.c.l.b16 %v322
  %v1130 = vunpack.c.l.b16 %v323
  %v1131 = vunpack.c.l.b16 %v324
  %v1132 = vunpack.c.l.b16 %v325
  %v1133 = vunpack.c.l.b16 %v326
  %v1134 = vunpack.c.l.b16 %v327
  %v1135 = vunpack.c.l.b16 %v328
  %v1136 = vunpack.c.l.b16 %v329
  %v1137 = vunpack.c.l.b16 %v330
  %v1138 = vunpack.c.l.b16 %v331
  %v1139 = vunpack.c.l.b16 %v332
  %v1140 = vunpack.c.l.b16 %v333
  %v1141 = vunpack.c.l.b16 %v334
  %v1142 = vunpack.c.l.b16 %v335
  %v1143 = vunpack.c.l.b16 %v336
  %v1144 = vunpack.c.l.b16 %v337
  %v1145 = vunpack.c.l.b16 %v338
  %v1146 = vunpack.c.l.b16 %v339
  %v1147 = vunpack.c.l.b16 %v340
  %v1148 = vunpack.c.l.b16 %v341
  %v1149 = vunpack.c.l.b16 %v342
  %v1150 = vunpack.c.l.b16 %v343
  %v1151 = vunpack.c.l.b16 %v344
  %v1152 = vunpack.c.l.b16 %v345
  %v1153 = vunpack.c.l.b16 %v346
  %v1154 = vunpack.c.l.b16 %v347
  %v1155 = vunpack.c.l.b16 %v348
  %v1156 = vunpack.c.l.b16 %v349
  %v1157 = vunpack.c.l.b16 %v350
  %v1158 = vunpack.c.l.b16 %v351
  %v1159 = vunpack.c.l.b16 %v352
  %v1160 = vunpack.c.l.b16 %v353
  %v1161 = vunpack.c.l.b16 %v354
  %v1162 = vunpack.c.l.b16 %v355
  %v1163 = vunpack.c.l.b16 %v356
  %v1164 = vunpack.c.l.b16 %v357
  %v1165 = vunpack.c.l.b16 %v358
  %v1166 = vunpack.c.l.b16 %v359
  %v1167 = vunpack.c.l.b16 %v360
  %v1168 = vunpack.c.l.b16 %v361
  %v1169 = vunpack.c.l.b16 %v362
  %v1170 = vunpack.c.l.b16 %v363
  %v1171 = vunpack.c.l.b16 %v364
  %v1172 = vunpack.c.l.b16 %v365
  %v1173 = vunpack.c.l.b16 %v366
  %v1174 = vunpack.c.l.b16 %v367
  %v1175 = vunpack.c.l.b16 %v368
  %v1176 = vunpack.c.l.b16 %v369
  %v1177 = vunpack.c.l.b16 %v370
  %v1178 = vunpack.c.l.b16 %v371
  %v1179 = vunpack.c.l.b16 %v372
  %v1180 = vunpack.c.l.b16 %v373
  %v1181 = vunpack.c.l.b16 %v374
  %v1182 = vunpack.c.l.b16 %v375
  %v1183 = vunpack.c.l.b16 %v376
  %v1184 = vunpack.c.l.b16 %v377
  %v1185 = vunpack.c.l.b16 %v378
  %v1186 = vunpack.c.l.b16 %v379
  %v1187 = vunpack.c.l.b16 %v380
  %v1188 = vunpack.c.l.b16 %v381
  %v1189 = vunpack.c.l.b16 %v382
  %v1190 = vunpack.c.l.b16 %v383
  %v1191 = vunpack.c.l.b16 %v384
  %v1192 = vunpack.c.l.b16 %v385
  %v1193 = vunpack.c.l.b16 %v386
  %v1194 = vunpack.c.l.b16 %v387
  %v1195 = vunpack.c.l.b16 %v388
  %v1196 = vunpack.c.l.b16 %v389
  %v1197 = vunpack.c.l.b16 %v390
  %v1198 = vunpack.c.l.b16 %v391
  %v1199 = vunpack.c.l.b16 %v392
  %v1200 = vunpack.c.l.b16 %v393
  %v1201 = vunpack.c.l.b16 %v394
  %v1202 = vunpack.c.l.b16 %v395
  %v1203 = vunpack.c.l.b16 %v396
  %v1204 = vunpack.c.l.b16 %v397
  %v1205 = vunpack.c.l.b16 %v398
  %v1206 = vunpack.c.l.b16 %v399
  %v1207 = vunpack.c.l.b16 %v400
  %v1208 = vunpack.c.l.b16 %v401
  %v1209 = vunpack.c.l.b16 %v402
  %v1210 = vunpack.c.l.b16 %v403
  %v1211 = vunpack.c.l.b16 %v404
  %v1212 = vunpack.c.l.b16 %v405
  %v1213 = vunpack.c.l.b16 %v406
  %v1214 = vunpack.c.l.b16 %v407
  %v1215 = vunpack.c.l.b16 %v408
  %v1216 = vunpack.c.l.b16 %v409
  %v1217 = vunpack.c.l.b16 %v410
  %v1218 = vunpack.c.l.b16 %v411
  %v1219 = vunpack.c.l.b16 %v412
  %v1220 = vunpack.c.l.b16 %v413
  %v1221 = vunpack.c.l.b16 %v414
  %v1222 = vunpack.c.l.b16 %v415
  %v1223 = vunpack.c.l.b16 %v416
  %v1224 = vunpack.c.l.b16 %v417
  %v1225 = vunpack.c.l.b16 %v418
  %v1226 = vunpack.c.l.b16 %v419
  %v1227 = vunpack.c.l.b16 %v420
  %v1228 = vunpack.c.l.b16 %v421
  %v1229 = vunpack.c.l.b16 %v422
  %v1230 = vunpack.c.l.b16 %v423
  %v1231 = vunpack.c.l.b16 %v424
  %v1232 = vunpack.c.l.b16 %v425
  %v1233 = vunpack.c.l.b16 %v426
  %v1234 = vunpack.c.l.b16 %v427
  %v1235 = vunpack.c.l.b16 %v428
  %v1236 = vunpack.c.l.b16 %v429
  %v1237 = vunpack.c.l.b16 %v430
  %v1238 = vunpack.c.l.b16 %v431
  %v1239 = vunpack.c.l.b16 %v432
  %v1240 = vunpack.c.l.b16 %v433
  %v1241 = vunpack.c.l.b16 %v434
  %v1242 = vunpack.c.l.b16 %v435
  %v1243 = vunpack.c.l.b16 %v436
  %v1244 = vunpack.c.l.b16 %v437
  %v1245 = vunpack.c.l.b16 %v438
  %v1246 = vunpack.c.l.b16 %v439
  %v1247 = vunpack.c.l.b16 %v440
  %v1248 = vunpack.c.l.b16 %v441
  %v1249 = vunpack.c.l.b16 %v442
  %v1250 = vunpack.c.l.b16 %v443
  %v1251 = vunpack.c.l.b16 %v444
  %v1252 = vunpack.c.l.b16 %v445
  %v1253 = vunpack.c.l.b16 %v446
  %v1254 = vunpack.c.l.b16 %v447
  %v1255 = vunpack.c.l.b16 %v448
  %v1256 = vunpack.c.l.b16 %v449
  %v1257 = vunpack.c.l.b16 %v450
  %v1258 = vunpack.c.l.b16 %v451
  %v1259 = vunpack.c.l.b16 %v452
  %v1260 = vunpack.c.l.b16 %v453
  %v1261 = vunpack.c.l.b16 %v454
  %v1262 = vunpack.c.l.b16 %v455
  %v1263 = vunpack.c.l.b16 %v456
  %v1264 = vunpack.c.l.b16 %v457
  %v1265 = vunpack.c.l.b16 %v458
  %v1266 = vunpack.c.l.b16 %v459
  %v1267 = vunpack.c.l.b16 %v460
  %v1268 = vunpack.c.l.b16 %v461
  %v1269 = vunpack.c.l.b16 %v462
  %v1270 = vunpack.c.l.b16 %v463
  %v1271 = vunpack.c.l.b16 %v464
  %v1272 = vunpack.c.l.b16 %v465
  %v1273 = vunpack.c.l.b16 %v466
  %v1274 = vunpack.c.l.b16 %v467
  %v1275 = vunpack.c.l.b16 %v468
  %v1276 = vunpack.c.l.b16 %v469
  %v1277 = vunpack.c.l.b16 %v470
  %v1278 = vunpack.c.l.b16 %v471
  %v1279 = vunpack.c.l.b16 %v472
  %v1280 = vunpack.c.l.b16 %v473
  %v1281 = vunpack.c.l.b16 %v474
  %v1282 = vunpack.c.l.b16 %v475
  %v1283 = vunpack.c.l.b16 %v476
  %v1284 = vunpack.c.l.b16 %v477
  %v1285 = vunpack.c.l.b16 %v478
  %v1286 = vunpack.c.l.b16 %v479
  %v1287 = vunpack.c.l.b16 %v480
  %v1288 = vunpack.c.l.b16 %v481
  %v1289 = vunpack.c.l.b16 %v482
  %v1290 = vunpack.c.l.b16 %v483
  %v1291 = vunpack.c.l.b16 %v484
  %v1292 = vunpack.c.l.b16 %v485
  %v1293 = vunpack.c.l.b16 %v486
  %v1294 = vunpack.c.l.b16 %v487
  %v1295 = vunpack.c.l.b16 %v488
  %v1296 = vunpack.c.l.b16 %v489
  %v1297 = vunpack.c.l.b16 %v490
  %v1298 = vunpack.c.l.b16 %v491
  %v1299 = vunpack.c.l.b16 %v492
  %v1300 = vunpack.c.l.b16 %v493
  %v1301 = vunpack.c.l.b16 %v494
  %v1302 = vunpack.c.l.b16 %v495
  %v1303 = vunpack.c.l.b16 %v496
  %v1304 = vunpack.c.l.b16 %v497
  %v1305 = vunpack.c.l.b16 %v498
  %v1306 = vunpack.c.l.b16 %v499
  %v1307 = vunpack.c.l.b16 %v500
  %v1308 = vunpack.c.l.b16 %v501
  %v1309 = vunpack.c.l.b16 %v502
  %v1310 = vunpack.c.l.b16 %v503
  %v1311 = vunpack.c.l.b16 %v504
  %v1312 = vunpack.c.l.b16 %v505
  %v1313 = vunpack.c.l.b16 %v506
  %v1314 = vunpack.c.l.b16 %v507
  %v1315 = vunpack.c.l.b16 %v508
  %v1316 = vunpack.c.l.b16 %v509
  %v1317 = vunpack.c.l.b16 %v510
  %v1318 = vunpack.c.l.b16 %v511
  %v1319 = vunpack.c.l.b16 %v512
  %v1320 = vunpack.c.l.b16 %v513
  %v1321 = vunpack.c.l.b16 %v514
  %v1322 = vunpack.c.l.b16 %v515
  %v1323 = vunpack.c.l.b16 %v516
  %v1324 = vunpack.c.l.b16 %v517
  %v1325 = vunpack.c.l.b16 %v518
  %v1326 = vunpack.c.l.b16 %v519
  %v1327 = vunpack.c.l.b16 %v520
  %v1328 = vunpack.c.l.b16 %v521
  %v1329 = vunpack.c.l.b16 %v522
  %v1330 = vunpack.c.l.b16 %v523
  %v1331 = vunpack.c.l.b16 %v524
  %v1332 = vunpack.c.l.b16 %v525
  %v1333 = vunpack.c.l.b16 %v526
  %v1334 = vunpack.c.l.b16 %v527
  %v1335 = vunpack.c.l.b16 %v528
  %v1336 = vunpack.c.l.b16 %v529
  %v1337 = vunpack.c.l.b16 %v530
  %v1338 = vunpack.c.l.b16 %v531
  %v1339 = vunpack.c.l.b16 %v532
  %v1340 = vunpack.c.l.b16 %v533
  %v1341 = vunpack.c.l.b16 %v534
  %v1342 = vunpack.c.l.b16 %v535
  %v1343 = vunpack.c.l.b16 %v536
  %v1344 = vunpack.c.l.b16 %v537
  %v1345 = vunpack.c.l.b16 %v538
  %v1346 = vunpack.c.l.b16 %v539
  %v1347 = vunpack.c.l.b16 %v540
  %v1348 = vunpack.c.l.b16 %v541
  %v1349 = vunpack.c.l.b16 %v542
  %v1350 = vunpack.c.l.b16 %v543
  %v1351 = vunpack.c.l.b16 %v544
  %v1352 = vunpack.c.l.b16 %v545
  %v1353 = vunpack.c.l.b16 %v546
  %v1354 = vunpack.c.l.b16 %v547
  %v1355 = vunpack.c.l.b16 %v548
  %v1356 = vunpack.c.l.b16 %v549
  %v1357 = vunpack.c.l.b16 %v550
  %v1358 = vunpack.c.l.b16 %v551
  %v1359 = vunpack.c.l.b16 %v552
  %v1360 = vunpack.c.l.b16 %v553
  %v1361 = vunpack.c.l.b16 %v554
  %v1362 = vunpack.c.l.b16 %v555
  %v1363 = vunpack.c.l.b16 %v556
  %v1364 = vunpack.c.l.b16 %v557
  %v1365 = vunpack.c.l.b16 %v558
  %v1366 = vunpack.c.l.b16 %v559
  %v1367 = vunpack.c.l.b16 %v560
  %v1368 = vunpack.c.l.b16 %v561
  %v1369 = vunpack.c.l.b16 %v562
  %v1370 = vunpack.c.l.b16 %v563
  %v1371 = vunpack.c.l.b16 %v564
  %v1372 = vunpack.c.l.b16 %v565
  %v1373 = vunpack.c.l.b16 %v566
  %v1374 = vunpack.c.l.b16 %v567
  %v1375 = vunpack.c.l.b16 %v568
  %v1376 = vunpack.c.l.b16 %v569
  %v1377 = vunpack.c.l.b16 %v570
  %v1378 = vunpack.c.l.b16 %v571
  %v1379 = vunpack.c.l.b16 %v572
  %v1380 = vunpack.c.l.b16 %v573
  %v1381 = vunpack.c.l.b16 %v574
  %v1382 = vunpack.c.l.b16 %v575
  %v1383 = vunpack.c.l.b16 %v576
  %v1384 = vunpack.c.l.b16 %v577
  %v1385 = vunpack.c.l.b16 %v578
  %v1386 = vunpack.c.l.b16 %v579
  %v1387 = vunpack.c.l.b16 %v580
  %v1388 = vunpack.c.l.b16 %v581
  %v1389 = vunpack.c.l.b16 %v582
  %v1390 = vunpack.c.l.b16 %v583
  %v1391 = vunpack.c.l.b16 %v584
  %v1392 = vunpack.c.l.b16 %v585
  %v1393 = vunpack.c.l.b16 %v586
  %v1394 = vunpack.c.l.b16 %v587
  %v1395 = vunpack.c.l.b16 %v588
  %v1396 = vunpack.c.l.b16 %v589
  %v1397 = vunpack.c.l.b16 %v590
  %v1398 = vpack.c.b16 %v999, %v998
  %v1399 = vpack.c.b16 %v1001, %v1000
  %v1400 = vpack.c.b16 %v1003, %v1002
  %v1401 = vpack.c.b16 %v1005, %v1004
  %v1402 = vpack.c.b16 %v1007, %v1006
  %v1403 = vpack.c.b16 %v1009, %v1008
  %v1404 = vpack.c.b16 %v1011, %v1010
  %v1405 = vpack.c.b16 %v1013, %v1012
  %v1406 = vpack.c.b16 %v1015, %v1014
  %v1407 = vpack.c.b16 %v1017, %v1016
  %v1408 = vpack.c.b16 %v1019, %v1018
  %v1409 = vpack.c.b16 %v1021, %v1020
  %v1410 = vpack.c.b16 %v1023, %v1022
  %v1411 = vpack.c.b16 %v1025, %v1024
  %v1412 = vpack.c.b16 %v1027, %v1026
  %v1413 = vpack.c.b16 %v1029, %v1028
  %v1414 = vpack.c.b16 %v1031, %v1030
  %v1415 = vpack.c.b16 %v1033, %v1032
  %v1416 = vpack.c.b16 %v1035, %v1034
  %v1417 = vpack.c.b16 %v1037, %v1036
  %v1418 = vpack.c.b16 %v1039, %v1038
  %v1419 = vpack.c.b16 %v1041, %v1040
  %v1420 = vpack.c.b16 %v1043, %v1042
  %v1421 = vpack.c.b16 %v1045, %v1044
  %v1422 = vpack.c.b16 %v1047, %v1046
  %v1423 = vpack.c.b16 %v1049, %v1048
  %v1424 = vpack.c.b16 %v1051, %v1050
  %v1425 = vpack.c.b16 %v1053, %v1052
  %v1426 = vpack.c.b16 %v1055, %v1054
  %v1427 = vpack.c.b16 %v1057, %v1056
  %v1428 = vpack.c.b16 %v1059, %v1058
  %v1429 = vpack.c.b16 %v1061, %v1060
  %v1430 = vpack.c.b16 %v1063, %v1062
  %v1431 = vpack.c.b16 %v1065, %v1064
  %v1432 = vpack.c.b16 %v1067, %v1066
  %v1433 = vpack.c.b16 %v1069, %v1068
  %v1434 = vpack.c.b16 %v1071, %v1070
  %v1435 = vpack.c.b16 %v1073, %v1072
  %v1436 = vpack.c.b16 %v1075, %v1074
  %v1437 = vpack.c.b16 %v1077, %v1076
  %v1438 = vpack.c.b16 %v1079, %v1078
  %v1439 = vpack.c.b16 %v1081, %v1080
  %v1440 = vpack.c.b16 %v1083, %v1082
  %v1441 = vpack.c.b16 %v1085, %v1084
  %v1442 = vpack.c.b16 %v1087, %v1086
  %v1443 = vpack.c.b16 %v1089, %v1088
  %v1444 = vpack.c.b16 %v1091, %v1090
  %v1445 = vpack.c.b16 %v1093, %v1092
  %v1446 = vpack.c.b16 %v1095, %v1094
  %v1447 = vpack.c.b16 %v1097, %v1096
  %v1448 = vpack.c.b16 %v1099, %v1098
  %v1449 = vpack.c.b16 %v1101, %v1100
  %v1450 = vpack.c.b16 %v1103, %v1102
  %v1451 = vpack.c.b16 %v1105, %v1104
  %v1452 = vpack.c.b16 %v1107, %v1106
  %v1453 = vpack.c.b16 %v1109, %v1108
  %v1454 = vpack.c.b16 %v1111, %v1110
  %v1455 = vpack.c.b16 %v1113, %v1112
  %v1456 = vpack.c.b16 %v1115, %v1114
  %v1457 = vpack.c.b16 %v1117, %v1116
  %v1458 = vpack.c.b16 %v1119, %v1118
  %v1459 = vpack.c.b16 %v1121, %v1120
  %v1460 = vpack.c.b16 %v1123, %v1122
  %v1461 = vpack.c.b16 %v1125, %v1124
  %v1462 = vpack.c.b16 %v1127, %v1126
  %v1463 = vpack.c.b16 %v1129, %v1128
  %v1464 = vpack.c.b16 %v1131, %v1130
  %v1465 = vpack.c.b16 %v1133, %v1132
  %v1466 = vpack.c.b16 %v1135, %v1134
  %v1467 = vpack.c.b16 %v1137, %v1136
  %v1468 = vpack.c.b16 %v1139, %v1138
  %v1469 = vpack.c.b16 %v1141, %v1140
  %v1470 = vpack.c.b16 %v1143, %v1142
  %v1471 = vpack.c.b16 %v1145, %v1144
  %v1472 = vpack.c.b16 %v1147, %v1146
  %v1473 = vpack.c.b16 %v1149, %v1148
  %v1474 = vpack.c.b16 %v1151, %v1150
  %v1475 = vpack.c.b16 %v1153, %v1152
  %v1476 = vpack.c.b16 %v1155, %v1154
  %v1477 = vpack.c.b16 %v1157, %v1156
  %v1478 = vpack.c.b16 %v1159, %v1158
  %v1479 = vpack.c.b16 %v1161, %v1160
  %v1480 = vpack.c.b16 %v1163, %v1162
  %v1481 = vpack.c.b16 %v1165, %v1164
  %v1482 = vpack.c.b16 %v1167, %v1166
  %v1483 = vpack.c.b16 %v1169, %v1168
  %v1484 = vpack.c.b16 %v1171, %v1170
  %v1485 = vpack.c.b16 %v1173, %v1172
  %v1486 = vpack.c.b16 %v1175, %v1174
  %v1487 = vpack.c.b16 %v1177, %v1176
  %v1488 = vpack.c.b16 %v1179, %v1178
  %v1489 = vpack.c.b16 %v1181, %v1180
  %v1490 = vpack.c.b16 %v1183, %v1182
  %v1491 = vpack.c.b16 %v1185, %v1184
  %v1492 = vpack.c.b16 %v1187, %v1186
  %v1493 = vpack.c.b16 %v1189, %v1188
  %v1494 = vpack.c.b16 %v1191, %v1190
  %v1495 = vpack.c.b16 %v1193, %v1192
  %v1496 = vpack.c.b16 %v1195, %v1194
  %v1497 = vpack.c.b16 %v1197, %v1196
  %v1498 = vpack.c.b16 %v1199, %v1198
  %v1499 = vpack.c.b16 %v1201, %v1200
  %v1500 = vpack.c.b16 %v1203, %v1202
  %v1501 = vpack.c.b16 %v1205, %v1204
  %v1502 = vpack.c.b16 %v1207, %v1206
  %v1503 = vpack.c.b16 %v1209, %v1208
  %v1504 = vpack.c.b16 %v1211, %v1210
  %v1505 = vpack.c.b16 %v1213, %v1212
  %v1506 = vpack.c.b16 %v1215, %v1214
  %v1507 = vpack.c.b16 %v1217, %v1216
  %v1508 = vpack.c.b16 %v1219, %v1218
  %v1509 = vpack.c.b16 %v1221, %v1220
  %v1510 = vpack.c.b16 %v1223, %v1222
  %v1511 = vpack.c.b16 %v1225, %v1224
  %v1512 = vpack.c.b16 %v1227, %v1226
  %v1513 = vpack.c.b16 %v1229, %v1228
  %v1514 = vpack.c.b16 %v1231, %v1230
  %v1515 = vpack.c.b16 %v1233, %v1232
  %v1516 = vpack.c.b16 %v1235, %v1234
  %v1517 = vpack.c.b16 %v1237, %v1236
  %v1518 = vpack.c.b16 %v1239, %v1238
  %v1519 = vpack.c.b16 %v1241, %v1240
  %v1520 = vpack.c.b16 %v1243, %v1242
  %v1521 = vpack.c.b16 %v1245, %v1244
  %v1522 = vpack.c.b16 %v1247, %v1246
  %v1523 = vpack.c.b16 %v1249, %v1248
  %v1524 = vpack.c.b16 %v1251, %v1250
  %v1525 = vpack.c.b16 %v1253, %v1252
  %v1526 = vpack.c.b16 %v1255, %v1254
  %v1527 = vpack.c.b16 %v1257, %v1256
  %v1528 = vpack.c.b16 %v1259, %v1258
  %v1529 = vpack.c.b16 %v1261, %v1260
  %v1530 = vpack.c.b16 %v1263, %v1262
  %v1531 = vpack.c.b16 %v1265, %v1264
  %v1532 = vpack.c.b16 %v1267, %v1266
  %v1533 = vpack.c.b16 %v1269, %v1268
  %v1534 = vpack.c.b16 %v1271, %v1270
  %v1535 = vpack.c.b16 %v1273, %v1272
  %v1536 = vpack.c.b16 %v1275, %v1274
  %v1537 = vpack.c.b16 %v1277, %v1276
  %v1538 = vpack.c.b16 %v1279, %v1278
  %v1539 = vpack.c.b16 %v1281, %v1280
  %v1540 = vpack.c.b16 %v1283, %v1282
  %v1541 = vpack.c.b16 %v1285, %v1284
  %v1542 = vpack.c.b16 %v1287, %v1286
  %v1543 = vpack.c.b16 %v1289, %v1288
  %v1544 = vpack.c.b16 %v1291, %v1290
  %v1545 = vpack.c.b16 %v1293, %v1292
  %v1546 = vpack.c.b16 %v1295, %v1294
  %v1547 = vpack.c.b16 %v1297, %v1296
  %v1548 = vpack.c.b16 %v1299, %v1298
  %v1549 = vpack.c.b16 %v1301, %v1300
  %v1550 = vpack.c.b16 %v1303, %v1302
  %v1551 = vpack.c.b16 %v1305, %v1304
  %v1552 = vpack.c.b16 %v1307, %v1306
  %v1553 = vpack.c.b16 %v1309, %v1308
  %v1554 = vpack.c.b16 %v1311, %v1310
  %v1555 = vpack.c.b16 %v1313, %v1312
  %v1556 = vpack.c.b16 %v1315, %v1314
  %v1557 = vpack.c.b16 %v1317, %v1316
  %v1558 = vpack.c.b16 %v1319, %v1318
  %v1559 = vpack.c.b16 %v1321, %v1320
  %v1560 = vpack.c.b16 %v1323, %v1322
  %v1561 = vpack.c.b16 %v1325, %v1324
  %v1562 = vpack.c.b16 %v1327, %v1326
  %v1563 = vpack.c.b16 %v1329, %v1328
  %v1564 = vpack.c.b16 %v1331, %v1330
  %v1565 = vpack.c.b16 %v1333, %v1332
  %v1566 = vpack.c.b16 %v1335, %v1334
  %v1567 = vpack.c.b16 %v1337, %v1336
  %v1568 = vpack.c.b16 %v1339, %v1338
  %v1569 = vpack.c.b16 %v1341, %v1340
  %v1570 = vpack.c.b16 %v1343, %v1342
  %v1571 = vpack.c.b16 %v1345, %v1344
  %v1572 = vpack.c.b16 %v1347, %v1346
  %v1573 = vpack.c.b16 %v1349, %v1348
  %v1574 = vpack.c.b16 %v1351, %v1350
  %v1575 = vpack.c.b16 %v1353, %v1352
  %v1576 = vpack.c.b16 %v1355, %v1354
  %v1577 = vpack.c.b16 %v1357, %v1356
  %v1578 = vpack.c.b16 %v1359, %v1358
  %v1579 = vpack.c.b16 %v1361, %v1360
  %v1580 = vpack.c.b16 %v1363, %v1362
  %v1581 = vpack.c.b16 %v1365, %v1364
  %v1582 = vpack.c.b16 %v1367, %v1366
  %v1583 = vpack.c.b16 %v1369, %v1368
  %v1584 = vpack.c.b16 %v1371, %v1370
  %v1585 = vpack.c.b16 %v1373, %v1372
  %v1586 = vpack.c.b16 %v1375, %v1374
  %v1587 = vpack.c.b16 %v1377, %v1376
  %v1588 = vpack.c.b16 %v1379, %v1378
  %v1589 = vpack.c.b16 %v1381, %v1380
  %v1590 = vpack.c.b16 %v1383, %v1382
  %v1591 = vpack.c.b16 %v1385, %v1384
  %v1592 = vpack.c.b16 %v1387, %v1386
  %v1593 = vpack.c.b16 %v1389, %v1388
  %v1594 = vpack.c.b16 %v1391, %v1390
  %v1595 = vpack.c.b16 %v1393, %v1392
  %v1596 = vpack.c.b16 %v1395, %v1394
  %v1597 = vpack.c.b16 %v1397, %v1396
  %1798 = vmatprep.subr.bf16.mxu0 0
  %1799 = vmatpush1.bf16.msra.mxu0 %v1398
  %1800 = vmatprep.subr.bf16.mxu0 0
  %1801 = vmatpush1.bf16.msra.mxu0 %v1399
  %1802 = vmatprep.subr.bf16.mxu0 0
  %1803 = vmatpush1.bf16.msra.mxu0 %v1400
  %1804 = vmatprep.subr.bf16.mxu0 0
  %1805 = vmatpush1.bf16.msra.mxu0 %v1401
  %1806 = vmatprep.subr.bf16.mxu0 0
  %1807 = vmatpush1.bf16.msra.mxu0 %v1402
  %1808 = vmatprep.subr.bf16.mxu0 0
  %1809 = vmatpush1.bf16.msra.mxu0 %v1403
  %1810 = vmatprep.subr.bf16.mxu0 0
  %1811 = vmatpush1.bf16.msra.mxu0 %v1404
  %1812 = vmatprep.subr.bf16.mxu0 0
  %1813 = vmatpush1.bf16.msra.mxu0 %v1405
  %1814 = vmatprep.subr.bf16.mxu0 0
  %1815 = vmatpush1.bf16.msra.mxu0 %v1406
  %1816 = vmatprep.subr.bf16.mxu0 0
  %1817 = vmatpush1.bf16.msra.mxu0 %v1407
  %1818 = vmatprep.subr.bf16.mxu0 0
  %1819 = vmatpush1.bf16.msra.mxu0 %v1408
  %1820 = vmatprep.subr.bf16.mxu0 0
  %1821 = vmatpush1.bf16.msra.mxu0 %v1409
  %1822 = vmatprep.subr.bf16.mxu0 0
  %1823 = vmatpush1.bf16.msra.mxu0 %v1410
  %1824 = vmatprep.subr.bf16.mxu0 0
  %1825 = vmatpush1.bf16.msra.mxu0 %v1411
  %1826 = vmatprep.subr.bf16.mxu0 0
  %1827 = vmatpush1.bf16.msra.mxu0 %v1412
  %1828 = vmatprep.subr.bf16.mxu0 0
  %1829 = vmatpush1.bf16.msra.mxu0 %v1413
  %1830 = vmatprep.mubr.bf16.mxu0 %v167
  %1831 = vmatmul.mubr.bf16.gmra.mrb[0].mxu0 %v166
  %v1832 = vpop.f32.mrb[0].mxu0
  %v1833 = vadd.f32 %v596, %v1832
  %v1834 = vpop.f32.mrb[0].mxu0
  %v1835 = vpop.f32.mrb[0].mxu0
  %v1836 = vpop.f32.mrb[0].mxu0
  %1837 = vdwg.mxu0
  %1838 = vmatprep.subr.bf16.mxu0 0
  %1839 = vmatpush1.bf16.msra.mxu0 %v1414
  %1840 = vmatprep.subr.bf16.mxu0 0
  %1841 = vmatpush1.bf16.msra.mxu0 %v1415
  %1842 = vmatprep.subr.bf16.mxu0 0
  %1843 = vmatpush1.bf16.msra.mxu0 %v1416
  %1844 = vmatprep.subr.bf16.mxu0 0
  %1845 = vmatpush1.bf16.msra.mxu0 %v1417
  %1846 = vmatprep.subr.bf16.mxu0 0
  %1847 = vmatpush1.bf16.msra.mxu0 %v1418
  %1848 = vmatprep.subr.bf16.mxu0 0
  %1849 = vmatpush1.bf16.msra.mxu0 %v1419
  %1850 = vmatprep.subr.bf16.mxu0 0
  %1851 = vmatpush1.bf16.msra.mxu0 %v1420
  %1852 = vmatprep.subr.bf16.mxu0 0
  %1853 = vmatpush1.bf16.msra.mxu0 %v1421
  %1854 = vmatprep.subr.bf16.mxu0 0
  %1855 = vmatpush1.bf16.msra.mxu0 %v1422
  %1856 = vmatprep.subr.bf16.mxu0 0
  %1857 = vmatpush1.bf16.msra.mxu0 %v1423
  %1858 = vmatprep.subr.bf16.mxu0 0
  %1859 = vmatpush1.bf16.msra.mxu0 %v1424
  %1860 = vmatprep.subr.bf16.mxu0 0
  %1861 = vmatpush1.bf16.msra.mxu0 %v1425
  %1862 = vmatprep.subr.bf16.mxu0 0
  %1863 = vmatpush1.bf16.msra.mxu0 %v1426
  %1864 = vmatprep.subr.bf16.mxu0 0
  %1865 = vmatpush1.bf16.msra.mxu0 %v1427
  %1866 = vmatprep.subr.bf16.mxu0 0
  %1867 = vmatpush1.bf16.msra.mxu0 %v1428
  %1868 = vmatprep.subr.bf16.mxu0 0
  %1869 = vmatpush1.bf16.msra.mxu0 %v1429
  %1870 = vmatprep.mubr.bf16.mxu0 %v169
  %1871 = vmatmul.mubr.bf16.gmra.mrb[0].mxu0 %v168
  %v1872 = vpop.f32.mrb[0].mxu0
  %v1873 = vadd.f32 %v1833, %v1872
  %v1874 = vpop.f32.mrb[0].mxu0
  %v1875 = vpop.f32.mrb[0].mxu0
  %v1876 = vpop.f32.mrb[0].mxu0
  %1877 = vdwg.mxu0
  %1878 = vmatprep.subr.bf16.mxu0 0
  %1879 = vmatpush1.bf16.msra.mxu0 %v1430
  %1880 = vmatprep.subr.bf16.mxu0 0
  %1881 = vmatpush1.bf16.msra.mxu0 %v1431
  %1882 = vmatprep.subr.bf16.mxu0 0
  %1883 = vmatpush1.bf16.msra.mxu0 %v1432
  %1884 = vmatprep.subr.bf16.mxu0 0
  %1885 = vmatpush1.bf16.msra.mxu0 %v1433
  %1886 = vmatprep.subr.bf16.mxu0 0
  %1887 = vmatpush1.bf16.msra.mxu0 %v1434
  %1888 = vmatprep.subr.bf16.mxu0 0
  %1889 = vmatpush1.bf16.msra.mxu0 %v1435
  %1890 = vmatprep.subr.bf16.mxu0 0
  %1891 = vmatpush1.bf16.msra.mxu0 %v1436
  %1892 = vmatprep.subr.bf16.mxu0 0
  %1893 = vmatpush1.bf16.msra.mxu0 %v1437
  %1894 = vmatprep.subr.bf16.mxu0 0
  %1895 = vmatpush1.bf16.msra.mxu0 %v1438
  %1896 = vmatprep.subr.bf16.mxu0 0
  %1897 = vmatpush1.bf16.msra.mxu0 %v1439
  %1898 = vmatprep.subr.bf16.mxu0 0
  %1899 = vmatpush1.bf16.msra.mxu0 %v1440
  %1900 = vmatprep.subr.bf16.mxu0 0
  %1901 = vmatpush1.bf16.msra.mxu0 %v1441
  %1902 = vmatprep.subr.bf16.mxu0 0
  %1903 = vmatpush1.bf16.msra.mxu0 %v1442
  %1904 = vmatprep.subr.bf16.mxu0 0
  %1905 = vmatpush1.bf16.msra.mxu0 %v1443
  %1906 = vmatprep.subr.bf16.mxu0 0
  %1907 = vmatpush1.bf16.msra.mxu0 %v1444
  %1908 = vmatprep.subr.bf16.mxu0 0
  %1909 = vmatpush1.bf16.msra.mxu0 %v1445
  %1910 = vmatprep.mubr.bf16.mxu0 %v171
  %1911 = vmatmul.mubr.bf16.gmra.mrb[0].mxu0 %v170
  %v1912 = vpop.f32.mrb[0].mxu0
  %v1913 = vadd.f32 %v1873, %v1912
  %v1914 = vpop.f32.mrb[0].mxu0
  %v1915 = vpop.f32.mrb[0].mxu0
  %v1916 = vpop.f32.mrb[0].mxu0
  %1917 = vdwg.mxu0
  %1918 = vmatprep.subr.bf16.mxu0 0
  %1919 = vmatpush1.bf16.msra.mxu0 %v1446
  %1920 = vmatprep.subr.bf16.mxu0 0
  %1921 = vmatpush1.bf16.msra.mxu0 %v1447
  %1922 = vmatprep.subr.bf16.mxu0 0
  %1923 = vmatpush1.bf16.msra.mxu0 %v1448
  %1924 = vmatprep.subr.bf16.mxu0 0
  %1925 = vmatpush1.bf16.msra.mxu0 %v1449
  %1926 = vmatprep.subr.bf16.mxu0 0
  %1927 = vmatpush1.bf16.msra.mxu0 %v1450
  %1928 = vmatprep.subr.bf16.mxu0 0
  %1929 = vmatpush1.bf16.msra.mxu0 %v1451
  %1930 = vmatprep.subr.bf16.mxu0 0
  %1931 = vmatpush1.bf16.msra.mxu0 %v1452
  %1932 = vmatprep.subr.bf16.mxu0 0
  %1933 = vmatpush1.bf16.msra.mxu0 %v1453
  %1934 = vmatprep.subr.bf16.mxu0 0
  %1935 = vmatpush1.bf16.msra.mxu0 %v1454
  %1936 = vmatprep.subr.bf16.mxu0 0
  %1937 = vmatpush1.bf16.msra.mxu0 %v1455
  %1938 = vmatprep.subr.bf16.mxu0 0
  %1939 = vmatpush1.bf16.msra.mxu0 %v1456
  %1940 = vmatprep.subr.bf16.mxu0 0
  %1941 = vmatpush1.bf16.msra.mxu0 %v1457
  %1942 = vmatprep.subr.bf16.mxu0 0
  %1943 = vmatpush1.bf16.msra.mxu0 %v1458
  %1944 = vmatprep.subr.bf16.mxu0 0
  %1945 = vmatpush1.bf16.msra.mxu0 %v1459
  %1946 = vmatprep.subr.bf16.mxu0 0
  %1947 = vmatpush1.bf16.msra.mxu0 %v1460
  %1948 = vmatprep.subr.bf16.mxu0 0
  %1949 = vmatpush1.bf16.msra.mxu0 %v1461
  %1950 = vmatprep.mubr.bf16.mxu0 %v173
  %1951 = vmatmul.mubr.bf16.gmra.mrb[0].mxu0 %v172
  %v1952 = vpop.f32.mrb[0].mxu0
  %v1953 = vadd.f32 %v1913, %v1952
  %v1954 = vpop.f32.mrb[0].mxu0
  %v1955 = vpop.f32.mrb[0].mxu0
  %v1956 = vpop.f32.mrb[0].mxu0
  %1957 = vdwg.mxu0
  %1958 = vmatprep.subr.bf16.mxu0 0
  %1959 = vmatpush1.bf16.msra.mxu0 %v1462
  %1960 = vmatprep.subr.bf16.mxu0 0
  %1961 = vmatpush1.bf16.msra.mxu0 %v1463
  %1962 = vmatprep.subr.bf16.mxu0 0
  %1963 = vmatpush1.bf16.msra.mxu0 %v1464
  %1964 = vmatprep.subr.bf16.mxu0 0
  %1965 = vmatpush1.bf16.msra.mxu0 %v1465
  %1966 = vmatprep.subr.bf16.mxu0 0
  %1967 = vmatpush1.bf16.msra.mxu0 %v1466
  %1968 = vmatprep.subr.bf16.mxu0 0
  %1969 = vmatpush1.bf16.msra.mxu0 %v1467
  %1970 = vmatprep.subr.bf16.mxu0 0
  %1971 = vmatpush1.bf16.msra.mxu0 %v1468
  %1972 = vmatprep.subr.bf16.mxu0 0
  %1973 = vmatpush1.bf16.msra.mxu0 %v1469
  %1974 = vmatprep.subr.bf16.mxu0 0
  %1975 = vmatpush1.bf16.msra.mxu0 %v1470
  %1976 = vmatprep.subr.bf16.mxu0 0
  %1977 = vmatpush1.bf16.msra.mxu0 %v1471
  %1978 = vmatprep.subr.bf16.mxu0 0
  %1979 = vmatpush1.bf16.msra.mxu0 %v1472
  %1980 = vmatprep.subr.bf16.mxu0 0
  %1981 = vmatpush1.bf16.msra.mxu0 %v1473
  %1982 = vmatprep.subr.bf16.mxu0 0
  %1983 = vmatpush1.bf16.msra.mxu0 %v1474
  %1984 = vmatprep.subr.bf16.mxu0 0
  %1985 = vmatpush1.bf16.msra.mxu0 %v1475
  %1986 = vmatprep.subr.bf16.mxu0 0
  %1987 = vmatpush1.bf16.msra.mxu0 %v1476
  %1988 = vmatprep.subr.bf16.mxu0 0
  %1989 = vmatpush1.bf16.msra.mxu0 %v1477
  %1990 = vmatprep.mubr.bf16.mxu0 %v175
  %1991 = vmatmul.mubr.bf16.gmra.mrb[0].mxu0 %v174
  %v1992 = vpop.f32.mrb[0].mxu0
  %v1993 = vadd.f32 %v1953, %v1992
  %v1994 = vpop.f32.mrb[0].mxu0
  %v1995 = vpop.f32.mrb[0].mxu0
  %v1996 = vpop.f32.mrb[0].mxu0
  %1997 = vdwg.mxu0
  %1998 = vmatprep.subr.bf16.mxu0 0
  %1999 = vmatpush1.bf16.msra.mxu0 %v1478
  %2000 = vmatprep.subr.bf16.mxu0 0
  %2001 = vmatpush1.bf16.msra.mxu0 %v1479
  %2002 = vmatprep.subr.bf16.mxu0 0
  %2003 = vmatpush1.bf16.msra.mxu0 %v1480
  %2004 = vmatprep.subr.bf16.mxu0 0
  %2005 = vmatpush1.bf16.msra.mxu0 %v1481
  %2006 = vmatprep.subr.bf16.mxu0 0
  %2007 = vmatpush1.bf16.msra.mxu0 %v1482
  %2008 = vmatprep.subr.bf16.mxu0 0
  %2009 = vmatpush1.bf16.msra.mxu0 %v1483
  %2010 = vmatprep.subr.bf16.mxu0 0
  %2011 = vmatpush1.bf16.msra.mxu0 %v1484
  %2012 = vmatprep.subr.bf16.mxu0 0
  %2013 = vmatpush1.bf16.msra.mxu0 %v1485
  %2014 = vmatprep.subr.bf16.mxu0 0
  %2015 = vmatpush1.bf16.msra.mxu0 %v1486
  %2016 = vmatprep.subr.bf16.mxu0 0
  %2017 = vmatpush1.bf16.msra.mxu0 %v1487
  %2018 = vmatprep.subr.bf16.mxu0 0
  %2019 = vmatpush1.bf16.msra.mxu0 %v1488
  %2020 = vmatprep.subr.bf16.mxu0 0
  %2021 = vmatpush1.bf16.msra.mxu0 %v1489
  %2022 = vmatprep.subr.bf16.mxu0 0
  %2023 = vmatpush1.bf16.msra.mxu0 %v1490
  %2024 = vmatprep.subr.bf16.mxu0 0
  %2025 = vmatpush1.bf16.msra.mxu0 %v1491
  %2026 = vmatprep.subr.bf16.mxu0 0
  %2027 = vmatpush1.bf16.msra.mxu0 %v1492
  %2028 = vmatprep.subr.bf16.mxu0 0
  %2029 = vmatpush1.bf16.msra.mxu0 %v1493
  %2030 = vmatprep.mubr.bf16.mxu0 %v177
  %2031 = vmatmul.mubr.bf16.gmra.mrb[0].mxu0 %v176
  %v2032 = vpop.f32.mrb[0].mxu0
  %v2033 = vadd.f32 %v1993, %v2032
  %v2034 = vpop.f32.mrb[0].mxu0
  %v2035 = vpop.f32.mrb[0].mxu0
  %v2036 = vpop.f32.mrb[0].mxu0
  %2037 = vdwg.mxu0
  %2038 = vmatprep.subr.bf16.mxu0 0
  %2039 = vmatpush1.bf16.msra.mxu0 %v1494
  %2040 = vmatprep.subr.bf16.mxu0 0
  %2041 = vmatpush1.bf16.msra.mxu0 %v1495
  %2042 = vmatprep.subr.bf16.mxu0 0
  %2043 = vmatpush1.bf16.msra.mxu0 %v1496
  %2044 = vmatprep.subr.bf16.mxu0 0
  %2045 = vmatpush1.bf16.msra.mxu0 %v1497
  %2046 = vmatprep.subr.bf16.mxu0 0
  %2047 = vmatpush1.bf16.msra.mxu0 %v1498
  %2048 = vmatprep.subr.bf16.mxu0 0
  %2049 = vmatpush1.bf16.msra.mxu0 %v1499
  %2050 = vmatprep.subr.bf16.mxu0 0
  %2051 = vmatpush1.bf16.msra.mxu0 %v1500
  %2052 = vmatprep.subr.bf16.mxu0 0
  %2053 = vmatpush1.bf16.msra.mxu0 %v1501
  %2054 = vmatprep.subr.bf16.mxu0 0
  %2055 = vmatpush1.bf16.msra.mxu0 %v1502
  %2056 = vmatprep.subr.bf16.mxu0 0
  %2057 = vmatpush1.bf16.msra.mxu0 %v1503
  %2058 = vmatprep.subr.bf16.mxu0 0
  %2059 = vmatpush1.bf16.msra.mxu0 %v1504
  %2060 = vmatprep.subr.bf16.mxu0 0
  %2061 = vmatpush1.bf16.msra.mxu0 %v1505
  %2062 = vmatprep.subr.bf16.mxu0 0
  %2063 = vmatpush1.bf16.msra.mxu0 %v1506
  %2064 = vmatprep.subr.bf16.mxu0 0
  %2065 = vmatpush1.bf16.msra.mxu0 %v1507
  %2066 = vmatprep.subr.bf16.mxu0 0
  %2067 = vmatpush1.bf16.msra.mxu0 %v1508
  %2068 = vmatprep.subr.bf16.mxu0 0
  %2069 = vmatpush1.bf16.msra.mxu0 %v1509
  %2070 = vmatprep.mubr.bf16.mxu0 %v179
  %2071 = vmatmul.mubr.bf16.gmra.mrb[0].mxu0 %v178
  %v2072 = vpop.f32.mrb[0].mxu0
  %v2073 = vadd.f32 %v2033, %v2072
  %v2074 = vpop.f32.mrb[0].mxu0
  %v2075 = vpop.f32.mrb[0].mxu0
  %v2076 = vpop.f32.mrb[0].mxu0
  %2077 = vdwg.mxu0
  %2078 = vmatprep.subr.bf16.mxu0 0
  %2079 = vmatpush1.bf16.msra.mxu0 %v1510
  %2080 = vmatprep.subr.bf16.mxu0 0
  %2081 = vmatpush1.bf16.msra.mxu0 %v1511
  %2082 = vmatprep.subr.bf16.mxu0 0
  %2083 = vmatpush1.bf16.msra.mxu0 %v1512
  %2084 = vmatprep.subr.bf16.mxu0 0
  %2085 = vmatpush1.bf16.msra.mxu0 %v1513
  %2086 = vmatprep.subr.bf16.mxu0 0
  %2087 = vmatpush1.bf16.msra.mxu0 %v1514
  %2088 = vmatprep.subr.bf16.mxu0 0
  %2089 = vmatpush1.bf16.msra.mxu0 %v1515
  %2090 = vmatprep.subr.bf16.mxu0 0
  %2091 = vmatpush1.bf16.msra.mxu0 %v1516
  %2092 = vmatprep.subr.bf16.mxu0 0
  %2093 = vmatpush1.bf16.msra.mxu0 %v1517
  %2094 = vmatprep.subr.bf16.mxu0 0
  %2095 = vmatpush1.bf16.msra.mxu0 %v1518
  %2096 = vmatprep.subr.bf16.mxu0 0
  %2097 = vmatpush1.bf16.msra.mxu0 %v1519
  %2098 = vmatprep.subr.bf16.mxu0 0
  %2099 = vmatpush1.bf16.msra.mxu0 %v1520
  %2100 = vmatprep.subr.bf16.mxu0 0
  %2101 = vmatpush1.bf16.msra.mxu0 %v1521
  %2102 = vmatprep.subr.bf16.mxu0 0
  %2103 = vmatpush1.bf16.msra.mxu0 %v1522
  %2104 = vmatprep.subr.bf16.mxu0 0
  %2105 = vmatpush1.bf16.msra.mxu0 %v1523
  %2106 = vmatprep.subr.bf16.mxu0 0
  %2107 = vmatpush1.bf16.msra.mxu0 %v1524
  %2108 = vmatprep.subr.bf16.mxu0 0
  %2109 = vmatpush1.bf16.msra.mxu0 %v1525
  %2110 = vmatprep.mubr.bf16.mxu0 %v181
  %2111 = vmatmul.mubr.bf16.gmra.mrb[0].mxu0 %v180
  %v2112 = vpop.f32.mrb[0].mxu0
  %v2113 = vadd.f32 %v2073, %v2112
  %v2114 = vpop.f32.mrb[0].mxu0
  %v2115 = vpop.f32.mrb[0].mxu0
  %v2116 = vpop.f32.mrb[0].mxu0
  %2117 = vdwg.mxu0
  %2118 = vmatprep.subr.bf16.mxu0 0
  %2119 = vmatpush1.bf16.msra.mxu0 %v1526
  %2120 = vmatprep.subr.bf16.mxu0 0
  %2121 = vmatpush1.bf16.msra.mxu0 %v1527
  %2122 = vmatprep.subr.bf16.mxu0 0
  %2123 = vmatpush1.bf16.msra.mxu0 %v1528
  %2124 = vmatprep.subr.bf16.mxu0 0
  %2125 = vmatpush1.bf16.msra.mxu0 %v1529
  %2126 = vmatprep.subr.bf16.mxu0 0
  %2127 = vmatpush1.bf16.msra.mxu0 %v1530
  %2128 = vmatprep.subr.bf16.mxu0 0
  %2129 = vmatpush1.bf16.msra.mxu0 %v1531
  %2130 = vmatprep.subr.bf16.mxu0 0
  %2131 = vmatpush1.bf16.msra.mxu0 %v1532
  %2132 = vmatprep.subr.bf16.mxu0 0
  %2133 = vmatpush1.bf16.msra.mxu0 %v1533
  %2134 = vmatprep.subr.bf16.mxu0 0
  %2135 = vmatpush1.bf16.msra.mxu0 %v1534
  %2136 = vmatprep.subr.bf16.mxu0 0
  %2137 = vmatpush1.bf16.msra.mxu0 %v1535
  %2138 = vmatprep.subr.bf16.mxu0 0
  %2139 = vmatpush1.bf16.msra.mxu0 %v1536
  %2140 = vmatprep.subr.bf16.mxu0 0
  %2141 = vmatpush1.bf16.msra.mxu0 %v1537
  %2142 = vmatprep.subr.bf16.mxu0 0
  %2143 = vmatpush1.bf16.msra.mxu0 %v1538
  %2144 = vmatprep.subr.bf16.mxu0 0
  %2145 = vmatpush1.bf16.msra.mxu0 %v1539
  %2146 = vmatprep.subr.bf16.mxu0 0
  %2147 = vmatpush1.bf16.msra.mxu0 %v1540
  %2148 = vmatprep.subr.bf16.mxu0 0
  %2149 = vmatpush1.bf16.msra.mxu0 %v1541
  %2150 = vmatprep.mubr.bf16.mxu0 %v183
  %2151 = vmatmul.mubr.bf16.gmra.mrb[0].mxu0 %v182
  %v2152 = vpop.f32.mrb[0].mxu0
  %v2153 = vadd.f32 %v2113, %v2152
  %v2154 = vpop.f32.mrb[0].mxu0
  %v2155 = vpop.f32.mrb[0].mxu0
  %v2156 = vpop.f32.mrb[0].mxu0
  %2157 = vdwg.mxu0
  %2158 = vmatprep.subr.bf16.mxu0 0
  %2159 = vmatpush1.bf16.msra.mxu0 %v1542
  %2160 = vmatprep.subr.bf16.mxu0 0
  %2161 = vmatpush1.bf16.msra.mxu0 %v1543
  %2162 = vmatprep.subr.bf16.mxu0 0
  %2163 = vmatpush1.bf16.msra.mxu0 %v1544
  %2164 = vmatprep.subr.bf16.mxu0 0
  %2165 = vmatpush1.bf16.msra.mxu0 %v1545
  %2166 = vmatprep.subr.bf16.mxu0 0
  %2167 = vmatpush1.bf16.msra.mxu0 %v1546
  %2168 = vmatprep.subr.bf16.mxu0 0
  %2169 = vmatpush1.bf16.msra.mxu0 %v1547
  %2170 = vmatprep.subr.bf16.mxu0 0
  %2171 = vmatpush1.bf16.msra.mxu0 %v1548
  %2172 = vmatprep.subr.bf16.mxu0 0
  %2173 = vmatpush1.bf16.msra.mxu0 %v1549
  %2174 = vmatprep.subr.bf16.mxu0 0
  %2175 = vmatpush1.bf16.msra.mxu0 %v1550
  %2176 = vmatprep.subr.bf16.mxu0 0
  %2177 = vmatpush1.bf16.msra.mxu0 %v1551
  %2178 = vmatprep.subr.bf16.mxu0 0
  %2179 = vmatpush1.bf16.msra.mxu0 %v1552
  %2180 = vmatprep.subr.bf16.mxu0 0
  %2181 = vmatpush1.bf16.msra.mxu0 %v1553
  %2182 = vmatprep.subr.bf16.mxu0 0
  %2183 = vmatpush1.bf16.msra.mxu0 %v1554
  %2184 = vmatprep.subr.bf16.mxu0 0
  %2185 = vmatpush1.bf16.msra.mxu0 %v1555
  %2186 = vmatprep.subr.bf16.mxu0 0
  %2187 = vmatpush1.bf16.msra.mxu0 %v1556
  %2188 = vmatprep.subr.bf16.mxu0 0
  %2189 = vmatpush1.bf16.msra.mxu0 %v1557
  %2190 = vmatprep.mubr.bf16.mxu0 %v185
  %2191 = vmatmul.mubr.bf16.gmra.mrb[0].mxu0 %v184
  %v2192 = vpop.f32.mrb[0].mxu0
  %v2193 = vadd.f32 %v2153, %v2192
  %v2194 = vpop.f32.mrb[0].mxu0
  %v2195 = vpop.f32.mrb[0].mxu0
  %v2196 = vpop.f32.mrb[0].mxu0
  %2197 = vdwg.mxu0
  %2198 = vmatprep.subr.bf16.mxu0 0
  %2199 = vmatpush1.bf16.msra.mxu0 %v1558
  %2200 = vmatprep.subr.bf16.mxu0 0
  %2201 = vmatpush1.bf16.msra.mxu0 %v1559
  %2202 = vmatprep.subr.bf16.mxu0 0
  %2203 = vmatpush1.bf16.msra.mxu0 %v1560
  %2204 = vmatprep.subr.bf16.mxu0 0
  %2205 = vmatpush1.bf16.msra.mxu0 %v1561
  %2206 = vmatprep.subr.bf16.mxu0 0
  %2207 = vmatpush1.bf16.msra.mxu0 %v1562
  %2208 = vmatprep.subr.bf16.mxu0 0
  %2209 = vmatpush1.bf16.msra.mxu0 %v1563
  %2210 = vmatprep.subr.bf16.mxu0 0
  %2211 = vmatpush1.bf16.msra.mxu0 %v1564
  %2212 = vmatprep.subr.bf16.mxu0 0
  %2213 = vmatpush1.bf16.msra.mxu0 %v1565
  %2214 = vmatprep.subr.bf16.mxu0 0
  %2215 = vmatpush1.bf16.msra.mxu0 %v1566
  %2216 = vmatprep.subr.bf16.mxu0 0
  %2217 = vmatpush1.bf16.msra.mxu0 %v1567
  %2218 = vmatprep.subr.bf16.mxu0 0
  %2219 = vmatpush1.bf16.msra.mxu0 %v1568
  %2220 = vmatprep.subr.bf16.mxu0 0
  %2221 = vmatpush1.bf16.msra.mxu0 %v1569
  %2222 = vmatprep.subr.bf16.mxu0 0
  %2223 = vmatpush1.bf16.msra.mxu0 %v1570
  %2224 = vmatprep.subr.bf16.mxu0 0
  %2225 = vmatpush1.bf16.msra.mxu0 %v1571
  %2226 = vmatprep.subr.bf16.mxu0 0
  %2227 = vmatpush1.bf16.msra.mxu0 %v1572
  %2228 = vmatprep.subr.bf16.mxu0 0
  %2229 = vmatpush1.bf16.msra.mxu0 %v1573
  %2230 = vmatprep.mubr.bf16.mxu0 %v187
  %2231 = vmatmul.mubr.bf16.gmra.mrb[0].mxu0 %v186
  %v2232 = vpop.f32.mrb[0].mxu0
  %v2233 = vadd.f32 %v2193, %v2232
  %v2234 = vpop.f32.mrb[0].mxu0
  %v2235 = vpop.f32.mrb[0].mxu0
  %v2236 = vpop.f32.mrb[0].mxu0
  %2237 = vdwg.mxu0
  %2238 = vmatprep.subr.bf16.mxu0 0
  %2239 = vmatpush1.bf16.msra.mxu0 %v1574
  %2240 = vmatprep.subr.bf16.mxu0 0
  %2241 = vmatpush1.bf16.msra.mxu0 %v1575
  %2242 = vmatprep.subr.bf16.mxu0 0
  %2243 = vmatpush1.bf16.msra.mxu0 %v1576
  %2244 = vmatprep.subr.bf16.mxu0 0
  %2245 = vmatpush1.bf16.msra.mxu0 %v1577
  %2246 = vmatprep.subr.bf16.mxu0 0
  %2247 = vmatpush1.bf16.msra.mxu0 %v1578
  %2248 = vmatprep.subr.bf16.mxu0 0
  %2249 = vmatpush1.bf16.msra.mxu0 %v1579
  %2250 = vmatprep.subr.bf16.mxu0 0
  %2251 = vmatpush1.bf16.msra.mxu0 %v1580
  %2252 = vmatprep.subr.bf16.mxu0 0
  %2253 = vmatpush1.bf16.msra.mxu0 %v1581
  %2254 = vmatprep.subr.bf16.mxu0 0
  %2255 = vmatpush1.bf16.msra.mxu0 %v1582
  %2256 = vmatprep.subr.bf16.mxu0 0
  %2257 = vmatpush1.bf16.msra.mxu0 %v1583
  %2258 = vmatprep.subr.bf16.mxu0 0
  %2259 = vmatpush1.bf16.msra.mxu0 %v1584
  %2260 = vmatprep.subr.bf16.mxu0 0
  %2261 = vmatpush1.bf16.msra.mxu0 %v1585
  %2262 = vmatprep.subr.bf16.mxu0 0
  %2263 = vmatpush1.bf16.msra.mxu0 %v1586
  %2264 = vmatprep.subr.bf16.mxu0 0
  %2265 = vmatpush1.bf16.msra.mxu0 %v1587
  %2266 = vmatprep.subr.bf16.mxu0 0
  %2267 = vmatpush1.bf16.msra.mxu0 %v1588
  %2268 = vmatprep.subr.bf16.mxu0 0
  %2269 = vmatpush1.bf16.msra.mxu0 %v1589
  %2270 = vmatprep.mubr.bf16.mxu0 %v189
  %2271 = vmatmul.mubr.bf16.gmra.mrb[0].mxu0 %v188
  %v2272 = vpop.f32.mrb[0].mxu0
  %v2273 = vadd.f32 %v2233, %v2272
  %v2274 = vpop.f32.mrb[0].mxu0
  %v2275 = vpop.f32.mrb[0].mxu0
  %v2276 = vpop.f32.mrb[0].mxu0
  %2277 = vdwg.mxu0
  %2278 = vmatprep.subr.bf16.mxu0 0
  %2279 = vmatpush1.bf16.msra.mxu0 %v1590
  %2280 = vmatprep.subr.bf16.mxu0 0
  %2281 = vmatpush1.bf16.msra.mxu0 %v1591
  %2282 = vmatprep.subr.bf16.mxu0 0
  %2283 = vmatpush1.bf16.msra.mxu0 %v1592
  %2284 = vmatprep.subr.bf16.mxu0 0
  %2285 = vmatpush1.bf16.msra.mxu0 %v1593
  %2286 = vmatprep.subr.bf16.mxu0 0
  %2287 = vmatpush1.bf16.msra.mxu0 %v1594
  %2288 = vmatprep.subr.bf16.mxu0 0
  %2289 = vmatpush1.bf16.msra.mxu0 %v1595
  %2290 = vmatprep.subr.bf16.mxu0 0
  %2291 = vmatpush1.bf16.msra.mxu0 %v1596
  %2292 = vmatprep.subr.bf16.mxu0 0
  %2293 = vmatpush1.bf16.msra.mxu0 %v1597
  %2294 = vmatprep.subr.bf16.mxu0 0
  %2295 = vmatpush1.bf16.msra.mxu0 0
  %2296 = vmatprep.subr.bf16.mxu0 0
  %2297 = vmatpush1.bf16.msra.mxu0 0
  %2298 = vmatprep.subr.bf16.mxu0 0
  %2299 = vmatpush1.bf16.msra.mxu0 0
  %2300 = vmatprep.subr.bf16.mxu0 0
  %2301 = vmatpush1.bf16.msra.mxu0 0
  %2302 = vmatprep.subr.bf16.mxu0 0
  %2303 = vmatpush1.bf16.msra.mxu0 0
  %2304 = vmatprep.subr.bf16.mxu0 0
  %2305 = vmatpush1.bf16.msra.mxu0 0
  %2306 = vmatprep.subr.bf16.mxu0 0
  %2307 = vmatpush1.bf16.msra.mxu0 0
  %2308 = vmatprep.subr.bf16.mxu0 0
  %2309 = vmatpush1.bf16.msra.mxu0 0
  %2310 = vmatprep.mubr.bf16.mxu0 0
  %2311 = vmatmul.mubr.bf16.gmra.mrb[0].mxu0 %v190
  %v2312 = vpop.f32.mrb[0].mxu0
  %v2313 = vadd.f32 %v2273, %v2312
  %v2314 = vpop.f32.mrb[0].mxu0
  %v2315 = vpop.f32.mrb[0].mxu0
  %v2316 = vpop.f32.mrb[0].mxu0
  %2317 = vdwg.mxu0
  %v2318 = vld [vmem:[%s3] sm:$0x1]
  %vm2319 = vcmp.gt.f32.partialorder %v2318, 0.0
  %v2320 = vsel %vm2319, 1, 0
  %v2321 = vlaneseq
  %v2322 = vshrl.u32 %v2321, 7
  %v2323 = vsub.s32 0, %v2322
  %v2324 = vrot.slane %v2320, %v2323
  %vm2325 = vcmp.eq.s32.totalorder %v2324, 1
  %v2326 = vsel %vm2325, %v2313, -1e+30
  %vm2327 = vcmask 1041408
  %v2328 = vsel %vm2327, %v2326, -inf
  %2329 = vmax.xlane.f32.xlu0 %v2328
  %v2330 = vpop.xlane.xlu0 %2329
  %v2331 = vsub.f32 %v2326, %v2330
  %v2332 = vmul.f32 %v2331, 1.442695
  %v2333 = vpow.pop %v2332
  %v2334 = vsel %vm2325, %v2333, 0.0
  %v2335 = vsel %vm2327, %v2334, 0.0
  %2336 = vadd.xlane.f32.xlu0 %v2335
  %v2337 = vpop.xlane.xlu0 %2336
  %v2338 = vlog2.pop %v2337
  %v2339 = vmul.f32 %v2338, 0.6931472
  %v2340 = vsub.f32 %v2331, %v2339
  %v2341 = vtanh.pop %v2313
  %v2342 = vsel %vm2325, %v2340, %v2341
  %2343 = vst [vmem:[%s4] sm:$0x3] %v2342
  // Predicated region
  $region18: #{hexnet_forward.3} parent=0 // pred_check
    _
  $region19: #{hexnet_forward.3} parent=0 // pred_check_branch
    %2345 = sbr.rel (0) target = $region21
  $region20: #{hexnet_forward.3} parent=0 // pred_region
    _
  $region21: #{hexnet_forward.3} parent=0 // pred_fallthru
    _
  // Predicated region
  $region22: #{hexnet_forward.3} parent=0 // pred_check
    _
  $region23: #{hexnet_forward.3} parent=0 // pred_check_branch
    %2347 = sbr.rel (0) target = $region25
  $region24: #{hexnet_forward.3} parent=0 // pred_region
    _
  $region25: #{hexnet_forward.3} parent=0 // pred_fallthru
    _

</llo_original>
